<compile_context>
chip_gen: v5e
topology: v5e:2x2
jax: 0.10.0
libtpu: 0.0.40
codegen_flags: <defaults>
</compile_context>

<pallas_src>
import functools
import math

import jax
import jax.numpy as jnp
from jax.experimental import pallas as pl
from jax.experimental.pallas import tpu as pltpu


def _logloudness_kernel(x_ref, w_ref, o_ref, *, use_mxu, eps, inv_logeps):
    # x_ref: (R, width) native dtype; w_ref: (width, k) or (1, width) f32;
    # o_ref: (R, k) f32.
    x = x_ref[...].astype(jnp.float32)
    if use_mxu:
        # Segmented reduction on the MXU: W is block-diagonal with
        # hann^2/(mean^2*size) on the diagonal blocks, so one matmul yields the
        # weighted mean-square of every packed frame.  f32 operands + HIGHEST
        # precision keep f32-grade accuracy (no bf16 products/sums).
        s = jnp.dot(x * x, w_ref[...],
                    preferred_element_type=jnp.float32,
                    precision=jax.lax.Precision.HIGHEST)
    else:
        # k == 1 fallback: plain lane reduction per (single-frame) row.
        y = x * x * w_ref[...]
        s = jnp.sum(y, axis=-1, keepdims=True)
    s = jnp.clip(s, eps, 1.0)
    # (logeps - 2*logrms)/logeps == 1 - log(clip(mean, eps, 1)) / logeps
    o_ref[...] = 1.0 - jnp.log(s) * inv_logeps


def _hann_window(size: int) -> jnp.ndarray:
    # torch.hann_window(size) is periodic: 0.5 * (1 - cos(2*pi*n/size))
    n = jnp.arange(size, dtype=jnp.float32)
    return 0.5 * (1.0 - jnp.cos(2.0 * jnp.pi * n / size))


_W_BUDGET_BYTES = 1 << 20      # cap on the block-diagonal weight constant


def _pick_packing(size: int, total_frames: int) -> int:
    """Frames packed per row.  width = k*size becomes a multiple of 128 and the
    output row has k lanes (lane-dense store).  k must divide total_frames."""
    base = 128 // math.gcd(size, 128)      # smallest k with width % 128 == 0
    ks = []
    k = base
    while k <= 128:                        # k <= 128 keeps MXU N-dim <= native
        ks.append(k)
        k *= 2
    # Prefer the lane-densest packing that still leaves >= 16 rows to tile.
    for cand in reversed(ks):
        if (total_frames % cand == 0
                and size * cand * cand * 4 <= _W_BUDGET_BYTES
                and total_frames // cand >= 16):
            return cand
    # Tiny inputs: any legal packing, preferring more rows (better alignment).
    for cand in ks:
        if total_frames % cand == 0 and size * cand * cand * 4 <= _W_BUDGET_BYTES:
            return cand
    return 1


def _vmem_limit_bytes():
    """64 MiB on v5e/v6e (128 MiB physical), 48 MiB on v7x (64 MiB physical)."""
    try:
        cap = int(pltpu.get_tpu_info().vmem_capacity_bytes)
        return min(64 << 20, (cap * 3) // 4)
    except Exception:
        return None


def log_loudness(x: jnp.ndarray, size: int, eps: float, *,
                 row_tile=None, input_buffers=None) -> jnp.ndarray:
    """x: (B, T) float (f32 or bf16) with T % size == 0 -> (B, 1, T//size) f32."""
    B, T = x.shape
    assert T % size == 0, (T, size)
    n = T // size
    total_frames = B * n
    logeps = math.log(eps)
    itemsize = jnp.dtype(x.dtype).itemsize

    # --- frame packing (lane-dense input AND lane-dense output) --------------
    k = _pick_packing(size, total_frames)
    width = k * size
    rows = total_frames // k
    use_mxu = k > 1
    frames = x.reshape(rows, width)        # contiguous reshape, no HBM copy

    # --- window constant ------------------------------------------------------
    w = _hann_window(size)
    w = w / jnp.mean(w)
    w2 = (w * w) / float(size)             # folds normalization, square, 1/size
    if use_mxu:
        # (width, k) block diagonal: W[c*size + j, c] = w2[j]
        wmat = jnp.kron(jnp.eye(k, dtype=jnp.float32), w2.reshape(size, 1))
        w_block = (width, k)
    else:
        wmat = w2.reshape(1, width)
        w_block = (1, width)

    # --- row tiling -----------------------------------------------------------
    vmem_limit = _vmem_limit_bytes()
    target_bytes = (4 << 20) if vmem_limit is not None else (2 << 20)
    g = max(8, 32 // itemsize)             # sublane granularity: 8 f32 / 16 bf16
    if rows < 2 * g:
        r_tile = rows                      # single full-dim block (always legal)
    else:
        if row_tile is None:
            r_tile = max(g, (target_bytes // (width * itemsize)) // g * g)
        else:
            r_tile = max(g, (row_tile // g) * g)
        # >= 2 grid steps so ("parallel",) can shard across both v7x TensorCores.
        r_tile = min(r_tile, max(g, (rows // 2 // g) * g))
    grid_r = pl.cdiv(rows, r_tile)

    kernel = functools.partial(
        _logloudness_kernel, use_mxu=use_mxu,
        eps=float(eps), inv_logeps=float(1.0 / logeps))

    flops = rows * width * (2 * k + 1) if use_mxu else 3 * rows * width
    cost = pl.CostEstimate(
        flops=flops,
        transcendentals=rows * k,
        bytes_accessed=(rows * width * itemsize + rows * k * 4
                        + width * (k if use_mxu else 1) * 4))

    if input_buffers is not None:
        # Sweep knob (perf review): deeper input pipelining for pure streaming.
        x_spec = pl.BlockSpec((r_tile, width), lambda i: (i, 0),
                              pipeline_mode=pl.Buffered(input_buffers))
    else:
        x_spec = pl.BlockSpec((r_tile, width), lambda i: (i, 0))

    out = pl.pallas_call(
        kernel,
        out_shape=jax.ShapeDtypeStruct((rows, k), jnp.float32),
        grid_spec=pltpu.PrefetchScalarGridSpec(
            num_scalar_prefetch=0,
            grid=(grid_r,),
            in_specs=[
                x_spec,
                pl.BlockSpec(w_block, lambda i: (0, 0)),  # constant: fetched once
            ],
            out_specs=pl.BlockSpec((r_tile, k), lambda i: (i, 0)),
        ),
        compiler_params=pltpu.CompilerParams(
            dimension_semantics=("parallel",),
            vmem_limit_bytes=vmem_limit),
        cost_estimate=cost,
    )(frames, wmat)

    # Row r holds frames [r*k, (r+1)*k) in order -> flat order == frame order.
    return out.reshape(B, n)[:, None, :]


def log_loudness_ref(x: jnp.ndarray, size: int, eps: float) -> jnp.ndarray:
    """Pure-JAX reference mirroring the PyTorch forward."""
    B, T = x.shape
    n = T // size
    w = _hann_window(size)
    w = (w / jnp.mean(w)).reshape(1, 1, size)
    frames = x.astype(jnp.float32).reshape(B, n, size) * w
    logrms = 0.5 * jnp.log(jnp.clip(jnp.mean(frames ** 2, axis=-1), eps, 1.0))
    logeps = math.log(eps)
    return ((logeps - 2.0 * logrms) / logeps)[:, None, :]


if __name__ == "__main__":
    eps = 1e-4
    key = jax.random.PRNGKey(0)

    # (size, B, n_frames, dtype): exercises the MXU-packed path, ragged last
    # grid step, the k=1 VPU fallback, and bf16 ingest.
    cases = [
        (64, 2, 256, jnp.float32),    # k=32 packing, 2-step parallel grid (MXU)
        (256, 2, 28, jnp.float32),    # k=2 packing, ragged last grid step
        (96, 1, 18, jnp.float32),     # no legal packing -> k=1 lane-sum path
        (64, 2, 1024, jnp.bfloat16),  # bf16 ingest (f32 compute in-kernel)
    ]
    for idx, (size, B, n_frames, dtype) in enumerate(cases):
        T = size * n_frames
        key, sub = jax.random.split(key)
        x = (jax.random.normal(sub, (B, T), dtype=jnp.float32) * 0.1).astype(dtype)

        out = jax.block_until_ready(log_loudness(x, size, eps))
        ref = log_loudness_ref(x, size, eps)

        assert out.shape == (B, 1, n_frames), (idx, out.shape)
        assert jnp.allclose(out, ref, atol=1e-5, rtol=1e-5), (
            idx, float(jnp.max(jnp.abs(out - ref))))

    print("KERNEL_OK")
</pallas_src>

<mosaic_0001>
module attributes {stable_mosaic.version = 11 : i64} {
  func.func @_logloudness_kernel(%arg0: i32, %arg1: memref<8x2048xf32, #tpu.memory_space<vmem>>, %arg2: memref<2048x32xf32, #tpu.memory_space<vmem>>, %arg3: memref<8x32xf32, #tpu.memory_space<vmem>>) attributes {dimension_semantics = [#tpu.dimension_semantics<parallel>], iteration_bounds = array<i64: 2>, scalar_prefetch = 0 : i64, scratch_operands = 0 : i64, tpu.core_type = #tpu.core_type<tc>, window_params = [{transform_indices = @transform_0, window_bounds = array<i64: 8, 2048>}, {pipeline_mode = #tpu.pipeline_mode<synchronous>, transform_indices = @transform_1, window_bounds = array<i64: 2048, 32>}, {transform_indices = @transform_2, window_bounds = array<i64: 8, 32>}]} {
    %c0 = arith.constant 0 : index
    %c0_0 = arith.constant 0 : index
    %0 = vector.load %arg1[%c0, %c0_0] : memref<8x2048xf32, #tpu.memory_space<vmem>>, vector<8x2048xf32>
    %1 = arith.mulf %0, %0 : vector<8x2048xf32>
    %c0_1 = arith.constant 0 : index
    %c0_2 = arith.constant 0 : index
    %2 = vector.load %arg2[%c0_1, %c0_2] : memref<2048x32xf32, #tpu.memory_space<vmem>>, vector<2048x32xf32>
    %cst = arith.constant dense<0.000000e+00> : vector<8x32xf32>
    %3 = tpu.matmul %1, %2, %cst {dimension_numbers = #tpu.dot_dimension_numbers<[1], [0], [0], [1], [0, 0, 1, 1], [], []>, precision = #tpu.contract_precision<fp32>} : vector<8x2048xf32>, vector<2048x32xf32>, vector<8x32xf32> -> vector<8x32xf32>
    %cst_3 = arith.constant 9.99999974E-5 : f32
    %cst_4 = arith.constant 1.000000e+00 : f32
    %4 = vector.broadcast %cst_3 : f32 to vector<8x32xf32>
    %5 = arith.maximumf %4, %3 : vector<8x32xf32>
    %6 = vector.broadcast %cst_4 : f32 to vector<8x32xf32>
    %7 = arith.minimumf %6, %5 : vector<8x32xf32>
    %8 = math.log %7 : vector<8x32xf32>
    %cst_5 = arith.constant -0.108573623 : f32
    %9 = vector.broadcast %cst_5 : f32 to vector<8x32xf32>
    %10 = arith.mulf %8, %9 : vector<8x32xf32>
    %cst_6 = arith.constant 1.000000e+00 : f32
    %11 = vector.broadcast %cst_6 : f32 to vector<8x32xf32>
    %12 = arith.subf %11, %10 : vector<8x32xf32>
    %c0_7 = arith.constant 0 : index
    %c0_8 = arith.constant 0 : index
    %13 = vector.load %arg3[%c0_7, %c0_8] : memref<8x32xf32, #tpu.memory_space<vmem>>, vector<8x32xf32>
    tpu.vector_store %arg3[%c0_7, %c0_8], %12 {strides = array<i32>} : memref<8x32xf32, #tpu.memory_space<vmem>>, vector<8x32xf32>,
    return
  }
  func.func @transform_0(%arg0: i32) -> (i32, i32) {
    %c0_i32 = arith.constant 0 : i32
    %c0_i32_0 = arith.constant 0 : i32
    return %arg0, %c0_i32 : i32, i32
  }
  func.func @transform_1(%arg0: i32) -> (i32, i32) {
    %c0_i32 = arith.constant 0 : i32
    %c0_i32_0 = arith.constant 0 : i32
    %c0_i32_1 = arith.constant 0 : i32
    return %c0_i32, %c0_i32_0 : i32, i32
  }
  func.func @transform_2(%arg0: i32) -> (i32, i32) {
    %c0_i32 = arith.constant 0 : i32
    %c0_i32_0 = arith.constant 0 : i32
    return %arg0, %c0_i32 : i32, i32
  }
}

</mosaic_0001>

<llo_original>
// kernel: tpu_custom_call.1
$region0: #{tpu_custom_call.1}
  #allocation0 [shape = 'u32[]', space=smem, size = 0x4, offset = 0x4, fixed_abs, tag = 'smem constant byte address 0x4 - core index']
  #allocation1 [shape = 'u32[72,128]{1,0:T(1,128)}', space=vmem, size = 0x9000, scoped, tag = 'internal scratch']
  %s0 = inlined_call_operand.vmem [shape: f32[16,2048], index: 0, kind: input, shape index: {}]
  %s1 = inlined_call_operand.vmem [shape: f32[2048,32], index: 1, kind: input, shape index: {}]
  %s2 = inlined_call_operand.hbm [shape: f32[16,32], index: 2, kind: output, shape index: {}]
  %s3 = sld [smem:[#allocation0]]
  $region41: #{tpu_custom_call.1} parent=0
    _
  %s5 = ssub.s32 1, %s3
  %s6 = scalar_select 0, %s5, %s3
  $region1: #{tpu_custom_call.1} parent=0
    #allocation2 [shape = 'u8[8192]{0}', space=vmem, size = 0x2000, scoped, tag = 'output window, operand 0']
    #allocation3 [shape = 's32[2]{0}', space=sflag, size = 0x8, scoped, tag = 'scoped memory for tpu_custom_call.1']
    %7 = vsyncpa [#allocation3], 0
    %s8 = scalar_lea.sflag [#allocation3], 1
    %9 = vsyncpa %s8, 0
    loop: start=0, step=1, limit=4
    $region2: #{tpu_custom_call.1} parent=1 // loop_pre_header
      _
    $region3: #{tpu_custom_call.1} parent=1 // loop_header
      %s11 = sphi 0, %s15
      %p12 = scmp.ge.s32.totalorder %s11, 4
      %s21 = sphi 0, %s23
      %s24 = sphi 0, %s21
      %s25 = sphi 0, %s24
      %s41 = sphi 0, %s25
      %s45 = sphi 0, %s45
      %s47 = sphi 0, %s45
      %s48 = sphi 0, %s47
      %s62 = sphi 0, %s48
      %s68 = sphi 0, %s70
      %s71 = sphi 0, %s68
      %s72 = sphi 0, %s71
      %s88 = sphi 0, %s72
    $region4: #{tpu_custom_call.1} parent=1 // loop_header_branch
      %14 = sbr.rel (%p12) target = $region8
    $region5: #{tpu_custom_call.1} parent=1 // loop_body
      %s16 = ssub.s32 %s11, 1
      %s17 = ssub.s32 %s11, 2
      %s18 = sadd.s32 %s11, 1
      %s19 = ssub.s32 %s11, %s18
      %p20 = scmp.eq.s32.totalorder %s19, 0
      %s22 = sadd.s32 %s21, 1
      %s23 = scalar_select %p20, %s21, %s22
      %p26 = pneg %p20
      %p27 = scmp.eq.s32.totalorder %s11, 1
      %p28 = por %p26, %p27
      %p29 = scmp.ne.s32.totalorder %s21, %s24
      %p30 = scmp.eq.s32.totalorder %s11, 0
      %p31 = por %p29, %p30
      %p32 = scmp.ne.s32.totalorder %s21, %s24
      %p33 = scmp.eq.s32.totalorder %s16, 1
      %p34 = por %p32, %p33
      %p35 = scmp.ne.s32.totalorder %s24, %s25
      %p36 = scmp.eq.s32.totalorder %s16, 0
      %p37 = por %p35, %p36
      %p38 = scmp.ne.s32.totalorder %s24, %s25
      %p39 = scmp.eq.s32.totalorder %s17, 1
      %p40 = por %p38, %p39
      %p42 = scmp.ne.s32.totalorder %s25, %s41
      %p43 = scmp.eq.s32.totalorder %s17, 0
      %p44 = por %p42, %p43
      %s46 = sadd.s32 %s45, 1
      %p49 = scmp.eq.s32.totalorder %s11, 1
      %p50 = scmp.ne.s32.totalorder %s45, %s47
      %p51 = scmp.eq.s32.totalorder %s11, 0
      %p52 = por %p50, %p51
      %p53 = scmp.ne.s32.totalorder %s45, %s47
      %p54 = scmp.eq.s32.totalorder %s16, 1
      %p55 = por %p53, %p54
      %p56 = scmp.ne.s32.totalorder %s47, %s48
      %p57 = scmp.eq.s32.totalorder %s16, 0
      %p58 = por %p56, %p57
      %p59 = scmp.ne.s32.totalorder %s47, %s48
      %p60 = scmp.eq.s32.totalorder %s17, 1
      %p61 = por %p59, %p60
      %p63 = scmp.ne.s32.totalorder %s48, %s62
      %p64 = scmp.eq.s32.totalorder %s17, 0
      %p65 = por %p63, %p64
      %s66 = ssub.s32 %s11, %s18
      %p67 = scmp.eq.s32.totalorder %s66, 0
      %s69 = sadd.s32 %s68, 1
      %s70 = scalar_select %p67, %s68, %s69
      %p73 = pneg %p67
      %p74 = scmp.eq.s32.totalorder %s11, 1
      %p75 = por %p73, %p74
      %p76 = scmp.ne.s32.totalorder %s68, %s71
      %p77 = scmp.eq.s32.totalorder %s11, 0
      %p78 = por %p76, %p77
      %p79 = scmp.ne.s32.totalorder %s68, %s71
      %p80 = scmp.eq.s32.totalorder %s16, 1
      %p81 = por %p79, %p80
      %p82 = scmp.ne.s32.totalorder %s71, %s72
      %p83 = scmp.eq.s32.totalorder %s16, 0
      %p84 = por %p82, %p83
      %p85 = scmp.ne.s32.totalorder %s71, %s72
      %p86 = scmp.eq.s32.totalorder %s17, 1
      %p87 = por %p85, %p86
      %p89 = scmp.ne.s32.totalorder %s72, %s88
      %p90 = scmp.eq.s32.totalorder %s17, 0
      %p91 = por %p89, %p90
      %p92 = scmp.le.s32.totalorder 1, %s11
      %p93 = scmp.lt.s32.totalorder %s11, 3
      %p94 = pnand %p92, %p93
      %p95 = pneg %p94
      // Predicated region
      $region9: #{tpu_custom_call.1} parent=5 // pred_check
        _
      $region10: #{tpu_custom_call.1} parent=5 // pred_check_branch
        %97 = sbr.rel (%p94) target = $region12
      $region11: #{tpu_custom_call.1} parent=5 // pred_region
        %s98 = ssub.s32 %s11, 1
        // Predicated region
        $region13: #{tpu_custom_call.1} parent=11 // pred_check
          %p99 = pneg %p58
        $region14: #{tpu_custom_call.1} parent=11 // pred_check_branch
          %101 = sbr.rel (%p99) target = $region16
        $region15: #{tpu_custom_call.1} parent=11 // pred_region
          _
        $region16: #{tpu_custom_call.1} parent=11 // pred_fallthru
          _
      $region12: #{tpu_custom_call.1} parent=5 // pred_fallthru
        _
      %p102 = scmp.lt.s32.totalorder %s11, 2
      // Predicated region
      $region17: #{tpu_custom_call.1} parent=5 // pred_check
        %p103 = pneg %p102
      $region18: #{tpu_custom_call.1} parent=5 // pred_check_branch
        %105 = sbr.rel (%p103) target = $region20
      $region19: #{tpu_custom_call.1} parent=5 // pred_region
        // Predicated region
        $region21: #{tpu_custom_call.1} parent=19 // pred_check
          %p106 = pneg %p31
        $region22: #{tpu_custom_call.1} parent=19 // pred_check_branch
          %108 = sbr.rel (%p106) target = $region24
        $region23: #{tpu_custom_call.1} parent=19 // pred_region
          %p109 = scmp.lt.s32.totalorder %s11, 1
          %s110 = scalar_select %p109, %s11, 1
          %s111 = smul.addr %s110, 16
          %s112 = smul.addr %s111, 8
          %s113 = scalar_lea.vmem %s0, %s112
        $region24: #{tpu_custom_call.1} parent=19 // pred_fallthru
          _
      $region20: #{tpu_custom_call.1} parent=5 // pred_fallthru
        _
      %p114 = scmp.le.s32.totalorder 1, %s11
      %p115 = scmp.lt.s32.totalorder %s11, 3
      %p116 = pnand %p114, %p115
      %p117 = pneg %p116
      // Predicated region
      $region25: #{tpu_custom_call.1} parent=5 // pred_check
        _
      $region26: #{tpu_custom_call.1} parent=5 // pred_check_branch
        %119 = sbr.rel (%p116) target = $region28
      $region27: #{tpu_custom_call.1} parent=5 // pred_region
        %s120 = ssub.s32 %s11, 1
        %p121 = scmp.lt.s32.totalorder %s16, 1
        %s122 = scalar_select %p121, %s16, 1
        %s123 = smul.addr %s122, 16
        %s124 = smul.addr %s123, 8
        %s125 = scalar_lea.vmem %s0, %s124
        %p126 = pneg %p37
        %p127 = pneg %p34
        %p128 = pneg %p58
        %p129 = pneg %p55
        %p130 = pneg %p84
        %p131 = pneg %p81
        %s132 = sand.u32 %s71, 1
        %s133 = scalar_lea.sflag [#allocation3], %s132
        %s134 = sand.u32 %s71, 1
        %s135 = smul.addr %s134, 8
        %s136 = scalar_lea.vmem [#allocation2], %s135
        %p137 = scmp.lt.s32.totalorder %s16, 1
        %s138 = scalar_select %p137, %s16, 1
        %s139 = smul.addr %s138, 16
        %s140 = smul.addr %s139, 8
        %s141 = scalar_lea.vmem %s0, %s140
        %v142 = vld [vmem:[%s141] sm:$0xff]
        %v143 = vld [vmem:[%s141 + $0x8] sm:$0xff]
        %v144 = vld [vmem:[%s141 + $0x10] sm:$0xff]
        %v145 = vld [vmem:[%s141 + $0x18] sm:$0xff]
        %v146 = vld [vmem:[%s141 + $0x20] sm:$0xff]
        %v147 = vld [vmem:[%s141 + $0x28] sm:$0xff]
        %v148 = vld [vmem:[%s141 + $0x30] sm:$0xff]
        %v149 = vld [vmem:[%s141 + $0x38] sm:$0xff]
        %v150 = vld [vmem:[%s141 + $0x40] sm:$0xff]
        %v151 = vld [vmem:[%s141 + $0x48] sm:$0xff]
        %v152 = vld [vmem:[%s141 + $0x50] sm:$0xff]
        %v153 = vld [vmem:[%s141 + $0x58] sm:$0xff]
        %v154 = vld [vmem:[%s141 + $0x60] sm:$0xff]
        %v155 = vld [vmem:[%s141 + $0x68] sm:$0xff]
        %v156 = vld [vmem:[%s141 + $0x70] sm:$0xff]
        %v157 = vld [vmem:[%s141 + $0x78] sm:$0xff]
        %v158 = vmul.f32 %v142, %v142
        %v159 = vmul.f32 %v143, %v143
        %v160 = vmul.f32 %v144, %v144
        %v161 = vmul.f32 %v145, %v145
        %v162 = vmul.f32 %v146, %v146
        %v163 = vmul.f32 %v147, %v147
        %v164 = vmul.f32 %v148, %v148
        %v165 = vmul.f32 %v149, %v149
        %v166 = vmul.f32 %v150, %v150
        %v167 = vmul.f32 %v151, %v151
        %v168 = vmul.f32 %v152, %v152
        %v169 = vmul.f32 %v153, %v153
        %v170 = vmul.f32 %v154, %v154
        %v171 = vmul.f32 %v155, %v155
        %v172 = vmul.f32 %v156, %v156
        %v173 = vmul.f32 %v157, %v157
        %v174 = vld [vmem:[%s1] sm:$0xff]
        %v175 = vld [vmem:[%s1 + $0x8] sm:$0xff]
        %v176 = vld [vmem:[%s1 + $0x10] sm:$0xff]
        %v177 = vld [vmem:[%s1 + $0x18] sm:$0xff]
        %v178 = vld [vmem:[%s1 + $0x20] sm:$0xff]
        %v179 = vld [vmem:[%s1 + $0x28] sm:$0xff]
        %v180 = vld [vmem:[%s1 + $0x30] sm:$0xff]
        %v181 = vld [vmem:[%s1 + $0x38] sm:$0xff]
        %v182 = vld [vmem:[%s1 + $0x40] sm:$0xff]
        %v183 = vld [vmem:[%s1 + $0x48] sm:$0xff]
        %v184 = vld [vmem:[%s1 + $0x50] sm:$0xff]
        %v185 = vld [vmem:[%s1 + $0x58] sm:$0xff]
        %v186 = vld [vmem:[%s1 + $0x60] sm:$0xff]
        %v187 = vld [vmem:[%s1 + $0x68] sm:$0xff]
        %v188 = vld [vmem:[%s1 + $0x70] sm:$0xff]
        %v189 = vld [vmem:[%s1 + $0x78] sm:$0xff]
        %v190 = vld [vmem:[%s1 + $0x80] sm:$0xff]
        %v191 = vld [vmem:[%s1 + $0x88] sm:$0xff]
        %v192 = vld [vmem:[%s1 + $0x90] sm:$0xff]
        %v193 = vld [vmem:[%s1 + $0x98] sm:$0xff]
        %v194 = vld [vmem:[%s1 + $0xa0] sm:$0xff]
        %v195 = vld [vmem:[%s1 + $0xa8] sm:$0xff]
        %v196 = vld [vmem:[%s1 + $0xb0] sm:$0xff]
        %v197 = vld [vmem:[%s1 + $0xb8] sm:$0xff]
        %v198 = vld [vmem:[%s1 + $0xc0] sm:$0xff]
        %v199 = vld [vmem:[%s1 + $0xc8] sm:$0xff]
        %v200 = vld [vmem:[%s1 + $0xd0] sm:$0xff]
        %v201 = vld [vmem:[%s1 + $0xd8] sm:$0xff]
        %v202 = vld [vmem:[%s1 + $0xe0] sm:$0xff]
        %v203 = vld [vmem:[%s1 + $0xe8] sm:$0xff]
        %v204 = vld [vmem:[%s1 + $0xf0] sm:$0xff]
        %v205 = vld [vmem:[%s1 + $0xf8] sm:$0xff]
        %v206 = vld [vmem:[%s1 + $0x100] sm:$0xff]
        %v207 = vld [vmem:[%s1 + $0x108] sm:$0xff]
        %v208 = vld [vmem:[%s1 + $0x110] sm:$0xff]
        %v209 = vld [vmem:[%s1 + $0x118] sm:$0xff]
        %v210 = vld [vmem:[%s1 + $0x120] sm:$0xff]
        %v211 = vld [vmem:[%s1 + $0x128] sm:$0xff]
        %v212 = vld [vmem:[%s1 + $0x130] sm:$0xff]
        %v213 = vld [vmem:[%s1 + $0x138] sm:$0xff]
        %v214 = vld [vmem:[%s1 + $0x140] sm:$0xff]
        %v215 = vld [vmem:[%s1 + $0x148] sm:$0xff]
        %v216 = vld [vmem:[%s1 + $0x150] sm:$0xff]
        %v217 = vld [vmem:[%s1 + $0x158] sm:$0xff]
        %v218 = vld [vmem:[%s1 + $0x160] sm:$0xff]
        %v219 = vld [vmem:[%s1 + $0x168] sm:$0xff]
        %v220 = vld [vmem:[%s1 + $0x170] sm:$0xff]
        %v221 = vld [vmem:[%s1 + $0x178] sm:$0xff]
        %v222 = vld [vmem:[%s1 + $0x180] sm:$0xff]
        %v223 = vld [vmem:[%s1 + $0x188] sm:$0xff]
        %v224 = vld [vmem:[%s1 + $0x190] sm:$0xff]
        %v225 = vld [vmem:[%s1 + $0x198] sm:$0xff]
        %v226 = vld [vmem:[%s1 + $0x1a0] sm:$0xff]
        %v227 = vld [vmem:[%s1 + $0x1a8] sm:$0xff]
        %v228 = vld [vmem:[%s1 + $0x1b0] sm:$0xff]
        %v229 = vld [vmem:[%s1 + $0x1b8] sm:$0xff]
        %v230 = vld [vmem:[%s1 + $0x1c0] sm:$0xff]
        %v231 = vld [vmem:[%s1 + $0x1c8] sm:$0xff]
        %v232 = vld [vmem:[%s1 + $0x1d0] sm:$0xff]
        %v233 = vld [vmem:[%s1 + $0x1d8] sm:$0xff]
        %v234 = vld [vmem:[%s1 + $0x1e0] sm:$0xff]
        %v235 = vld [vmem:[%s1 + $0x1e8] sm:$0xff]
        %v236 = vld [vmem:[%s1 + $0x1f0] sm:$0xff]
        %v237 = vld [vmem:[%s1 + $0x1f8] sm:$0xff]
        %v238 = vld [vmem:[%s1 + $0x200] sm:$0xff]
        %v239 = vld [vmem:[%s1 + $0x208] sm:$0xff]
        %v240 = vld [vmem:[%s1 + $0x210] sm:$0xff]
        %v241 = vld [vmem:[%s1 + $0x218] sm:$0xff]
        %v242 = vld [vmem:[%s1 + $0x220] sm:$0xff]
        %v243 = vld [vmem:[%s1 + $0x228] sm:$0xff]
        %v244 = vld [vmem:[%s1 + $0x230] sm:$0xff]
        %v245 = vld [vmem:[%s1 + $0x238] sm:$0xff]
        %v246 = vld [vmem:[%s1 + $0x240] sm:$0xff]
        %v247 = vld [vmem:[%s1 + $0x248] sm:$0xff]
        %v248 = vld [vmem:[%s1 + $0x250] sm:$0xff]
        %v249 = vld [vmem:[%s1 + $0x258] sm:$0xff]
        %v250 = vld [vmem:[%s1 + $0x260] sm:$0xff]
        %v251 = vld [vmem:[%s1 + $0x268] sm:$0xff]
        %v252 = vld [vmem:[%s1 + $0x270] sm:$0xff]
        %v253 = vld [vmem:[%s1 + $0x278] sm:$0xff]
        %v254 = vld [vmem:[%s1 + $0x280] sm:$0xff]
        %v255 = vld [vmem:[%s1 + $0x288] sm:$0xff]
        %v256 = vld [vmem:[%s1 + $0x290] sm:$0xff]
        %v257 = vld [vmem:[%s1 + $0x298] sm:$0xff]
        %v258 = vld [vmem:[%s1 + $0x2a0] sm:$0xff]
        %v259 = vld [vmem:[%s1 + $0x2a8] sm:$0xff]
        %v260 = vld [vmem:[%s1 + $0x2b0] sm:$0xff]
        %v261 = vld [vmem:[%s1 + $0x2b8] sm:$0xff]
        %v262 = vld [vmem:[%s1 + $0x2c0] sm:$0xff]
        %v263 = vld [vmem:[%s1 + $0x2c8] sm:$0xff]
        %v264 = vld [vmem:[%s1 + $0x2d0] sm:$0xff]
        %v265 = vld [vmem:[%s1 + $0x2d8] sm:$0xff]
        %v266 = vld [vmem:[%s1 + $0x2e0] sm:$0xff]
        %v267 = vld [vmem:[%s1 + $0x2e8] sm:$0xff]
        %v268 = vld [vmem:[%s1 + $0x2f0] sm:$0xff]
        %v269 = vld [vmem:[%s1 + $0x2f8] sm:$0xff]
        %v270 = vld [vmem:[%s1 + $0x300] sm:$0xff]
        %v271 = vld [vmem:[%s1 + $0x308] sm:$0xff]
        %v272 = vld [vmem:[%s1 + $0x310] sm:$0xff]
        %v273 = vld [vmem:[%s1 + $0x318] sm:$0xff]
        %v274 = vld [vmem:[%s1 + $0x320] sm:$0xff]
        %v275 = vld [vmem:[%s1 + $0x328] sm:$0xff]
        %v276 = vld [vmem:[%s1 + $0x330] sm:$0xff]
        %v277 = vld [vmem:[%s1 + $0x338] sm:$0xff]
        %v278 = vld [vmem:[%s1 + $0x340] sm:$0xff]
        %v279 = vld [vmem:[%s1 + $0x348] sm:$0xff]
        %v280 = vld [vmem:[%s1 + $0x350] sm:$0xff]
        %v281 = vld [vmem:[%s1 + $0x358] sm:$0xff]
        %v282 = vld [vmem:[%s1 + $0x360] sm:$0xff]
        %v283 = vld [vmem:[%s1 + $0x368] sm:$0xff]
        %v284 = vld [vmem:[%s1 + $0x370] sm:$0xff]
        %v285 = vld [vmem:[%s1 + $0x378] sm:$0xff]
        %v286 = vld [vmem:[%s1 + $0x380] sm:$0xff]
        %v287 = vld [vmem:[%s1 + $0x388] sm:$0xff]
        %v288 = vld [vmem:[%s1 + $0x390] sm:$0xff]
        %v289 = vld [vmem:[%s1 + $0x398] sm:$0xff]
        %v290 = vld [vmem:[%s1 + $0x3a0] sm:$0xff]
        %v291 = vld [vmem:[%s1 + $0x3a8] sm:$0xff]
        %v292 = vld [vmem:[%s1 + $0x3b0] sm:$0xff]
        %v293 = vld [vmem:[%s1 + $0x3b8] sm:$0xff]
        %v294 = vld [vmem:[%s1 + $0x3c0] sm:$0xff]
        %v295 = vld [vmem:[%s1 + $0x3c8] sm:$0xff]
        %v296 = vld [vmem:[%s1 + $0x3d0] sm:$0xff]
        %v297 = vld [vmem:[%s1 + $0x3d8] sm:$0xff]
        %v298 = vld [vmem:[%s1 + $0x3e0] sm:$0xff]
        %v299 = vld [vmem:[%s1 + $0x3e8] sm:$0xff]
        %v300 = vld [vmem:[%s1 + $0x3f0] sm:$0xff]
        %v301 = vld [vmem:[%s1 + $0x3f8] sm:$0xff]
        %v302 = vld [vmem:[%s1 + $0x400] sm:$0xff]
        %v303 = vld [vmem:[%s1 + $0x408] sm:$0xff]
        %v304 = vld [vmem:[%s1 + $0x410] sm:$0xff]
        %v305 = vld [vmem:[%s1 + $0x418] sm:$0xff]
        %v306 = vld [vmem:[%s1 + $0x420] sm:$0xff]
        %v307 = vld [vmem:[%s1 + $0x428] sm:$0xff]
        %v308 = vld [vmem:[%s1 + $0x430] sm:$0xff]
        %v309 = vld [vmem:[%s1 + $0x438] sm:$0xff]
        %v310 = vld [vmem:[%s1 + $0x440] sm:$0xff]
        %v311 = vld [vmem:[%s1 + $0x448] sm:$0xff]
        %v312 = vld [vmem:[%s1 + $0x450] sm:$0xff]
        %v313 = vld [vmem:[%s1 + $0x458] sm:$0xff]
        %v314 = vld [vmem:[%s1 + $0x460] sm:$0xff]
        %v315 = vld [vmem:[%s1 + $0x468] sm:$0xff]
        %v316 = vld [vmem:[%s1 + $0x470] sm:$0xff]
        %v317 = vld [vmem:[%s1 + $0x478] sm:$0xff]
        %v318 = vld [vmem:[%s1 + $0x480] sm:$0xff]
        %v319 = vld [vmem:[%s1 + $0x488] sm:$0xff]
        %v320 = vld [vmem:[%s1 + $0x490] sm:$0xff]
        %v321 = vld [vmem:[%s1 + $0x498] sm:$0xff]
        %v322 = vld [vmem:[%s1 + $0x4a0] sm:$0xff]
        %v323 = vld [vmem:[%s1 + $0x4a8] sm:$0xff]
        %v324 = vld [vmem:[%s1 + $0x4b0] sm:$0xff]
        %v325 = vld [vmem:[%s1 + $0x4b8] sm:$0xff]
        %v326 = vld [vmem:[%s1 + $0x4c0] sm:$0xff]
        %v327 = vld [vmem:[%s1 + $0x4c8] sm:$0xff]
        %v328 = vld [vmem:[%s1 + $0x4d0] sm:$0xff]
        %v329 = vld [vmem:[%s1 + $0x4d8] sm:$0xff]
        %v330 = vld [vmem:[%s1 + $0x4e0] sm:$0xff]
        %v331 = vld [vmem:[%s1 + $0x4e8] sm:$0xff]
        %v332 = vld [vmem:[%s1 + $0x4f0] sm:$0xff]
        %v333 = vld [vmem:[%s1 + $0x4f8] sm:$0xff]
        %v334 = vld [vmem:[%s1 + $0x500] sm:$0xff]
        %v335 = vld [vmem:[%s1 + $0x508] sm:$0xff]
        %v336 = vld [vmem:[%s1 + $0x510] sm:$0xff]
        %v337 = vld [vmem:[%s1 + $0x518] sm:$0xff]
        %v338 = vld [vmem:[%s1 + $0x520] sm:$0xff]
        %v339 = vld [vmem:[%s1 + $0x528] sm:$0xff]
        %v340 = vld [vmem:[%s1 + $0x530] sm:$0xff]
        %v341 = vld [vmem:[%s1 + $0x538] sm:$0xff]
        %v342 = vld [vmem:[%s1 + $0x540] sm:$0xff]
        %v343 = vld [vmem:[%s1 + $0x548] sm:$0xff]
        %v344 = vld [vmem:[%s1 + $0x550] sm:$0xff]
        %v345 = vld [vmem:[%s1 + $0x558] sm:$0xff]
        %v346 = vld [vmem:[%s1 + $0x560] sm:$0xff]
        %v347 = vld [vmem:[%s1 + $0x568] sm:$0xff]
        %v348 = vld [vmem:[%s1 + $0x570] sm:$0xff]
        %v349 = vld [vmem:[%s1 + $0x578] sm:$0xff]
        %v350 = vld [vmem:[%s1 + $0x580] sm:$0xff]
        %v351 = vld [vmem:[%s1 + $0x588] sm:$0xff]
        %v352 = vld [vmem:[%s1 + $0x590] sm:$0xff]
        %v353 = vld [vmem:[%s1 + $0x598] sm:$0xff]
        %v354 = vld [vmem:[%s1 + $0x5a0] sm:$0xff]
        %v355 = vld [vmem:[%s1 + $0x5a8] sm:$0xff]
        %v356 = vld [vmem:[%s1 + $0x5b0] sm:$0xff]
        %v357 = vld [vmem:[%s1 + $0x5b8] sm:$0xff]
        %v358 = vld [vmem:[%s1 + $0x5c0] sm:$0xff]
        %v359 = vld [vmem:[%s1 + $0x5c8] sm:$0xff]
        %v360 = vld [vmem:[%s1 + $0x5d0] sm:$0xff]
        %v361 = vld [vmem:[%s1 + $0x5d8] sm:$0xff]
        %v362 = vld [vmem:[%s1 + $0x5e0] sm:$0xff]
        %v363 = vld [vmem:[%s1 + $0x5e8] sm:$0xff]
        %v364 = vld [vmem:[%s1 + $0x5f0] sm:$0xff]
        %v365 = vld [vmem:[%s1 + $0x5f8] sm:$0xff]
        %v366 = vld [vmem:[%s1 + $0x600] sm:$0xff]
        %v367 = vld [vmem:[%s1 + $0x608] sm:$0xff]
        %v368 = vld [vmem:[%s1 + $0x610] sm:$0xff]
        %v369 = vld [vmem:[%s1 + $0x618] sm:$0xff]
        %v370 = vld [vmem:[%s1 + $0x620] sm:$0xff]
        %v371 = vld [vmem:[%s1 + $0x628] sm:$0xff]
        %v372 = vld [vmem:[%s1 + $0x630] sm:$0xff]
        %v373 = vld [vmem:[%s1 + $0x638] sm:$0xff]
        %v374 = vld [vmem:[%s1 + $0x640] sm:$0xff]
        %v375 = vld [vmem:[%s1 + $0x648] sm:$0xff]
        %v376 = vld [vmem:[%s1 + $0x650] sm:$0xff]
        %v377 = vld [vmem:[%s1 + $0x658] sm:$0xff]
        %v378 = vld [vmem:[%s1 + $0x660] sm:$0xff]
        %v379 = vld [vmem:[%s1 + $0x668] sm:$0xff]
        %v380 = vld [vmem:[%s1 + $0x670] sm:$0xff]
        %v381 = vld [vmem:[%s1 + $0x678] sm:$0xff]
        %v382 = vld [vmem:[%s1 + $0x680] sm:$0xff]
        %v383 = vld [vmem:[%s1 + $0x688] sm:$0xff]
        %v384 = vld [vmem:[%s1 + $0x690] sm:$0xff]
        %v385 = vld [vmem:[%s1 + $0x698] sm:$0xff]
        %v386 = vld [vmem:[%s1 + $0x6a0] sm:$0xff]
        %v387 = vld [vmem:[%s1 + $0x6a8] sm:$0xff]
        %v388 = vld [vmem:[%s1 + $0x6b0] sm:$0xff]
        %v389 = vld [vmem:[%s1 + $0x6b8] sm:$0xff]
        %v390 = vld [vmem:[%s1 + $0x6c0] sm:$0xff]
        %v391 = vld [vmem:[%s1 + $0x6c8] sm:$0xff]
        %v392 = vld [vmem:[%s1 + $0x6d0] sm:$0xff]
        %v393 = vld [vmem:[%s1 + $0x6d8] sm:$0xff]
        %v394 = vld [vmem:[%s1 + $0x6e0] sm:$0xff]
        %v395 = vld [vmem:[%s1 + $0x6e8] sm:$0xff]
        %v396 = vld [vmem:[%s1 + $0x6f0] sm:$0xff]
        %v397 = vld [vmem:[%s1 + $0x6f8] sm:$0xff]
        %v398 = vld [vmem:[%s1 + $0x700] sm:$0xff]
        %v399 = vld [vmem:[%s1 + $0x708] sm:$0xff]
        %v400 = vld [vmem:[%s1 + $0x710] sm:$0xff]
        %v401 = vld [vmem:[%s1 + $0x718] sm:$0xff]
        %v402 = vld [vmem:[%s1 + $0x720] sm:$0xff]
        %v403 = vld [vmem:[%s1 + $0x728] sm:$0xff]
        %v404 = vld [vmem:[%s1 + $0x730] sm:$0xff]
        %v405 = vld [vmem:[%s1 + $0x738] sm:$0xff]
        %v406 = vld [vmem:[%s1 + $0x740] sm:$0xff]
        %v407 = vld [vmem:[%s1 + $0x748] sm:$0xff]
        %v408 = vld [vmem:[%s1 + $0x750] sm:$0xff]
        %v409 = vld [vmem:[%s1 + $0x758] sm:$0xff]
        %v410 = vld [vmem:[%s1 + $0x760] sm:$0xff]
        %v411 = vld [vmem:[%s1 + $0x768] sm:$0xff]
        %v412 = vld [vmem:[%s1 + $0x770] sm:$0xff]
        %v413 = vld [vmem:[%s1 + $0x778] sm:$0xff]
        %v414 = vld [vmem:[%s1 + $0x780] sm:$0xff]
        %v415 = vld [vmem:[%s1 + $0x788] sm:$0xff]
        %v416 = vld [vmem:[%s1 + $0x790] sm:$0xff]
        %v417 = vld [vmem:[%s1 + $0x798] sm:$0xff]
        %v418 = vld [vmem:[%s1 + $0x7a0] sm:$0xff]
        %v419 = vld [vmem:[%s1 + $0x7a8] sm:$0xff]
        %v420 = vld [vmem:[%s1 + $0x7b0] sm:$0xff]
        %v421 = vld [vmem:[%s1 + $0x7b8] sm:$0xff]
        %v422 = vld [vmem:[%s1 + $0x7c0] sm:$0xff]
        %v423 = vld [vmem:[%s1 + $0x7c8] sm:$0xff]
        %v424 = vld [vmem:[%s1 + $0x7d0] sm:$0xff]
        %v425 = vld [vmem:[%s1 + $0x7d8] sm:$0xff]
        %v426 = vld [vmem:[%s1 + $0x7e0] sm:$0xff]
        %v427 = vld [vmem:[%s1 + $0x7e8] sm:$0xff]
        %v428 = vld [vmem:[%s1 + $0x7f0] sm:$0xff]
        %v429 = vld [vmem:[%s1 + $0x7f8] sm:$0xff]
        %v430 = vand.u32 %v189, 4294901760
        %431 = vmatpush.msra.mxu0 %v430
        %v432 = vand.u32 %v188, 4294901760
        %433 = vmatpush.msra.mxu0 %v432
        %v434 = vand.u32 %v187, 4294901760
        %435 = vmatpush.msra.mxu0 %v434
        %v436 = vand.u32 %v186, 4294901760
        %437 = vmatpush.msra.mxu0 %v436
        %v438 = vand.u32 %v185, 4294901760
        %439 = vmatpush.msra.mxu0 %v438
        %v440 = vand.u32 %v184, 4294901760
        %441 = vmatpush.msra.mxu0 %v440
        %v442 = vand.u32 %v183, 4294901760
        %443 = vmatpush.msra.mxu0 %v442
        %v444 = vand.u32 %v182, 4294901760
        %445 = vmatpush.msra.mxu0 %v444
        %v446 = vand.u32 %v181, 4294901760
        %447 = vmatpush.msra.mxu0 %v446
        %v448 = vand.u32 %v180, 4294901760
        %449 = vmatpush.msra.mxu0 %v448
        %v450 = vand.u32 %v179, 4294901760
        %451 = vmatpush.msra.mxu0 %v450
        %v452 = vand.u32 %v178, 4294901760
        %453 = vmatpush.msra.mxu0 %v452
        %v454 = vand.u32 %v177, 4294901760
        %455 = vmatpush.msra.mxu0 %v454
        %v456 = vand.u32 %v176, 4294901760
        %457 = vmatpush.msra.mxu0 %v456
        %v458 = vand.u32 %v175, 4294901760
        %459 = vmatpush.msra.mxu0 %v458
        %v460 = vand.u32 %v174, 4294901760
        %461 = vmatpush.msra.mxu0 %v460
        %v462 = vand.u32 %v158, 4294901760
        %v463 = vsub.f32 %v158, %v462
        %v464 = vand.u32 %v463, 4294901760
        %v465 = vsub.f32 %v463, %v464
        %v466 = vand.u32 %v465, 4294901760
        %467 = vmatmul.f32.gmra.mxu0 %v466
        %v468 = vpop.f32.mrf.mxu0
        %v469 = vadd.f32 0.0, %v468
        %470 = vdwg.mxu0
        %v471 = vand.u32 %v189, 4294901760
        %v472 = vsub.f32 %v189, %v471
        %v473 = vand.u32 %v472, 4294901760
        %v474 = vsub.f32 %v472, %v473
        %v475 = vand.u32 %v474, 4294901760
        %476 = vmatpush.msra.mxu0 %v475
        %v477 = vand.u32 %v188, 4294901760
        %v478 = vsub.f32 %v188, %v477
        %v479 = vand.u32 %v478, 4294901760
        %v480 = vsub.f32 %v478, %v479
        %v481 = vand.u32 %v480, 4294901760
        %482 = vmatpush.msra.mxu0 %v481
        %v483 = vand.u32 %v187, 4294901760
        %v484 = vsub.f32 %v187, %v483
        %v485 = vand.u32 %v484, 4294901760
        %v486 = vsub.f32 %v484, %v485
        %v487 = vand.u32 %v486, 4294901760
        %488 = vmatpush.msra.mxu0 %v487
        %v489 = vand.u32 %v186, 4294901760
        %v490 = vsub.f32 %v186, %v489
        %v491 = vand.u32 %v490, 4294901760
        %v492 = vsub.f32 %v490, %v491
        %v493 = vand.u32 %v492, 4294901760
        %494 = vmatpush.msra.mxu0 %v493
        %v495 = vand.u32 %v185, 4294901760
        %v496 = vsub.f32 %v185, %v495
        %v497 = vand.u32 %v496, 4294901760
        %v498 = vsub.f32 %v496, %v497
        %v499 = vand.u32 %v498, 4294901760
        %500 = vmatpush.msra.mxu0 %v499
        %v501 = vand.u32 %v184, 4294901760
        %v502 = vsub.f32 %v184, %v501
        %v503 = vand.u32 %v502, 4294901760
        %v504 = vsub.f32 %v502, %v503
        %v505 = vand.u32 %v504, 4294901760
        %506 = vmatpush.msra.mxu0 %v505
        %v507 = vand.u32 %v183, 4294901760
        %v508 = vsub.f32 %v183, %v507
        %v509 = vand.u32 %v508, 4294901760
        %v510 = vsub.f32 %v508, %v509
        %v511 = vand.u32 %v510, 4294901760
        %512 = vmatpush.msra.mxu0 %v511
        %v513 = vand.u32 %v182, 4294901760
        %v514 = vsub.f32 %v182, %v513
        %v515 = vand.u32 %v514, 4294901760
        %v516 = vsub.f32 %v514, %v515
        %v517 = vand.u32 %v516, 4294901760
        %518 = vmatpush.msra.mxu0 %v517
        %v519 = vand.u32 %v181, 4294901760
        %v520 = vsub.f32 %v181, %v519
        %v521 = vand.u32 %v520, 4294901760
        %v522 = vsub.f32 %v520, %v521
        %v523 = vand.u32 %v522, 4294901760
        %524 = vmatpush.msra.mxu0 %v523
        %v525 = vand.u32 %v180, 4294901760
        %v526 = vsub.f32 %v180, %v525
        %v527 = vand.u32 %v526, 4294901760
        %v528 = vsub.f32 %v526, %v527
        %v529 = vand.u32 %v528, 4294901760
        %530 = vmatpush.msra.mxu0 %v529
        %v531 = vand.u32 %v179, 4294901760
        %v532 = vsub.f32 %v179, %v531
        %v533 = vand.u32 %v532, 4294901760
        %v534 = vsub.f32 %v532, %v533
        %v535 = vand.u32 %v534, 4294901760
        %536 = vmatpush.msra.mxu0 %v535
        %v537 = vand.u32 %v178, 4294901760
        %v538 = vsub.f32 %v178, %v537
        %v539 = vand.u32 %v538, 4294901760
        %v540 = vsub.f32 %v538, %v539
        %v541 = vand.u32 %v540, 4294901760
        %542 = vmatpush.msra.mxu0 %v541
        %v543 = vand.u32 %v177, 4294901760
        %v544 = vsub.f32 %v177, %v543
        %v545 = vand.u32 %v544, 4294901760
        %v546 = vsub.f32 %v544, %v545
        %v547 = vand.u32 %v546, 4294901760
        %548 = vmatpush.msra.mxu0 %v547
        %v549 = vand.u32 %v176, 4294901760
        %v550 = vsub.f32 %v176, %v549
        %v551 = vand.u32 %v550, 4294901760
        %v552 = vsub.f32 %v550, %v551
        %v553 = vand.u32 %v552, 4294901760
        %554 = vmatpush.msra.mxu0 %v553
        %v555 = vand.u32 %v175, 4294901760
        %v556 = vsub.f32 %v175, %v555
        %v557 = vand.u32 %v556, 4294901760
        %v558 = vsub.f32 %v556, %v557
        %v559 = vand.u32 %v558, 4294901760
        %560 = vmatpush.msra.mxu0 %v559
        %v561 = vand.u32 %v174, 4294901760
        %v562 = vsub.f32 %v174, %v561
        %v563 = vand.u32 %v562, 4294901760
        %v564 = vsub.f32 %v562, %v563
        %v565 = vand.u32 %v564, 4294901760
        %566 = vmatpush.msra.mxu0 %v565
        %v567 = vand.u32 %v158, 4294901760
        %568 = vmatmul.f32.gmra.mxu0 %v567
        %v569 = vpop.f32.mrf.mxu0
        %v570 = vadd.f32 %v469, %v569
        %571 = vdwg.mxu0
        %v572 = vand.u32 %v189, 4294901760
        %v573 = vsub.f32 %v189, %v572
        %574 = vmatpush.msra.mxu0 %v573
        %v575 = vand.u32 %v188, 4294901760
        %v576 = vsub.f32 %v188, %v575
        %577 = vmatpush.msra.mxu0 %v576
        %v578 = vand.u32 %v187, 4294901760
        %v579 = vsub.f32 %v187, %v578
        %580 = vmatpush.msra.mxu0 %v579
        %v581 = vand.u32 %v186, 4294901760
        %v582 = vsub.f32 %v186, %v581
        %583 = vmatpush.msra.mxu0 %v582
        %v584 = vand.u32 %v185, 4294901760
        %v585 = vsub.f32 %v185, %v584
        %586 = vmatpush.msra.mxu0 %v585
        %v587 = vand.u32 %v184, 4294901760
        %v588 = vsub.f32 %v184, %v587
        %589 = vmatpush.msra.mxu0 %v588
        %v590 = vand.u32 %v183, 4294901760
        %v591 = vsub.f32 %v183, %v590
        %592 = vmatpush.msra.mxu0 %v591
        %v593 = vand.u32 %v182, 4294901760
        %v594 = vsub.f32 %v182, %v593
        %595 = vmatpush.msra.mxu0 %v594
        %v596 = vand.u32 %v181, 4294901760
        %v597 = vsub.f32 %v181, %v596
        %598 = vmatpush.msra.mxu0 %v597
        %v599 = vand.u32 %v180, 4294901760
        %v600 = vsub.f32 %v180, %v599
        %601 = vmatpush.msra.mxu0 %v600
        %v602 = vand.u32 %v179, 4294901760
        %v603 = vsub.f32 %v179, %v602
        %604 = vmatpush.msra.mxu0 %v603
        %v605 = vand.u32 %v178, 4294901760
        %v606 = vsub.f32 %v178, %v605
        %607 = vmatpush.msra.mxu0 %v606
        %v608 = vand.u32 %v177, 4294901760
        %v609 = vsub.f32 %v177, %v608
        %610 = vmatpush.msra.mxu0 %v609
        %v611 = vand.u32 %v176, 4294901760
        %v612 = vsub.f32 %v176, %v611
        %613 = vmatpush.msra.mxu0 %v612
        %v614 = vand.u32 %v175, 4294901760
        %v615 = vsub.f32 %v175, %v614
        %616 = vmatpush.msra.mxu0 %v615
        %v617 = vand.u32 %v174, 4294901760
        %v618 = vsub.f32 %v174, %v617
        %619 = vmatpush.msra.mxu0 %v618
        %v620 = vand.u32 %v158, 4294901760
        %v621 = vsub.f32 %v158, %v620
        %622 = vmatmul.f32.gmra.mxu0 %v621
        %v623 = vpop.f32.mrf.mxu0
        %v624 = vadd.f32 %v570, %v623
        %625 = vdwg.mxu0
        %v626 = vand.u32 %v189, 4294901760
        %627 = vmatpush.msra.mxu0 %v626
        %v628 = vand.u32 %v188, 4294901760
        %629 = vmatpush.msra.mxu0 %v628
        %v630 = vand.u32 %v187, 4294901760
        %631 = vmatpush.msra.mxu0 %v630
        %v632 = vand.u32 %v186, 4294901760
        %633 = vmatpush.msra.mxu0 %v632
        %v634 = vand.u32 %v185, 4294901760
        %635 = vmatpush.msra.mxu0 %v634
        %v636 = vand.u32 %v184, 4294901760
        %637 = vmatpush.msra.mxu0 %v636
        %v638 = vand.u32 %v183, 4294901760
        %639 = vmatpush.msra.mxu0 %v638
        %v640 = vand.u32 %v182, 4294901760
        %641 = vmatpush.msra.mxu0 %v640
        %v642 = vand.u32 %v181, 4294901760
        %643 = vmatpush.msra.mxu0 %v642
        %v644 = vand.u32 %v180, 4294901760
        %645 = vmatpush.msra.mxu0 %v644
        %v646 = vand.u32 %v179, 4294901760
        %647 = vmatpush.msra.mxu0 %v646
        %v648 = vand.u32 %v178, 4294901760
        %649 = vmatpush.msra.mxu0 %v648
        %v650 = vand.u32 %v177, 4294901760
        %651 = vmatpush.msra.mxu0 %v650
        %v652 = vand.u32 %v176, 4294901760
        %653 = vmatpush.msra.mxu0 %v652
        %v654 = vand.u32 %v175, 4294901760
        %655 = vmatpush.msra.mxu0 %v654
        %v656 = vand.u32 %v174, 4294901760
        %657 = vmatpush.msra.mxu0 %v656
        %v658 = vand.u32 %v158, 4294901760
        %v659 = vsub.f32 %v158, %v658
        %v660 = vand.u32 %v659, 4294901760
        %661 = vmatmul.f32.gmra.mxu0 %v660
        %v662 = vpop.f32.mrf.mxu0
        %v663 = vadd.f32 %v624, %v662
        %664 = vdwg.mxu0
        %v665 = vand.u32 %v189, 4294901760
        %v666 = vsub.f32 %v189, %v665
        %v667 = vand.u32 %v666, 4294901760
        %668 = vmatpush.msra.mxu0 %v667
        %v669 = vand.u32 %v188, 4294901760
        %v670 = vsub.f32 %v188, %v669
        %v671 = vand.u32 %v670, 4294901760
        %672 = vmatpush.msra.mxu0 %v671
        %v673 = vand.u32 %v187, 4294901760
        %v674 = vsub.f32 %v187, %v673
        %v675 = vand.u32 %v674, 4294901760
        %676 = vmatpush.msra.mxu0 %v675
        %v677 = vand.u32 %v186, 4294901760
        %v678 = vsub.f32 %v186, %v677
        %v679 = vand.u32 %v678, 4294901760
        %680 = vmatpush.msra.mxu0 %v679
        %v681 = vand.u32 %v185, 4294901760
        %v682 = vsub.f32 %v185, %v681
        %v683 = vand.u32 %v682, 4294901760
        %684 = vmatpush.msra.mxu0 %v683
        %v685 = vand.u32 %v184, 4294901760
        %v686 = vsub.f32 %v184, %v685
        %v687 = vand.u32 %v686, 4294901760
        %688 = vmatpush.msra.mxu0 %v687
        %v689 = vand.u32 %v183, 4294901760
        %v690 = vsub.f32 %v183, %v689
        %v691 = vand.u32 %v690, 4294901760
        %692 = vmatpush.msra.mxu0 %v691
        %v693 = vand.u32 %v182, 4294901760
        %v694 = vsub.f32 %v182, %v693
        %v695 = vand.u32 %v694, 4294901760
        %696 = vmatpush.msra.mxu0 %v695
        %v697 = vand.u32 %v181, 4294901760
        %v698 = vsub.f32 %v181, %v697
        %v699 = vand.u32 %v698, 4294901760
        %700 = vmatpush.msra.mxu0 %v699
        %v701 = vand.u32 %v180, 4294901760
        %v702 = vsub.f32 %v180, %v701
        %v703 = vand.u32 %v702, 4294901760
        %704 = vmatpush.msra.mxu0 %v703
        %v705 = vand.u32 %v179, 4294901760
        %v706 = vsub.f32 %v179, %v705
        %v707 = vand.u32 %v706, 4294901760
        %708 = vmatpush.msra.mxu0 %v707
        %v709 = vand.u32 %v178, 4294901760
        %v710 = vsub.f32 %v178, %v709
        %v711 = vand.u32 %v710, 4294901760
        %712 = vmatpush.msra.mxu0 %v711
        %v713 = vand.u32 %v177, 4294901760
        %v714 = vsub.f32 %v177, %v713
        %v715 = vand.u32 %v714, 4294901760
        %716 = vmatpush.msra.mxu0 %v715
        %v717 = vand.u32 %v176, 4294901760
        %v718 = vsub.f32 %v176, %v717
        %v719 = vand.u32 %v718, 4294901760
        %720 = vmatpush.msra.mxu0 %v719
        %v721 = vand.u32 %v175, 4294901760
        %v722 = vsub.f32 %v175, %v721
        %v723 = vand.u32 %v722, 4294901760
        %724 = vmatpush.msra.mxu0 %v723
        %v725 = vand.u32 %v174, 4294901760
        %v726 = vsub.f32 %v174, %v725
        %v727 = vand.u32 %v726, 4294901760
        %728 = vmatpush.msra.mxu0 %v727
        %v729 = vand.u32 %v158, 4294901760
        %730 = vmatmul.f32.gmra.mxu0 %v729
        %v731 = vpop.f32.mrf.mxu0
        %v732 = vadd.f32 %v663, %v731
        %733 = vdwg.mxu0
        %v734 = vand.u32 %v189, 4294901760
        %735 = vmatpush.msra.mxu0 %v734
        %v736 = vand.u32 %v188, 4294901760
        %737 = vmatpush.msra.mxu0 %v736
        %v738 = vand.u32 %v187, 4294901760
        %739 = vmatpush.msra.mxu0 %v738
        %v740 = vand.u32 %v186, 4294901760
        %741 = vmatpush.msra.mxu0 %v740
        %v742 = vand.u32 %v185, 4294901760
        %743 = vmatpush.msra.mxu0 %v742
        %v744 = vand.u32 %v184, 4294901760
        %745 = vmatpush.msra.mxu0 %v744
        %v746 = vand.u32 %v183, 4294901760
        %747 = vmatpush.msra.mxu0 %v746
        %v748 = vand.u32 %v182, 4294901760
        %749 = vmatpush.msra.mxu0 %v748
        %v750 = vand.u32 %v181, 4294901760
        %751 = vmatpush.msra.mxu0 %v750
        %v752 = vand.u32 %v180, 4294901760
        %753 = vmatpush.msra.mxu0 %v752
        %v754 = vand.u32 %v179, 4294901760
        %755 = vmatpush.msra.mxu0 %v754
        %v756 = vand.u32 %v178, 4294901760
        %757 = vmatpush.msra.mxu0 %v756
        %v758 = vand.u32 %v177, 4294901760
        %759 = vmatpush.msra.mxu0 %v758
        %v760 = vand.u32 %v176, 4294901760
        %761 = vmatpush.msra.mxu0 %v760
        %v762 = vand.u32 %v175, 4294901760
        %763 = vmatpush.msra.mxu0 %v762
        %v764 = vand.u32 %v174, 4294901760
        %765 = vmatpush.msra.mxu0 %v764
        %v766 = vand.u32 %v158, 4294901760
        %767 = vmatmul.f32.gmra.mxu0 %v766
        %v768 = vpop.f32.mrf.mxu0
        %v769 = vadd.f32 %v732, %v768
        %770 = vdwg.mxu0
        %v771 = vand.u32 %v205, 4294901760
        %772 = vmatpush.msra.mxu0 %v771
        %v773 = vand.u32 %v204, 4294901760
        %774 = vmatpush.msra.mxu0 %v773
        %v775 = vand.u32 %v203, 4294901760
        %776 = vmatpush.msra.mxu0 %v775
        %v777 = vand.u32 %v202, 4294901760
        %778 = vmatpush.msra.mxu0 %v777
        %v779 = vand.u32 %v201, 4294901760
        %780 = vmatpush.msra.mxu0 %v779
        %v781 = vand.u32 %v200, 4294901760
        %782 = vmatpush.msra.mxu0 %v781
        %v783 = vand.u32 %v199, 4294901760
        %784 = vmatpush.msra.mxu0 %v783
        %v785 = vand.u32 %v198, 4294901760
        %786 = vmatpush.msra.mxu0 %v785
        %v787 = vand.u32 %v197, 4294901760
        %788 = vmatpush.msra.mxu0 %v787
        %v789 = vand.u32 %v196, 4294901760
        %790 = vmatpush.msra.mxu0 %v789
        %v791 = vand.u32 %v195, 4294901760
        %792 = vmatpush.msra.mxu0 %v791
        %v793 = vand.u32 %v194, 4294901760
        %794 = vmatpush.msra.mxu0 %v793
        %v795 = vand.u32 %v193, 4294901760
        %796 = vmatpush.msra.mxu0 %v795
        %v797 = vand.u32 %v192, 4294901760
        %798 = vmatpush.msra.mxu0 %v797
        %v799 = vand.u32 %v191, 4294901760
        %800 = vmatpush.msra.mxu0 %v799
        %v801 = vand.u32 %v190, 4294901760
        %802 = vmatpush.msra.mxu0 %v801
        %v803 = vand.u32 %v159, 4294901760
        %v804 = vsub.f32 %v159, %v803
        %v805 = vand.u32 %v804, 4294901760
        %v806 = vsub.f32 %v804, %v805
        %v807 = vand.u32 %v806, 4294901760
        %808 = vmatmul.f32.gmra.mxu0 %v807
        %v809 = vpop.f32.mrf.mxu0
        %v810 = vadd.f32 %v769, %v809
        %811 = vdwg.mxu0
        %v812 = vand.u32 %v205, 4294901760
        %v813 = vsub.f32 %v205, %v812
        %v814 = vand.u32 %v813, 4294901760
        %v815 = vsub.f32 %v813, %v814
        %v816 = vand.u32 %v815, 4294901760
        %817 = vmatpush.msra.mxu0 %v816
        %v818 = vand.u32 %v204, 4294901760
        %v819 = vsub.f32 %v204, %v818
        %v820 = vand.u32 %v819, 4294901760
        %v821 = vsub.f32 %v819, %v820
        %v822 = vand.u32 %v821, 4294901760
        %823 = vmatpush.msra.mxu0 %v822
        %v824 = vand.u32 %v203, 4294901760
        %v825 = vsub.f32 %v203, %v824
        %v826 = vand.u32 %v825, 4294901760
        %v827 = vsub.f32 %v825, %v826
        %v828 = vand.u32 %v827, 4294901760
        %829 = vmatpush.msra.mxu0 %v828
        %v830 = vand.u32 %v202, 4294901760
        %v831 = vsub.f32 %v202, %v830
        %v832 = vand.u32 %v831, 4294901760
        %v833 = vsub.f32 %v831, %v832
        %v834 = vand.u32 %v833, 4294901760
        %835 = vmatpush.msra.mxu0 %v834
        %v836 = vand.u32 %v201, 4294901760
        %v837 = vsub.f32 %v201, %v836
        %v838 = vand.u32 %v837, 4294901760
        %v839 = vsub.f32 %v837, %v838
        %v840 = vand.u32 %v839, 4294901760
        %841 = vmatpush.msra.mxu0 %v840
        %v842 = vand.u32 %v200, 4294901760
        %v843 = vsub.f32 %v200, %v842
        %v844 = vand.u32 %v843, 4294901760
        %v845 = vsub.f32 %v843, %v844
        %v846 = vand.u32 %v845, 4294901760
        %847 = vmatpush.msra.mxu0 %v846
        %v848 = vand.u32 %v199, 4294901760
        %v849 = vsub.f32 %v199, %v848
        %v850 = vand.u32 %v849, 4294901760
        %v851 = vsub.f32 %v849, %v850
        %v852 = vand.u32 %v851, 4294901760
        %853 = vmatpush.msra.mxu0 %v852
        %v854 = vand.u32 %v198, 4294901760
        %v855 = vsub.f32 %v198, %v854
        %v856 = vand.u32 %v855, 4294901760
        %v857 = vsub.f32 %v855, %v856
        %v858 = vand.u32 %v857, 4294901760
        %859 = vmatpush.msra.mxu0 %v858
        %v860 = vand.u32 %v197, 4294901760
        %v861 = vsub.f32 %v197, %v860
        %v862 = vand.u32 %v861, 4294901760
        %v863 = vsub.f32 %v861, %v862
        %v864 = vand.u32 %v863, 4294901760
        %865 = vmatpush.msra.mxu0 %v864
        %v866 = vand.u32 %v196, 4294901760
        %v867 = vsub.f32 %v196, %v866
        %v868 = vand.u32 %v867, 4294901760
        %v869 = vsub.f32 %v867, %v868
        %v870 = vand.u32 %v869, 4294901760
        %871 = vmatpush.msra.mxu0 %v870
        %v872 = vand.u32 %v195, 4294901760
        %v873 = vsub.f32 %v195, %v872
        %v874 = vand.u32 %v873, 4294901760
        %v875 = vsub.f32 %v873, %v874
        %v876 = vand.u32 %v875, 4294901760
        %877 = vmatpush.msra.mxu0 %v876
        %v878 = vand.u32 %v194, 4294901760
        %v879 = vsub.f32 %v194, %v878
        %v880 = vand.u32 %v879, 4294901760
        %v881 = vsub.f32 %v879, %v880
        %v882 = vand.u32 %v881, 4294901760
        %883 = vmatpush.msra.mxu0 %v882
        %v884 = vand.u32 %v193, 4294901760
        %v885 = vsub.f32 %v193, %v884
        %v886 = vand.u32 %v885, 4294901760
        %v887 = vsub.f32 %v885, %v886
        %v888 = vand.u32 %v887, 4294901760
        %889 = vmatpush.msra.mxu0 %v888
        %v890 = vand.u32 %v192, 4294901760
        %v891 = vsub.f32 %v192, %v890
        %v892 = vand.u32 %v891, 4294901760
        %v893 = vsub.f32 %v891, %v892
        %v894 = vand.u32 %v893, 4294901760
        %895 = vmatpush.msra.mxu0 %v894
        %v896 = vand.u32 %v191, 4294901760
        %v897 = vsub.f32 %v191, %v896
        %v898 = vand.u32 %v897, 4294901760
        %v899 = vsub.f32 %v897, %v898
        %v900 = vand.u32 %v899, 4294901760
        %901 = vmatpush.msra.mxu0 %v900
        %v902 = vand.u32 %v190, 4294901760
        %v903 = vsub.f32 %v190, %v902
        %v904 = vand.u32 %v903, 4294901760
        %v905 = vsub.f32 %v903, %v904
        %v906 = vand.u32 %v905, 4294901760
        %907 = vmatpush.msra.mxu0 %v906
        %v908 = vand.u32 %v159, 4294901760
        %909 = vmatmul.f32.gmra.mxu0 %v908
        %v910 = vpop.f32.mrf.mxu0
        %v911 = vadd.f32 %v810, %v910
        %912 = vdwg.mxu0
        %v913 = vand.u32 %v205, 4294901760
        %v914 = vsub.f32 %v205, %v913
        %915 = vmatpush.msra.mxu0 %v914
        %v916 = vand.u32 %v204, 4294901760
        %v917 = vsub.f32 %v204, %v916
        %918 = vmatpush.msra.mxu0 %v917
        %v919 = vand.u32 %v203, 4294901760
        %v920 = vsub.f32 %v203, %v919
        %921 = vmatpush.msra.mxu0 %v920
        %v922 = vand.u32 %v202, 4294901760
        %v923 = vsub.f32 %v202, %v922
        %924 = vmatpush.msra.mxu0 %v923
        %v925 = vand.u32 %v201, 4294901760
        %v926 = vsub.f32 %v201, %v925
        %927 = vmatpush.msra.mxu0 %v926
        %v928 = vand.u32 %v200, 4294901760
        %v929 = vsub.f32 %v200, %v928
        %930 = vmatpush.msra.mxu0 %v929
        %v931 = vand.u32 %v199, 4294901760
        %v932 = vsub.f32 %v199, %v931
        %933 = vmatpush.msra.mxu0 %v932
        %v934 = vand.u32 %v198, 4294901760
        %v935 = vsub.f32 %v198, %v934
        %936 = vmatpush.msra.mxu0 %v935
        %v937 = vand.u32 %v197, 4294901760
        %v938 = vsub.f32 %v197, %v937
        %939 = vmatpush.msra.mxu0 %v938
        %v940 = vand.u32 %v196, 4294901760
        %v941 = vsub.f32 %v196, %v940
        %942 = vmatpush.msra.mxu0 %v941
        %v943 = vand.u32 %v195, 4294901760
        %v944 = vsub.f32 %v195, %v943
        %945 = vmatpush.msra.mxu0 %v944
        %v946 = vand.u32 %v194, 4294901760
        %v947 = vsub.f32 %v194, %v946
        %948 = vmatpush.msra.mxu0 %v947
        %v949 = vand.u32 %v193, 4294901760
        %v950 = vsub.f32 %v193, %v949
        %951 = vmatpush.msra.mxu0 %v950
        %v952 = vand.u32 %v192, 4294901760
        %v953 = vsub.f32 %v192, %v952
        %954 = vmatpush.msra.mxu0 %v953
        %v955 = vand.u32 %v191, 4294901760
        %v956 = vsub.f32 %v191, %v955
        %957 = vmatpush.msra.mxu0 %v956
        %v958 = vand.u32 %v190, 4294901760
        %v959 = vsub.f32 %v190, %v958
        %960 = vmatpush.msra.mxu0 %v959
        %v961 = vand.u32 %v159, 4294901760
        %v962 = vsub.f32 %v159, %v961
        %963 = vmatmul.f32.gmra.mxu0 %v962
        %v964 = vpop.f32.mrf.mxu0
        %v965 = vadd.f32 %v911, %v964
        %966 = vdwg.mxu0
        %v967 = vand.u32 %v205, 4294901760
        %968 = vmatpush.msra.mxu0 %v967
        %v969 = vand.u32 %v204, 4294901760
        %970 = vmatpush.msra.mxu0 %v969
        %v971 = vand.u32 %v203, 4294901760
        %972 = vmatpush.msra.mxu0 %v971
        %v973 = vand.u32 %v202, 4294901760
        %974 = vmatpush.msra.mxu0 %v973
        %v975 = vand.u32 %v201, 4294901760
        %976 = vmatpush.msra.mxu0 %v975
        %v977 = vand.u32 %v200, 4294901760
        %978 = vmatpush.msra.mxu0 %v977
        %v979 = vand.u32 %v199, 4294901760
        %980 = vmatpush.msra.mxu0 %v979
        %v981 = vand.u32 %v198, 4294901760
        %982 = vmatpush.msra.mxu0 %v981
        %v983 = vand.u32 %v197, 4294901760
        %984 = vmatpush.msra.mxu0 %v983
        %v985 = vand.u32 %v196, 4294901760
        %986 = vmatpush.msra.mxu0 %v985
        %v987 = vand.u32 %v195, 4294901760
        %988 = vmatpush.msra.mxu0 %v987
        %v989 = vand.u32 %v194, 4294901760
        %990 = vmatpush.msra.mxu0 %v989
        %v991 = vand.u32 %v193, 4294901760
        %992 = vmatpush.msra.mxu0 %v991
        %v993 = vand.u32 %v192, 4294901760
        %994 = vmatpush.msra.mxu0 %v993
        %v995 = vand.u32 %v191, 4294901760
        %996 = vmatpush.msra.mxu0 %v995
        %v997 = vand.u32 %v190, 4294901760
        %998 = vmatpush.msra.mxu0 %v997
        %v999 = vand.u32 %v159, 4294901760
        %v1000 = vsub.f32 %v159, %v999
        %v1001 = vand.u32 %v1000, 4294901760
        %1002 = vmatmul.f32.gmra.mxu0 %v1001
        %v1003 = vpop.f32.mrf.mxu0
        %v1004 = vadd.f32 %v965, %v1003
        %1005 = vdwg.mxu0
        %v1006 = vand.u32 %v205, 4294901760
        %v1007 = vsub.f32 %v205, %v1006
        %v1008 = vand.u32 %v1007, 4294901760
        %1009 = vmatpush.msra.mxu0 %v1008
        %v1010 = vand.u32 %v204, 4294901760
        %v1011 = vsub.f32 %v204, %v1010
        %v1012 = vand.u32 %v1011, 4294901760
        %1013 = vmatpush.msra.mxu0 %v1012
        %v1014 = vand.u32 %v203, 4294901760
        %v1015 = vsub.f32 %v203, %v1014
        %v1016 = vand.u32 %v1015, 4294901760
        %1017 = vmatpush.msra.mxu0 %v1016
        %v1018 = vand.u32 %v202, 4294901760
        %v1019 = vsub.f32 %v202, %v1018
        %v1020 = vand.u32 %v1019, 4294901760
        %1021 = vmatpush.msra.mxu0 %v1020
        %v1022 = vand.u32 %v201, 4294901760
        %v1023 = vsub.f32 %v201, %v1022
        %v1024 = vand.u32 %v1023, 4294901760
        %1025 = vmatpush.msra.mxu0 %v1024
        %v1026 = vand.u32 %v200, 4294901760
        %v1027 = vsub.f32 %v200, %v1026
        %v1028 = vand.u32 %v1027, 4294901760
        %1029 = vmatpush.msra.mxu0 %v1028
        %v1030 = vand.u32 %v199, 4294901760
        %v1031 = vsub.f32 %v199, %v1030
        %v1032 = vand.u32 %v1031, 4294901760
        %1033 = vmatpush.msra.mxu0 %v1032
        %v1034 = vand.u32 %v198, 4294901760
        %v1035 = vsub.f32 %v198, %v1034
        %v1036 = vand.u32 %v1035, 4294901760
        %1037 = vmatpush.msra.mxu0 %v1036
        %v1038 = vand.u32 %v197, 4294901760
        %v1039 = vsub.f32 %v197, %v1038
        %v1040 = vand.u32 %v1039, 4294901760
        %1041 = vmatpush.msra.mxu0 %v1040
        %v1042 = vand.u32 %v196, 4294901760
        %v1043 = vsub.f32 %v196, %v1042
        %v1044 = vand.u32 %v1043, 4294901760
        %1045 = vmatpush.msra.mxu0 %v1044
        %v1046 = vand.u32 %v195, 4294901760
        %v1047 = vsub.f32 %v195, %v1046
        %v1048 = vand.u32 %v1047, 4294901760
        %1049 = vmatpush.msra.mxu0 %v1048
        %v1050 = vand.u32 %v194, 4294901760
        %v1051 = vsub.f32 %v194, %v1050
        %v1052 = vand.u32 %v1051, 4294901760
        %1053 = vmatpush.msra.mxu0 %v1052
        %v1054 = vand.u32 %v193, 4294901760
        %v1055 = vsub.f32 %v193, %v1054
        %v1056 = vand.u32 %v1055, 4294901760
        %1057 = vmatpush.msra.mxu0 %v1056
        %v1058 = vand.u32 %v192, 4294901760
        %v1059 = vsub.f32 %v192, %v1058
        %v1060 = vand.u32 %v1059, 4294901760
        %1061 = vmatpush.msra.mxu0 %v1060
        %v1062 = vand.u32 %v191, 4294901760
        %v1063 = vsub.f32 %v191, %v1062
        %v1064 = vand.u32 %v1063, 4294901760
        %1065 = vmatpush.msra.mxu0 %v1064
        %v1066 = vand.u32 %v190, 4294901760
        %v1067 = vsub.f32 %v190, %v1066
        %v1068 = vand.u32 %v1067, 4294901760
        %1069 = vmatpush.msra.mxu0 %v1068
        %v1070 = vand.u32 %v159, 4294901760
        %1071 = vmatmul.f32.gmra.mxu0 %v1070
        %v1072 = vpop.f32.mrf.mxu0
        %v1073 = vadd.f32 %v1004, %v1072
        %1074 = vdwg.mxu0
        %v1075 = vand.u32 %v205, 4294901760
        %1076 = vmatpush.msra.mxu0 %v1075
        %v1077 = vand.u32 %v204, 4294901760
        %1078 = vmatpush.msra.mxu0 %v1077
        %v1079 = vand.u32 %v203, 4294901760
        %1080 = vmatpush.msra.mxu0 %v1079
        %v1081 = vand.u32 %v202, 4294901760
        %1082 = vmatpush.msra.mxu0 %v1081
        %v1083 = vand.u32 %v201, 4294901760
        %1084 = vmatpush.msra.mxu0 %v1083
        %v1085 = vand.u32 %v200, 4294901760
        %1086 = vmatpush.msra.mxu0 %v1085
        %v1087 = vand.u32 %v199, 4294901760
        %1088 = vmatpush.msra.mxu0 %v1087
        %v1089 = vand.u32 %v198, 4294901760
        %1090 = vmatpush.msra.mxu0 %v1089
        %v1091 = vand.u32 %v197, 4294901760
        %1092 = vmatpush.msra.mxu0 %v1091
        %v1093 = vand.u32 %v196, 4294901760
        %1094 = vmatpush.msra.mxu0 %v1093
        %v1095 = vand.u32 %v195, 4294901760
        %1096 = vmatpush.msra.mxu0 %v1095
        %v1097 = vand.u32 %v194, 4294901760
        %1098 = vmatpush.msra.mxu0 %v1097
        %v1099 = vand.u32 %v193, 4294901760
        %1100 = vmatpush.msra.mxu0 %v1099
        %v1101 = vand.u32 %v192, 4294901760
        %1102 = vmatpush.msra.mxu0 %v1101
        %v1103 = vand.u32 %v191, 4294901760
        %1104 = vmatpush.msra.mxu0 %v1103
        %v1105 = vand.u32 %v190, 4294901760
        %1106 = vmatpush.msra.mxu0 %v1105
        %v1107 = vand.u32 %v159, 4294901760
        %1108 = vmatmul.f32.gmra.mxu0 %v1107
        %v1109 = vpop.f32.mrf.mxu0
        %v1110 = vadd.f32 %v1073, %v1109
        %1111 = vdwg.mxu0
        %v1112 = vand.u32 %v221, 4294901760
        %1113 = vmatpush.msra.mxu0 %v1112
        %v1114 = vand.u32 %v220, 4294901760
        %1115 = vmatpush.msra.mxu0 %v1114
        %v1116 = vand.u32 %v219, 4294901760
        %1117 = vmatpush.msra.mxu0 %v1116
        %v1118 = vand.u32 %v218, 4294901760
        %1119 = vmatpush.msra.mxu0 %v1118
        %v1120 = vand.u32 %v217, 4294901760
        %1121 = vmatpush.msra.mxu0 %v1120
        %v1122 = vand.u32 %v216, 4294901760
        %1123 = vmatpush.msra.mxu0 %v1122
        %v1124 = vand.u32 %v215, 4294901760
        %1125 = vmatpush.msra.mxu0 %v1124
        %v1126 = vand.u32 %v214, 4294901760
        %1127 = vmatpush.msra.mxu0 %v1126
        %v1128 = vand.u32 %v213, 4294901760
        %1129 = vmatpush.msra.mxu0 %v1128
        %v1130 = vand.u32 %v212, 4294901760
        %1131 = vmatpush.msra.mxu0 %v1130
        %v1132 = vand.u32 %v211, 4294901760
        %1133 = vmatpush.msra.mxu0 %v1132
        %v1134 = vand.u32 %v210, 4294901760
        %1135 = vmatpush.msra.mxu0 %v1134
        %v1136 = vand.u32 %v209, 4294901760
        %1137 = vmatpush.msra.mxu0 %v1136
        %v1138 = vand.u32 %v208, 4294901760
        %1139 = vmatpush.msra.mxu0 %v1138
        %v1140 = vand.u32 %v207, 4294901760
        %1141 = vmatpush.msra.mxu0 %v1140
        %v1142 = vand.u32 %v206, 4294901760
        %1143 = vmatpush.msra.mxu0 %v1142
        %v1144 = vand.u32 %v160, 4294901760
        %v1145 = vsub.f32 %v160, %v1144
        %v1146 = vand.u32 %v1145, 4294901760
        %v1147 = vsub.f32 %v1145, %v1146
        %v1148 = vand.u32 %v1147, 4294901760
        %1149 = vmatmul.f32.gmra.mxu0 %v1148
        %v1150 = vpop.f32.mrf.mxu0
        %v1151 = vadd.f32 %v1110, %v1150
        %1152 = vdwg.mxu0
        %v1153 = vand.u32 %v221, 4294901760
        %v1154 = vsub.f32 %v221, %v1153
        %v1155 = vand.u32 %v1154, 4294901760
        %v1156 = vsub.f32 %v1154, %v1155
        %v1157 = vand.u32 %v1156, 4294901760
        %1158 = vmatpush.msra.mxu0 %v1157
        %v1159 = vand.u32 %v220, 4294901760
        %v1160 = vsub.f32 %v220, %v1159
        %v1161 = vand.u32 %v1160, 4294901760
        %v1162 = vsub.f32 %v1160, %v1161
        %v1163 = vand.u32 %v1162, 4294901760
        %1164 = vmatpush.msra.mxu0 %v1163
        %v1165 = vand.u32 %v219, 4294901760
        %v1166 = vsub.f32 %v219, %v1165
        %v1167 = vand.u32 %v1166, 4294901760
        %v1168 = vsub.f32 %v1166, %v1167
        %v1169 = vand.u32 %v1168, 4294901760
        %1170 = vmatpush.msra.mxu0 %v1169
        %v1171 = vand.u32 %v218, 4294901760
        %v1172 = vsub.f32 %v218, %v1171
        %v1173 = vand.u32 %v1172, 4294901760
        %v1174 = vsub.f32 %v1172, %v1173
        %v1175 = vand.u32 %v1174, 4294901760
        %1176 = vmatpush.msra.mxu0 %v1175
        %v1177 = vand.u32 %v217, 4294901760
        %v1178 = vsub.f32 %v217, %v1177
        %v1179 = vand.u32 %v1178, 4294901760
        %v1180 = vsub.f32 %v1178, %v1179
        %v1181 = vand.u32 %v1180, 4294901760
        %1182 = vmatpush.msra.mxu0 %v1181
        %v1183 = vand.u32 %v216, 4294901760
        %v1184 = vsub.f32 %v216, %v1183
        %v1185 = vand.u32 %v1184, 4294901760
        %v1186 = vsub.f32 %v1184, %v1185
        %v1187 = vand.u32 %v1186, 4294901760
        %1188 = vmatpush.msra.mxu0 %v1187
        %v1189 = vand.u32 %v215, 4294901760
        %v1190 = vsub.f32 %v215, %v1189
        %v1191 = vand.u32 %v1190, 4294901760
        %v1192 = vsub.f32 %v1190, %v1191
        %v1193 = vand.u32 %v1192, 4294901760
        %1194 = vmatpush.msra.mxu0 %v1193
        %v1195 = vand.u32 %v214, 4294901760
        %v1196 = vsub.f32 %v214, %v1195
        %v1197 = vand.u32 %v1196, 4294901760
        %v1198 = vsub.f32 %v1196, %v1197
        %v1199 = vand.u32 %v1198, 4294901760
        %1200 = vmatpush.msra.mxu0 %v1199
        %v1201 = vand.u32 %v213, 4294901760
        %v1202 = vsub.f32 %v213, %v1201
        %v1203 = vand.u32 %v1202, 4294901760
        %v1204 = vsub.f32 %v1202, %v1203
        %v1205 = vand.u32 %v1204, 4294901760
        %1206 = vmatpush.msra.mxu0 %v1205
        %v1207 = vand.u32 %v212, 4294901760
        %v1208 = vsub.f32 %v212, %v1207
        %v1209 = vand.u32 %v1208, 4294901760
        %v1210 = vsub.f32 %v1208, %v1209
        %v1211 = vand.u32 %v1210, 4294901760
        %1212 = vmatpush.msra.mxu0 %v1211
        %v1213 = vand.u32 %v211, 4294901760
        %v1214 = vsub.f32 %v211, %v1213
        %v1215 = vand.u32 %v1214, 4294901760
        %v1216 = vsub.f32 %v1214, %v1215
        %v1217 = vand.u32 %v1216, 4294901760
        %1218 = vmatpush.msra.mxu0 %v1217
        %v1219 = vand.u32 %v210, 4294901760
        %v1220 = vsub.f32 %v210, %v1219
        %v1221 = vand.u32 %v1220, 4294901760
        %v1222 = vsub.f32 %v1220, %v1221
        %v1223 = vand.u32 %v1222, 4294901760
        %1224 = vmatpush.msra.mxu0 %v1223
        %v1225 = vand.u32 %v209, 4294901760
        %v1226 = vsub.f32 %v209, %v1225
        %v1227 = vand.u32 %v1226, 4294901760
        %v1228 = vsub.f32 %v1226, %v1227
        %v1229 = vand.u32 %v1228, 4294901760
        %1230 = vmatpush.msra.mxu0 %v1229
        %v1231 = vand.u32 %v208, 4294901760
        %v1232 = vsub.f32 %v208, %v1231
        %v1233 = vand.u32 %v1232, 4294901760
        %v1234 = vsub.f32 %v1232, %v1233
        %v1235 = vand.u32 %v1234, 4294901760
        %1236 = vmatpush.msra.mxu0 %v1235
        %v1237 = vand.u32 %v207, 4294901760
        %v1238 = vsub.f32 %v207, %v1237
        %v1239 = vand.u32 %v1238, 4294901760
        %v1240 = vsub.f32 %v1238, %v1239
        %v1241 = vand.u32 %v1240, 4294901760
        %1242 = vmatpush.msra.mxu0 %v1241
        %v1243 = vand.u32 %v206, 4294901760
        %v1244 = vsub.f32 %v206, %v1243
        %v1245 = vand.u32 %v1244, 4294901760
        %v1246 = vsub.f32 %v1244, %v1245
        %v1247 = vand.u32 %v1246, 4294901760
        %1248 = vmatpush.msra.mxu0 %v1247
        %v1249 = vand.u32 %v160, 4294901760
        %1250 = vmatmul.f32.gmra.mxu0 %v1249
        %v1251 = vpop.f32.mrf.mxu0
        %v1252 = vadd.f32 %v1151, %v1251
        %1253 = vdwg.mxu0
        %v1254 = vand.u32 %v221, 4294901760
        %v1255 = vsub.f32 %v221, %v1254
        %1256 = vmatpush.msra.mxu0 %v1255
        %v1257 = vand.u32 %v220, 4294901760
        %v1258 = vsub.f32 %v220, %v1257
        %1259 = vmatpush.msra.mxu0 %v1258
        %v1260 = vand.u32 %v219, 4294901760
        %v1261 = vsub.f32 %v219, %v1260
        %1262 = vmatpush.msra.mxu0 %v1261
        %v1263 = vand.u32 %v218, 4294901760
        %v1264 = vsub.f32 %v218, %v1263
        %1265 = vmatpush.msra.mxu0 %v1264
        %v1266 = vand.u32 %v217, 4294901760
        %v1267 = vsub.f32 %v217, %v1266
        %1268 = vmatpush.msra.mxu0 %v1267
        %v1269 = vand.u32 %v216, 4294901760
        %v1270 = vsub.f32 %v216, %v1269
        %1271 = vmatpush.msra.mxu0 %v1270
        %v1272 = vand.u32 %v215, 4294901760
        %v1273 = vsub.f32 %v215, %v1272
        %1274 = vmatpush.msra.mxu0 %v1273
        %v1275 = vand.u32 %v214, 4294901760
        %v1276 = vsub.f32 %v214, %v1275
        %1277 = vmatpush.msra.mxu0 %v1276
        %v1278 = vand.u32 %v213, 4294901760
        %v1279 = vsub.f32 %v213, %v1278
        %1280 = vmatpush.msra.mxu0 %v1279
        %v1281 = vand.u32 %v212, 4294901760
        %v1282 = vsub.f32 %v212, %v1281
        %1283 = vmatpush.msra.mxu0 %v1282
        %v1284 = vand.u32 %v211, 4294901760
        %v1285 = vsub.f32 %v211, %v1284
        %1286 = vmatpush.msra.mxu0 %v1285
        %v1287 = vand.u32 %v210, 4294901760
        %v1288 = vsub.f32 %v210, %v1287
        %1289 = vmatpush.msra.mxu0 %v1288
        %v1290 = vand.u32 %v209, 4294901760
        %v1291 = vsub.f32 %v209, %v1290
        %1292 = vmatpush.msra.mxu0 %v1291
        %v1293 = vand.u32 %v208, 4294901760
        %v1294 = vsub.f32 %v208, %v1293
        %1295 = vmatpush.msra.mxu0 %v1294
        %v1296 = vand.u32 %v207, 4294901760
        %v1297 = vsub.f32 %v207, %v1296
        %1298 = vmatpush.msra.mxu0 %v1297
        %v1299 = vand.u32 %v206, 4294901760
        %v1300 = vsub.f32 %v206, %v1299
        %1301 = vmatpush.msra.mxu0 %v1300
        %v1302 = vand.u32 %v160, 4294901760
        %v1303 = vsub.f32 %v160, %v1302
        %1304 = vmatmul.f32.gmra.mxu0 %v1303
        %v1305 = vpop.f32.mrf.mxu0
        %v1306 = vadd.f32 %v1252, %v1305
        %1307 = vdwg.mxu0
        %v1308 = vand.u32 %v221, 4294901760
        %1309 = vmatpush.msra.mxu0 %v1308
        %v1310 = vand.u32 %v220, 4294901760
        %1311 = vmatpush.msra.mxu0 %v1310
        %v1312 = vand.u32 %v219, 4294901760
        %1313 = vmatpush.msra.mxu0 %v1312
        %v1314 = vand.u32 %v218, 4294901760
        %1315 = vmatpush.msra.mxu0 %v1314
        %v1316 = vand.u32 %v217, 4294901760
        %1317 = vmatpush.msra.mxu0 %v1316
        %v1318 = vand.u32 %v216, 4294901760
        %1319 = vmatpush.msra.mxu0 %v1318
        %v1320 = vand.u32 %v215, 4294901760
        %1321 = vmatpush.msra.mxu0 %v1320
        %v1322 = vand.u32 %v214, 4294901760
        %1323 = vmatpush.msra.mxu0 %v1322
        %v1324 = vand.u32 %v213, 4294901760
        %1325 = vmatpush.msra.mxu0 %v1324
        %v1326 = vand.u32 %v212, 4294901760
        %1327 = vmatpush.msra.mxu0 %v1326
        %v1328 = vand.u32 %v211, 4294901760
        %1329 = vmatpush.msra.mxu0 %v1328
        %v1330 = vand.u32 %v210, 4294901760
        %1331 = vmatpush.msra.mxu0 %v1330
        %v1332 = vand.u32 %v209, 4294901760
        %1333 = vmatpush.msra.mxu0 %v1332
        %v1334 = vand.u32 %v208, 4294901760
        %1335 = vmatpush.msra.mxu0 %v1334
        %v1336 = vand.u32 %v207, 4294901760
        %1337 = vmatpush.msra.mxu0 %v1336
        %v1338 = vand.u32 %v206, 4294901760
        %1339 = vmatpush.msra.mxu0 %v1338
        %v1340 = vand.u32 %v160, 4294901760
        %v1341 = vsub.f32 %v160, %v1340
        %v1342 = vand.u32 %v1341, 4294901760
        %1343 = vmatmul.f32.gmra.mxu0 %v1342
        %v1344 = vpop.f32.mrf.mxu0
        %v1345 = vadd.f32 %v1306, %v1344
        %1346 = vdwg.mxu0
        %v1347 = vand.u32 %v221, 4294901760
        %v1348 = vsub.f32 %v221, %v1347
        %v1349 = vand.u32 %v1348, 4294901760
        %1350 = vmatpush.msra.mxu0 %v1349
        %v1351 = vand.u32 %v220, 4294901760
        %v1352 = vsub.f32 %v220, %v1351
        %v1353 = vand.u32 %v1352, 4294901760
        %1354 = vmatpush.msra.mxu0 %v1353
        %v1355 = vand.u32 %v219, 4294901760
        %v1356 = vsub.f32 %v219, %v1355
        %v1357 = vand.u32 %v1356, 4294901760
        %1358 = vmatpush.msra.mxu0 %v1357
        %v1359 = vand.u32 %v218, 4294901760
        %v1360 = vsub.f32 %v218, %v1359
        %v1361 = vand.u32 %v1360, 4294901760
        %1362 = vmatpush.msra.mxu0 %v1361
        %v1363 = vand.u32 %v217, 4294901760
        %v1364 = vsub.f32 %v217, %v1363
        %v1365 = vand.u32 %v1364, 4294901760
        %1366 = vmatpush.msra.mxu0 %v1365
        %v1367 = vand.u32 %v216, 4294901760
        %v1368 = vsub.f32 %v216, %v1367
        %v1369 = vand.u32 %v1368, 4294901760
        %1370 = vmatpush.msra.mxu0 %v1369
        %v1371 = vand.u32 %v215, 4294901760
        %v1372 = vsub.f32 %v215, %v1371
        %v1373 = vand.u32 %v1372, 4294901760
        %1374 = vmatpush.msra.mxu0 %v1373
        %v1375 = vand.u32 %v214, 4294901760
        %v1376 = vsub.f32 %v214, %v1375
        %v1377 = vand.u32 %v1376, 4294901760
        %1378 = vmatpush.msra.mxu0 %v1377
        %v1379 = vand.u32 %v213, 4294901760
        %v1380 = vsub.f32 %v213, %v1379
        %v1381 = vand.u32 %v1380, 4294901760
        %1382 = vmatpush.msra.mxu0 %v1381
        %v1383 = vand.u32 %v212, 4294901760
        %v1384 = vsub.f32 %v212, %v1383
        %v1385 = vand.u32 %v1384, 4294901760
        %1386 = vmatpush.msra.mxu0 %v1385
        %v1387 = vand.u32 %v211, 4294901760
        %v1388 = vsub.f32 %v211, %v1387
        %v1389 = vand.u32 %v1388, 4294901760
        %1390 = vmatpush.msra.mxu0 %v1389
        %v1391 = vand.u32 %v210, 4294901760
        %v1392 = vsub.f32 %v210, %v1391
        %v1393 = vand.u32 %v1392, 4294901760
        %1394 = vmatpush.msra.mxu0 %v1393
        %v1395 = vand.u32 %v209, 4294901760
        %v1396 = vsub.f32 %v209, %v1395
        %v1397 = vand.u32 %v1396, 4294901760
        %1398 = vmatpush.msra.mxu0 %v1397
        %v1399 = vand.u32 %v208, 4294901760
        %v1400 = vsub.f32 %v208, %v1399
        %v1401 = vand.u32 %v1400, 4294901760
        %1402 = vmatpush.msra.mxu0 %v1401
        %v1403 = vand.u32 %v207, 4294901760
        %v1404 = vsub.f32 %v207, %v1403
        %v1405 = vand.u32 %v1404, 4294901760
        %1406 = vmatpush.msra.mxu0 %v1405
        %v1407 = vand.u32 %v206, 4294901760
        %v1408 = vsub.f32 %v206, %v1407
        %v1409 = vand.u32 %v1408, 4294901760
        %1410 = vmatpush.msra.mxu0 %v1409
        %v1411 = vand.u32 %v160, 4294901760
        %1412 = vmatmul.f32.gmra.mxu0 %v1411
        %v1413 = vpop.f32.mrf.mxu0
        %v1414 = vadd.f32 %v1345, %v1413
        %1415 = vdwg.mxu0
        %v1416 = vand.u32 %v221, 4294901760
        %1417 = vmatpush.msra.mxu0 %v1416
        %v1418 = vand.u32 %v220, 4294901760
        %1419 = vmatpush.msra.mxu0 %v1418
        %v1420 = vand.u32 %v219, 4294901760
        %1421 = vmatpush.msra.mxu0 %v1420
        %v1422 = vand.u32 %v218, 4294901760
        %1423 = vmatpush.msra.mxu0 %v1422
        %v1424 = vand.u32 %v217, 4294901760
        %1425 = vmatpush.msra.mxu0 %v1424
        %v1426 = vand.u32 %v216, 4294901760
        %1427 = vmatpush.msra.mxu0 %v1426
        %v1428 = vand.u32 %v215, 4294901760
        %1429 = vmatpush.msra.mxu0 %v1428
        %v1430 = vand.u32 %v214, 4294901760
        %1431 = vmatpush.msra.mxu0 %v1430
        %v1432 = vand.u32 %v213, 4294901760
        %1433 = vmatpush.msra.mxu0 %v1432
        %v1434 = vand.u32 %v212, 4294901760
        %1435 = vmatpush.msra.mxu0 %v1434
        %v1436 = vand.u32 %v211, 4294901760
        %1437 = vmatpush.msra.mxu0 %v1436
        %v1438 = vand.u32 %v210, 4294901760
        %1439 = vmatpush.msra.mxu0 %v1438
        %v1440 = vand.u32 %v209, 4294901760
        %1441 = vmatpush.msra.mxu0 %v1440
        %v1442 = vand.u32 %v208, 4294901760
        %1443 = vmatpush.msra.mxu0 %v1442
        %v1444 = vand.u32 %v207, 4294901760
        %1445 = vmatpush.msra.mxu0 %v1444
        %v1446 = vand.u32 %v206, 4294901760
        %1447 = vmatpush.msra.mxu0 %v1446
        %v1448 = vand.u32 %v160, 4294901760
        %1449 = vmatmul.f32.gmra.mxu0 %v1448
        %v1450 = vpop.f32.mrf.mxu0
        %v1451 = vadd.f32 %v1414, %v1450
        %1452 = vdwg.mxu0
        %v1453 = vand.u32 %v237, 4294901760
        %1454 = vmatpush.msra.mxu0 %v1453
        %v1455 = vand.u32 %v236, 4294901760
        %1456 = vmatpush.msra.mxu0 %v1455
        %v1457 = vand.u32 %v235, 4294901760
        %1458 = vmatpush.msra.mxu0 %v1457
        %v1459 = vand.u32 %v234, 4294901760
        %1460 = vmatpush.msra.mxu0 %v1459
        %v1461 = vand.u32 %v233, 4294901760
        %1462 = vmatpush.msra.mxu0 %v1461
        %v1463 = vand.u32 %v232, 4294901760
        %1464 = vmatpush.msra.mxu0 %v1463
        %v1465 = vand.u32 %v231, 4294901760
        %1466 = vmatpush.msra.mxu0 %v1465
        %v1467 = vand.u32 %v230, 4294901760
        %1468 = vmatpush.msra.mxu0 %v1467
        %v1469 = vand.u32 %v229, 4294901760
        %1470 = vmatpush.msra.mxu0 %v1469
        %v1471 = vand.u32 %v228, 4294901760
        %1472 = vmatpush.msra.mxu0 %v1471
        %v1473 = vand.u32 %v227, 4294901760
        %1474 = vmatpush.msra.mxu0 %v1473
        %v1475 = vand.u32 %v226, 4294901760
        %1476 = vmatpush.msra.mxu0 %v1475
        %v1477 = vand.u32 %v225, 4294901760
        %1478 = vmatpush.msra.mxu0 %v1477
        %v1479 = vand.u32 %v224, 4294901760
        %1480 = vmatpush.msra.mxu0 %v1479
        %v1481 = vand.u32 %v223, 4294901760
        %1482 = vmatpush.msra.mxu0 %v1481
        %v1483 = vand.u32 %v222, 4294901760
        %1484 = vmatpush.msra.mxu0 %v1483
        %v1485 = vand.u32 %v161, 4294901760
        %v1486 = vsub.f32 %v161, %v1485
        %v1487 = vand.u32 %v1486, 4294901760
        %v1488 = vsub.f32 %v1486, %v1487
        %v1489 = vand.u32 %v1488, 4294901760
        %1490 = vmatmul.f32.gmra.mxu0 %v1489
        %v1491 = vpop.f32.mrf.mxu0
        %v1492 = vadd.f32 %v1451, %v1491
        %1493 = vdwg.mxu0
        %v1494 = vand.u32 %v237, 4294901760
        %v1495 = vsub.f32 %v237, %v1494
        %v1496 = vand.u32 %v1495, 4294901760
        %v1497 = vsub.f32 %v1495, %v1496
        %v1498 = vand.u32 %v1497, 4294901760
        %1499 = vmatpush.msra.mxu0 %v1498
        %v1500 = vand.u32 %v236, 4294901760
        %v1501 = vsub.f32 %v236, %v1500
        %v1502 = vand.u32 %v1501, 4294901760
        %v1503 = vsub.f32 %v1501, %v1502
        %v1504 = vand.u32 %v1503, 4294901760
        %1505 = vmatpush.msra.mxu0 %v1504
        %v1506 = vand.u32 %v235, 4294901760
        %v1507 = vsub.f32 %v235, %v1506
        %v1508 = vand.u32 %v1507, 4294901760
        %v1509 = vsub.f32 %v1507, %v1508
        %v1510 = vand.u32 %v1509, 4294901760
        %1511 = vmatpush.msra.mxu0 %v1510
        %v1512 = vand.u32 %v234, 4294901760
        %v1513 = vsub.f32 %v234, %v1512
        %v1514 = vand.u32 %v1513, 4294901760
        %v1515 = vsub.f32 %v1513, %v1514
        %v1516 = vand.u32 %v1515, 4294901760
        %1517 = vmatpush.msra.mxu0 %v1516
        %v1518 = vand.u32 %v233, 4294901760
        %v1519 = vsub.f32 %v233, %v1518
        %v1520 = vand.u32 %v1519, 4294901760
        %v1521 = vsub.f32 %v1519, %v1520
        %v1522 = vand.u32 %v1521, 4294901760
        %1523 = vmatpush.msra.mxu0 %v1522
        %v1524 = vand.u32 %v232, 4294901760
        %v1525 = vsub.f32 %v232, %v1524
        %v1526 = vand.u32 %v1525, 4294901760
        %v1527 = vsub.f32 %v1525, %v1526
        %v1528 = vand.u32 %v1527, 4294901760
        %1529 = vmatpush.msra.mxu0 %v1528
        %v1530 = vand.u32 %v231, 4294901760
        %v1531 = vsub.f32 %v231, %v1530
        %v1532 = vand.u32 %v1531, 4294901760
        %v1533 = vsub.f32 %v1531, %v1532
        %v1534 = vand.u32 %v1533, 4294901760
        %1535 = vmatpush.msra.mxu0 %v1534
        %v1536 = vand.u32 %v230, 4294901760
        %v1537 = vsub.f32 %v230, %v1536
        %v1538 = vand.u32 %v1537, 4294901760
        %v1539 = vsub.f32 %v1537, %v1538
        %v1540 = vand.u32 %v1539, 4294901760
        %1541 = vmatpush.msra.mxu0 %v1540
        %v1542 = vand.u32 %v229, 4294901760
        %v1543 = vsub.f32 %v229, %v1542
        %v1544 = vand.u32 %v1543, 4294901760
        %v1545 = vsub.f32 %v1543, %v1544
        %v1546 = vand.u32 %v1545, 4294901760
        %1547 = vmatpush.msra.mxu0 %v1546
        %v1548 = vand.u32 %v228, 4294901760
        %v1549 = vsub.f32 %v228, %v1548
        %v1550 = vand.u32 %v1549, 4294901760
        %v1551 = vsub.f32 %v1549, %v1550
        %v1552 = vand.u32 %v1551, 4294901760
        %1553 = vmatpush.msra.mxu0 %v1552
        %v1554 = vand.u32 %v227, 4294901760
        %v1555 = vsub.f32 %v227, %v1554
        %v1556 = vand.u32 %v1555, 4294901760
        %v1557 = vsub.f32 %v1555, %v1556
        %v1558 = vand.u32 %v1557, 4294901760
        %1559 = vmatpush.msra.mxu0 %v1558
        %v1560 = vand.u32 %v226, 4294901760
        %v1561 = vsub.f32 %v226, %v1560
        %v1562 = vand.u32 %v1561, 4294901760
        %v1563 = vsub.f32 %v1561, %v1562
        %v1564 = vand.u32 %v1563, 4294901760
        %1565 = vmatpush.msra.mxu0 %v1564
        %v1566 = vand.u32 %v225, 4294901760
        %v1567 = vsub.f32 %v225, %v1566
        %v1568 = vand.u32 %v1567, 4294901760
        %v1569 = vsub.f32 %v1567, %v1568
        %v1570 = vand.u32 %v1569, 4294901760
        %1571 = vmatpush.msra.mxu0 %v1570
        %v1572 = vand.u32 %v224, 4294901760
        %v1573 = vsub.f32 %v224, %v1572
        %v1574 = vand.u32 %v1573, 4294901760
        %v1575 = vsub.f32 %v1573, %v1574
        %v1576 = vand.u32 %v1575, 4294901760
        %1577 = vmatpush.msra.mxu0 %v1576
        %v1578 = vand.u32 %v223, 4294901760
        %v1579 = vsub.f32 %v223, %v1578
        %v1580 = vand.u32 %v1579, 4294901760
        %v1581 = vsub.f32 %v1579, %v1580
        %v1582 = vand.u32 %v1581, 4294901760
        %1583 = vmatpush.msra.mxu0 %v1582
        %v1584 = vand.u32 %v222, 4294901760
        %v1585 = vsub.f32 %v222, %v1584
        %v1586 = vand.u32 %v1585, 4294901760
        %v1587 = vsub.f32 %v1585, %v1586
        %v1588 = vand.u32 %v1587, 4294901760
        %1589 = vmatpush.msra.mxu0 %v1588
        %v1590 = vand.u32 %v161, 4294901760
        %1591 = vmatmul.f32.gmra.mxu0 %v1590
        %v1592 = vpop.f32.mrf.mxu0
        %v1593 = vadd.f32 %v1492, %v1592
        %1594 = vdwg.mxu0
        %v1595 = vand.u32 %v237, 4294901760
        %v1596 = vsub.f32 %v237, %v1595
        %1597 = vmatpush.msra.mxu0 %v1596
        %v1598 = vand.u32 %v236, 4294901760
        %v1599 = vsub.f32 %v236, %v1598
        %1600 = vmatpush.msra.mxu0 %v1599
        %v1601 = vand.u32 %v235, 4294901760
        %v1602 = vsub.f32 %v235, %v1601
        %1603 = vmatpush.msra.mxu0 %v1602
        %v1604 = vand.u32 %v234, 4294901760
        %v1605 = vsub.f32 %v234, %v1604
        %1606 = vmatpush.msra.mxu0 %v1605
        %v1607 = vand.u32 %v233, 4294901760
        %v1608 = vsub.f32 %v233, %v1607
        %1609 = vmatpush.msra.mxu0 %v1608
        %v1610 = vand.u32 %v232, 4294901760
        %v1611 = vsub.f32 %v232, %v1610
        %1612 = vmatpush.msra.mxu0 %v1611
        %v1613 = vand.u32 %v231, 4294901760
        %v1614 = vsub.f32 %v231, %v1613
        %1615 = vmatpush.msra.mxu0 %v1614
        %v1616 = vand.u32 %v230, 4294901760
        %v1617 = vsub.f32 %v230, %v1616
        %1618 = vmatpush.msra.mxu0 %v1617
        %v1619 = vand.u32 %v229, 4294901760
        %v1620 = vsub.f32 %v229, %v1619
        %1621 = vmatpush.msra.mxu0 %v1620
        %v1622 = vand.u32 %v228, 4294901760
        %v1623 = vsub.f32 %v228, %v1622
        %1624 = vmatpush.msra.mxu0 %v1623
        %v1625 = vand.u32 %v227, 4294901760
        %v1626 = vsub.f32 %v227, %v1625
        %1627 = vmatpush.msra.mxu0 %v1626
        %v1628 = vand.u32 %v226, 4294901760
        %v1629 = vsub.f32 %v226, %v1628
        %1630 = vmatpush.msra.mxu0 %v1629
        %v1631 = vand.u32 %v225, 4294901760
        %v1632 = vsub.f32 %v225, %v1631
        %1633 = vmatpush.msra.mxu0 %v1632
        %v1634 = vand.u32 %v224, 4294901760
        %v1635 = vsub.f32 %v224, %v1634
        %1636 = vmatpush.msra.mxu0 %v1635
        %v1637 = vand.u32 %v223, 4294901760
        %v1638 = vsub.f32 %v223, %v1637
        %1639 = vmatpush.msra.mxu0 %v1638
        %v1640 = vand.u32 %v222, 4294901760
        %v1641 = vsub.f32 %v222, %v1640
        %1642 = vmatpush.msra.mxu0 %v1641
        %v1643 = vand.u32 %v161, 4294901760
        %v1644 = vsub.f32 %v161, %v1643
        %1645 = vmatmul.f32.gmra.mxu0 %v1644
        %v1646 = vpop.f32.mrf.mxu0
        %v1647 = vadd.f32 %v1593, %v1646
        %1648 = vdwg.mxu0
        %v1649 = vand.u32 %v237, 4294901760
        %1650 = vmatpush.msra.mxu0 %v1649
        %v1651 = vand.u32 %v236, 4294901760
        %1652 = vmatpush.msra.mxu0 %v1651
        %v1653 = vand.u32 %v235, 4294901760
        %1654 = vmatpush.msra.mxu0 %v1653
        %v1655 = vand.u32 %v234, 4294901760
        %1656 = vmatpush.msra.mxu0 %v1655
        %v1657 = vand.u32 %v233, 4294901760
        %1658 = vmatpush.msra.mxu0 %v1657
        %v1659 = vand.u32 %v232, 4294901760
        %1660 = vmatpush.msra.mxu0 %v1659
        %v1661 = vand.u32 %v231, 4294901760
        %1662 = vmatpush.msra.mxu0 %v1661
        %v1663 = vand.u32 %v230, 4294901760
        %1664 = vmatpush.msra.mxu0 %v1663
        %v1665 = vand.u32 %v229, 4294901760
        %1666 = vmatpush.msra.mxu0 %v1665
        %v1667 = vand.u32 %v228, 4294901760
        %1668 = vmatpush.msra.mxu0 %v1667
        %v1669 = vand.u32 %v227, 4294901760
        %1670 = vmatpush.msra.mxu0 %v1669
        %v1671 = vand.u32 %v226, 4294901760
        %1672 = vmatpush.msra.mxu0 %v1671
        %v1673 = vand.u32 %v225, 4294901760
        %1674 = vmatpush.msra.mxu0 %v1673
        %v1675 = vand.u32 %v224, 4294901760
        %1676 = vmatpush.msra.mxu0 %v1675
        %v1677 = vand.u32 %v223, 4294901760
        %1678 = vmatpush.msra.mxu0 %v1677
        %v1679 = vand.u32 %v222, 4294901760
        %1680 = vmatpush.msra.mxu0 %v1679
        %v1681 = vand.u32 %v161, 4294901760
        %v1682 = vsub.f32 %v161, %v1681
        %v1683 = vand.u32 %v1682, 4294901760
        %1684 = vmatmul.f32.gmra.mxu0 %v1683
        %v1685 = vpop.f32.mrf.mxu0
        %v1686 = vadd.f32 %v1647, %v1685
        %1687 = vdwg.mxu0
        %v1688 = vand.u32 %v237, 4294901760
        %v1689 = vsub.f32 %v237, %v1688
        %v1690 = vand.u32 %v1689, 4294901760
        %1691 = vmatpush.msra.mxu0 %v1690
        %v1692 = vand.u32 %v236, 4294901760
        %v1693 = vsub.f32 %v236, %v1692
        %v1694 = vand.u32 %v1693, 4294901760
        %1695 = vmatpush.msra.mxu0 %v1694
        %v1696 = vand.u32 %v235, 4294901760
        %v1697 = vsub.f32 %v235, %v1696
        %v1698 = vand.u32 %v1697, 4294901760
        %1699 = vmatpush.msra.mxu0 %v1698
        %v1700 = vand.u32 %v234, 4294901760
        %v1701 = vsub.f32 %v234, %v1700
        %v1702 = vand.u32 %v1701, 4294901760
        %1703 = vmatpush.msra.mxu0 %v1702
        %v1704 = vand.u32 %v233, 4294901760
        %v1705 = vsub.f32 %v233, %v1704
        %v1706 = vand.u32 %v1705, 4294901760
        %1707 = vmatpush.msra.mxu0 %v1706
        %v1708 = vand.u32 %v232, 4294901760
        %v1709 = vsub.f32 %v232, %v1708
        %v1710 = vand.u32 %v1709, 4294901760
        %1711 = vmatpush.msra.mxu0 %v1710
        %v1712 = vand.u32 %v231, 4294901760
        %v1713 = vsub.f32 %v231, %v1712
        %v1714 = vand.u32 %v1713, 4294901760
        %1715 = vmatpush.msra.mxu0 %v1714
        %v1716 = vand.u32 %v230, 4294901760
        %v1717 = vsub.f32 %v230, %v1716
        %v1718 = vand.u32 %v1717, 4294901760
        %1719 = vmatpush.msra.mxu0 %v1718
        %v1720 = vand.u32 %v229, 4294901760
        %v1721 = vsub.f32 %v229, %v1720
        %v1722 = vand.u32 %v1721, 4294901760
        %1723 = vmatpush.msra.mxu0 %v1722
        %v1724 = vand.u32 %v228, 4294901760
        %v1725 = vsub.f32 %v228, %v1724
        %v1726 = vand.u32 %v1725, 4294901760
        %1727 = vmatpush.msra.mxu0 %v1726
        %v1728 = vand.u32 %v227, 4294901760
        %v1729 = vsub.f32 %v227, %v1728
        %v1730 = vand.u32 %v1729, 4294901760
        %1731 = vmatpush.msra.mxu0 %v1730
        %v1732 = vand.u32 %v226, 4294901760
        %v1733 = vsub.f32 %v226, %v1732
        %v1734 = vand.u32 %v1733, 4294901760
        %1735 = vmatpush.msra.mxu0 %v1734
        %v1736 = vand.u32 %v225, 4294901760
        %v1737 = vsub.f32 %v225, %v1736
        %v1738 = vand.u32 %v1737, 4294901760
        %1739 = vmatpush.msra.mxu0 %v1738
        %v1740 = vand.u32 %v224, 4294901760
        %v1741 = vsub.f32 %v224, %v1740
        %v1742 = vand.u32 %v1741, 4294901760
        %1743 = vmatpush.msra.mxu0 %v1742
        %v1744 = vand.u32 %v223, 4294901760
        %v1745 = vsub.f32 %v223, %v1744
        %v1746 = vand.u32 %v1745, 4294901760
        %1747 = vmatpush.msra.mxu0 %v1746
        %v1748 = vand.u32 %v222, 4294901760
        %v1749 = vsub.f32 %v222, %v1748
        %v1750 = vand.u32 %v1749, 4294901760
        %1751 = vmatpush.msra.mxu0 %v1750
        %v1752 = vand.u32 %v161, 4294901760
        %1753 = vmatmul.f32.gmra.mxu0 %v1752
        %v1754 = vpop.f32.mrf.mxu0
        %v1755 = vadd.f32 %v1686, %v1754
        %1756 = vdwg.mxu0
        %v1757 = vand.u32 %v237, 4294901760
        %1758 = vmatpush.msra.mxu0 %v1757
        %v1759 = vand.u32 %v236, 4294901760
        %1760 = vmatpush.msra.mxu0 %v1759
        %v1761 = vand.u32 %v235, 4294901760
        %1762 = vmatpush.msra.mxu0 %v1761
        %v1763 = vand.u32 %v234, 4294901760
        %1764 = vmatpush.msra.mxu0 %v1763
        %v1765 = vand.u32 %v233, 4294901760
        %1766 = vmatpush.msra.mxu0 %v1765
        %v1767 = vand.u32 %v232, 4294901760
        %1768 = vmatpush.msra.mxu0 %v1767
        %v1769 = vand.u32 %v231, 4294901760
        %1770 = vmatpush.msra.mxu0 %v1769
        %v1771 = vand.u32 %v230, 4294901760
        %1772 = vmatpush.msra.mxu0 %v1771
        %v1773 = vand.u32 %v229, 4294901760
        %1774 = vmatpush.msra.mxu0 %v1773
        %v1775 = vand.u32 %v228, 4294901760
        %1776 = vmatpush.msra.mxu0 %v1775
        %v1777 = vand.u32 %v227, 4294901760
        %1778 = vmatpush.msra.mxu0 %v1777
        %v1779 = vand.u32 %v226, 4294901760
        %1780 = vmatpush.msra.mxu0 %v1779
        %v1781 = vand.u32 %v225, 4294901760
        %1782 = vmatpush.msra.mxu0 %v1781
        %v1783 = vand.u32 %v224, 4294901760
        %1784 = vmatpush.msra.mxu0 %v1783
        %v1785 = vand.u32 %v223, 4294901760
        %1786 = vmatpush.msra.mxu0 %v1785
        %v1787 = vand.u32 %v222, 4294901760
        %1788 = vmatpush.msra.mxu0 %v1787
        %v1789 = vand.u32 %v161, 4294901760
        %1790 = vmatmul.f32.gmra.mxu0 %v1789
        %v1791 = vpop.f32.mrf.mxu0
        %v1792 = vadd.f32 %v1755, %v1791
        %1793 = vdwg.mxu0
        %v1794 = vand.u32 %v253, 4294901760
        %1795 = vmatpush.msra.mxu0 %v1794
        %v1796 = vand.u32 %v252, 4294901760
        %1797 = vmatpush.msra.mxu0 %v1796
        %v1798 = vand.u32 %v251, 4294901760
        %1799 = vmatpush.msra.mxu0 %v1798
        %v1800 = vand.u32 %v250, 4294901760
        %1801 = vmatpush.msra.mxu0 %v1800
        %v1802 = vand.u32 %v249, 4294901760
        %1803 = vmatpush.msra.mxu0 %v1802
        %v1804 = vand.u32 %v248, 4294901760
        %1805 = vmatpush.msra.mxu0 %v1804
        %v1806 = vand.u32 %v247, 4294901760
        %1807 = vmatpush.msra.mxu0 %v1806
        %v1808 = vand.u32 %v246, 4294901760
        %1809 = vmatpush.msra.mxu0 %v1808
        %v1810 = vand.u32 %v245, 4294901760
        %1811 = vmatpush.msra.mxu0 %v1810
        %v1812 = vand.u32 %v244, 4294901760
        %1813 = vmatpush.msra.mxu0 %v1812
        %v1814 = vand.u32 %v243, 4294901760
        %1815 = vmatpush.msra.mxu0 %v1814
        %v1816 = vand.u32 %v242, 4294901760
        %1817 = vmatpush.msra.mxu0 %v1816
        %v1818 = vand.u32 %v241, 4294901760
        %1819 = vmatpush.msra.mxu0 %v1818
        %v1820 = vand.u32 %v240, 4294901760
        %1821 = vmatpush.msra.mxu0 %v1820
        %v1822 = vand.u32 %v239, 4294901760
        %1823 = vmatpush.msra.mxu0 %v1822
        %v1824 = vand.u32 %v238, 4294901760
        %1825 = vmatpush.msra.mxu0 %v1824
        %v1826 = vand.u32 %v162, 4294901760
        %v1827 = vsub.f32 %v162, %v1826
        %v1828 = vand.u32 %v1827, 4294901760
        %v1829 = vsub.f32 %v1827, %v1828
        %v1830 = vand.u32 %v1829, 4294901760
        %1831 = vmatmul.f32.gmra.mxu0 %v1830
        %v1832 = vpop.f32.mrf.mxu0
        %v1833 = vadd.f32 %v1792, %v1832
        %1834 = vdwg.mxu0
        %v1835 = vand.u32 %v253, 4294901760
        %v1836 = vsub.f32 %v253, %v1835
        %v1837 = vand.u32 %v1836, 4294901760
        %v1838 = vsub.f32 %v1836, %v1837
        %v1839 = vand.u32 %v1838, 4294901760
        %1840 = vmatpush.msra.mxu0 %v1839
        %v1841 = vand.u32 %v252, 4294901760
        %v1842 = vsub.f32 %v252, %v1841
        %v1843 = vand.u32 %v1842, 4294901760
        %v1844 = vsub.f32 %v1842, %v1843
        %v1845 = vand.u32 %v1844, 4294901760
        %1846 = vmatpush.msra.mxu0 %v1845
        %v1847 = vand.u32 %v251, 4294901760
        %v1848 = vsub.f32 %v251, %v1847
        %v1849 = vand.u32 %v1848, 4294901760
        %v1850 = vsub.f32 %v1848, %v1849
        %v1851 = vand.u32 %v1850, 4294901760
        %1852 = vmatpush.msra.mxu0 %v1851
        %v1853 = vand.u32 %v250, 4294901760
        %v1854 = vsub.f32 %v250, %v1853
        %v1855 = vand.u32 %v1854, 4294901760
        %v1856 = vsub.f32 %v1854, %v1855
        %v1857 = vand.u32 %v1856, 4294901760
        %1858 = vmatpush.msra.mxu0 %v1857
        %v1859 = vand.u32 %v249, 4294901760
        %v1860 = vsub.f32 %v249, %v1859
        %v1861 = vand.u32 %v1860, 4294901760
        %v1862 = vsub.f32 %v1860, %v1861
        %v1863 = vand.u32 %v1862, 4294901760
        %1864 = vmatpush.msra.mxu0 %v1863
        %v1865 = vand.u32 %v248, 4294901760
        %v1866 = vsub.f32 %v248, %v1865
        %v1867 = vand.u32 %v1866, 4294901760
        %v1868 = vsub.f32 %v1866, %v1867
        %v1869 = vand.u32 %v1868, 4294901760
        %1870 = vmatpush.msra.mxu0 %v1869
        %v1871 = vand.u32 %v247, 4294901760
        %v1872 = vsub.f32 %v247, %v1871
        %v1873 = vand.u32 %v1872, 4294901760
        %v1874 = vsub.f32 %v1872, %v1873
        %v1875 = vand.u32 %v1874, 4294901760
        %1876 = vmatpush.msra.mxu0 %v1875
        %v1877 = vand.u32 %v246, 4294901760
        %v1878 = vsub.f32 %v246, %v1877
        %v1879 = vand.u32 %v1878, 4294901760
        %v1880 = vsub.f32 %v1878, %v1879
        %v1881 = vand.u32 %v1880, 4294901760
        %1882 = vmatpush.msra.mxu0 %v1881
        %v1883 = vand.u32 %v245, 4294901760
        %v1884 = vsub.f32 %v245, %v1883
        %v1885 = vand.u32 %v1884, 4294901760
        %v1886 = vsub.f32 %v1884, %v1885
        %v1887 = vand.u32 %v1886, 4294901760
        %1888 = vmatpush.msra.mxu0 %v1887
        %v1889 = vand.u32 %v244, 4294901760
        %v1890 = vsub.f32 %v244, %v1889
        %v1891 = vand.u32 %v1890, 4294901760
        %v1892 = vsub.f32 %v1890, %v1891
        %v1893 = vand.u32 %v1892, 4294901760
        %1894 = vmatpush.msra.mxu0 %v1893
        %v1895 = vand.u32 %v243, 4294901760
        %v1896 = vsub.f32 %v243, %v1895
        %v1897 = vand.u32 %v1896, 4294901760
        %v1898 = vsub.f32 %v1896, %v1897
        %v1899 = vand.u32 %v1898, 4294901760
        %1900 = vmatpush.msra.mxu0 %v1899
        %v1901 = vand.u32 %v242, 4294901760
        %v1902 = vsub.f32 %v242, %v1901
        %v1903 = vand.u32 %v1902, 4294901760
        %v1904 = vsub.f32 %v1902, %v1903
        %v1905 = vand.u32 %v1904, 4294901760
        %1906 = vmatpush.msra.mxu0 %v1905
        %v1907 = vand.u32 %v241, 4294901760
        %v1908 = vsub.f32 %v241, %v1907
        %v1909 = vand.u32 %v1908, 4294901760
        %v1910 = vsub.f32 %v1908, %v1909
        %v1911 = vand.u32 %v1910, 4294901760
        %1912 = vmatpush.msra.mxu0 %v1911
        %v1913 = vand.u32 %v240, 4294901760
        %v1914 = vsub.f32 %v240, %v1913
        %v1915 = vand.u32 %v1914, 4294901760
        %v1916 = vsub.f32 %v1914, %v1915
        %v1917 = vand.u32 %v1916, 4294901760
        %1918 = vmatpush.msra.mxu0 %v1917
        %v1919 = vand.u32 %v239, 4294901760
        %v1920 = vsub.f32 %v239, %v1919
        %v1921 = vand.u32 %v1920, 4294901760
        %v1922 = vsub.f32 %v1920, %v1921
        %v1923 = vand.u32 %v1922, 4294901760
        %1924 = vmatpush.msra.mxu0 %v1923
        %v1925 = vand.u32 %v238, 4294901760
        %v1926 = vsub.f32 %v238, %v1925
        %v1927 = vand.u32 %v1926, 4294901760
        %v1928 = vsub.f32 %v1926, %v1927
        %v1929 = vand.u32 %v1928, 4294901760
        %1930 = vmatpush.msra.mxu0 %v1929
        %v1931 = vand.u32 %v162, 4294901760
        %1932 = vmatmul.f32.gmra.mxu0 %v1931
        %v1933 = vpop.f32.mrf.mxu0
        %v1934 = vadd.f32 %v1833, %v1933
        %1935 = vdwg.mxu0
        %v1936 = vand.u32 %v253, 4294901760
        %v1937 = vsub.f32 %v253, %v1936
        %1938 = vmatpush.msra.mxu0 %v1937
        %v1939 = vand.u32 %v252, 4294901760
        %v1940 = vsub.f32 %v252, %v1939
        %1941 = vmatpush.msra.mxu0 %v1940
        %v1942 = vand.u32 %v251, 4294901760
        %v1943 = vsub.f32 %v251, %v1942
        %1944 = vmatpush.msra.mxu0 %v1943
        %v1945 = vand.u32 %v250, 4294901760
        %v1946 = vsub.f32 %v250, %v1945
        %1947 = vmatpush.msra.mxu0 %v1946
        %v1948 = vand.u32 %v249, 4294901760
        %v1949 = vsub.f32 %v249, %v1948
        %1950 = vmatpush.msra.mxu0 %v1949
        %v1951 = vand.u32 %v248, 4294901760
        %v1952 = vsub.f32 %v248, %v1951
        %1953 = vmatpush.msra.mxu0 %v1952
        %v1954 = vand.u32 %v247, 4294901760
        %v1955 = vsub.f32 %v247, %v1954
        %1956 = vmatpush.msra.mxu0 %v1955
        %v1957 = vand.u32 %v246, 4294901760
        %v1958 = vsub.f32 %v246, %v1957
        %1959 = vmatpush.msra.mxu0 %v1958
        %v1960 = vand.u32 %v245, 4294901760
        %v1961 = vsub.f32 %v245, %v1960
        %1962 = vmatpush.msra.mxu0 %v1961
        %v1963 = vand.u32 %v244, 4294901760
        %v1964 = vsub.f32 %v244, %v1963
        %1965 = vmatpush.msra.mxu0 %v1964
        %v1966 = vand.u32 %v243, 4294901760
        %v1967 = vsub.f32 %v243, %v1966
        %1968 = vmatpush.msra.mxu0 %v1967
        %v1969 = vand.u32 %v242, 4294901760
        %v1970 = vsub.f32 %v242, %v1969
        %1971 = vmatpush.msra.mxu0 %v1970
        %v1972 = vand.u32 %v241, 4294901760
        %v1973 = vsub.f32 %v241, %v1972
        %1974 = vmatpush.msra.mxu0 %v1973
        %v1975 = vand.u32 %v240, 4294901760
        %v1976 = vsub.f32 %v240, %v1975
        %1977 = vmatpush.msra.mxu0 %v1976
        %v1978 = vand.u32 %v239, 4294901760
        %v1979 = vsub.f32 %v239, %v1978
        %1980 = vmatpush.msra.mxu0 %v1979
        %v1981 = vand.u32 %v238, 4294901760
        %v1982 = vsub.f32 %v238, %v1981
        %1983 = vmatpush.msra.mxu0 %v1982
        %v1984 = vand.u32 %v162, 4294901760
        %v1985 = vsub.f32 %v162, %v1984
        %1986 = vmatmul.f32.gmra.mxu0 %v1985
        %v1987 = vpop.f32.mrf.mxu0
        %v1988 = vadd.f32 %v1934, %v1987
        %1989 = vdwg.mxu0
        %v1990 = vand.u32 %v253, 4294901760
        %1991 = vmatpush.msra.mxu0 %v1990
        %v1992 = vand.u32 %v252, 4294901760
        %1993 = vmatpush.msra.mxu0 %v1992
        %v1994 = vand.u32 %v251, 4294901760
        %1995 = vmatpush.msra.mxu0 %v1994
        %v1996 = vand.u32 %v250, 4294901760
        %1997 = vmatpush.msra.mxu0 %v1996
        %v1998 = vand.u32 %v249, 4294901760
        %1999 = vmatpush.msra.mxu0 %v1998
        %v2000 = vand.u32 %v248, 4294901760
        %2001 = vmatpush.msra.mxu0 %v2000
        %v2002 = vand.u32 %v247, 4294901760
        %2003 = vmatpush.msra.mxu0 %v2002
        %v2004 = vand.u32 %v246, 4294901760
        %2005 = vmatpush.msra.mxu0 %v2004
        %v2006 = vand.u32 %v245, 4294901760
        %2007 = vmatpush.msra.mxu0 %v2006
        %v2008 = vand.u32 %v244, 4294901760
        %2009 = vmatpush.msra.mxu0 %v2008
        %v2010 = vand.u32 %v243, 4294901760
        %2011 = vmatpush.msra.mxu0 %v2010
        %v2012 = vand.u32 %v242, 4294901760
        %2013 = vmatpush.msra.mxu0 %v2012
        %v2014 = vand.u32 %v241, 4294901760
        %2015 = vmatpush.msra.mxu0 %v2014
        %v2016 = vand.u32 %v240, 4294901760
        %2017 = vmatpush.msra.mxu0 %v2016
        %v2018 = vand.u32 %v239, 4294901760
        %2019 = vmatpush.msra.mxu0 %v2018
        %v2020 = vand.u32 %v238, 4294901760
        %2021 = vmatpush.msra.mxu0 %v2020
        %v2022 = vand.u32 %v162, 4294901760
        %v2023 = vsub.f32 %v162, %v2022
        %v2024 = vand.u32 %v2023, 4294901760
        %2025 = vmatmul.f32.gmra.mxu0 %v2024
        %v2026 = vpop.f32.mrf.mxu0
        %v2027 = vadd.f32 %v1988, %v2026
        %2028 = vdwg.mxu0
        %v2029 = vand.u32 %v253, 4294901760
        %v2030 = vsub.f32 %v253, %v2029
        %v2031 = vand.u32 %v2030, 4294901760
        %2032 = vmatpush.msra.mxu0 %v2031
        %v2033 = vand.u32 %v252, 4294901760
        %v2034 = vsub.f32 %v252, %v2033
        %v2035 = vand.u32 %v2034, 4294901760
        %2036 = vmatpush.msra.mxu0 %v2035
        %v2037 = vand.u32 %v251, 4294901760
        %v2038 = vsub.f32 %v251, %v2037
        %v2039 = vand.u32 %v2038, 4294901760
        %2040 = vmatpush.msra.mxu0 %v2039
        %v2041 = vand.u32 %v250, 4294901760
        %v2042 = vsub.f32 %v250, %v2041
        %v2043 = vand.u32 %v2042, 4294901760
        %2044 = vmatpush.msra.mxu0 %v2043
        %v2045 = vand.u32 %v249, 4294901760
        %v2046 = vsub.f32 %v249, %v2045
        %v2047 = vand.u32 %v2046, 4294901760
        %2048 = vmatpush.msra.mxu0 %v2047
        %v2049 = vand.u32 %v248, 4294901760
        %v2050 = vsub.f32 %v248, %v2049
        %v2051 = vand.u32 %v2050, 4294901760
        %2052 = vmatpush.msra.mxu0 %v2051
        %v2053 = vand.u32 %v247, 4294901760
        %v2054 = vsub.f32 %v247, %v2053
        %v2055 = vand.u32 %v2054, 4294901760
        %2056 = vmatpush.msra.mxu0 %v2055
        %v2057 = vand.u32 %v246, 4294901760
        %v2058 = vsub.f32 %v246, %v2057
        %v2059 = vand.u32 %v2058, 4294901760
        %2060 = vmatpush.msra.mxu0 %v2059
        %v2061 = vand.u32 %v245, 4294901760
        %v2062 = vsub.f32 %v245, %v2061
        %v2063 = vand.u32 %v2062, 4294901760
        %2064 = vmatpush.msra.mxu0 %v2063
        %v2065 = vand.u32 %v244, 4294901760
        %v2066 = vsub.f32 %v244, %v2065
        %v2067 = vand.u32 %v2066, 4294901760
        %2068 = vmatpush.msra.mxu0 %v2067
        %v2069 = vand.u32 %v243, 4294901760
        %v2070 = vsub.f32 %v243, %v2069
        %v2071 = vand.u32 %v2070, 4294901760
        %2072 = vmatpush.msra.mxu0 %v2071
        %v2073 = vand.u32 %v242, 4294901760
        %v2074 = vsub.f32 %v242, %v2073
        %v2075 = vand.u32 %v2074, 4294901760
        %2076 = vmatpush.msra.mxu0 %v2075
        %v2077 = vand.u32 %v241, 4294901760
        %v2078 = vsub.f32 %v241, %v2077
        %v2079 = vand.u32 %v2078, 4294901760
        %2080 = vmatpush.msra.mxu0 %v2079
        %v2081 = vand.u32 %v240, 4294901760
        %v2082 = vsub.f32 %v240, %v2081
        %v2083 = vand.u32 %v2082, 4294901760
        %2084 = vmatpush.msra.mxu0 %v2083
        %v2085 = vand.u32 %v239, 4294901760
        %v2086 = vsub.f32 %v239, %v2085
        %v2087 = vand.u32 %v2086, 4294901760
        %2088 = vmatpush.msra.mxu0 %v2087
        %v2089 = vand.u32 %v238, 4294901760
        %v2090 = vsub.f32 %v238, %v2089
        %v2091 = vand.u32 %v2090, 4294901760
        %2092 = vmatpush.msra.mxu0 %v2091
        %v2093 = vand.u32 %v162, 4294901760
        %2094 = vmatmul.f32.gmra.mxu0 %v2093
        %v2095 = vpop.f32.mrf.mxu0
        %v2096 = vadd.f32 %v2027, %v2095
        %2097 = vdwg.mxu0
        %v2098 = vand.u32 %v253, 4294901760
        %2099 = vmatpush.msra.mxu0 %v2098
        %v2100 = vand.u32 %v252, 4294901760
        %2101 = vmatpush.msra.mxu0 %v2100
        %v2102 = vand.u32 %v251, 4294901760
        %2103 = vmatpush.msra.mxu0 %v2102
        %v2104 = vand.u32 %v250, 4294901760
        %2105 = vmatpush.msra.mxu0 %v2104
        %v2106 = vand.u32 %v249, 4294901760
        %2107 = vmatpush.msra.mxu0 %v2106
        %v2108 = vand.u32 %v248, 4294901760
        %2109 = vmatpush.msra.mxu0 %v2108
        %v2110 = vand.u32 %v247, 4294901760
        %2111 = vmatpush.msra.mxu0 %v2110
        %v2112 = vand.u32 %v246, 4294901760
        %2113 = vmatpush.msra.mxu0 %v2112
        %v2114 = vand.u32 %v245, 4294901760
        %2115 = vmatpush.msra.mxu0 %v2114
        %v2116 = vand.u32 %v244, 4294901760
        %2117 = vmatpush.msra.mxu0 %v2116
        %v2118 = vand.u32 %v243, 4294901760
        %2119 = vmatpush.msra.mxu0 %v2118
        %v2120 = vand.u32 %v242, 4294901760
        %2121 = vmatpush.msra.mxu0 %v2120
        %v2122 = vand.u32 %v241, 4294901760
        %2123 = vmatpush.msra.mxu0 %v2122
        %v2124 = vand.u32 %v240, 4294901760
        %2125 = vmatpush.msra.mxu0 %v2124
        %v2126 = vand.u32 %v239, 4294901760
        %2127 = vmatpush.msra.mxu0 %v2126
        %v2128 = vand.u32 %v238, 4294901760
        %2129 = vmatpush.msra.mxu0 %v2128
        %v2130 = vand.u32 %v162, 4294901760
        %2131 = vmatmul.f32.gmra.mxu0 %v2130
        %v2132 = vpop.f32.mrf.mxu0
        %v2133 = vadd.f32 %v2096, %v2132
        %2134 = vdwg.mxu0
        %v2135 = vand.u32 %v269, 4294901760
        %2136 = vmatpush.msra.mxu0 %v2135
        %v2137 = vand.u32 %v268, 4294901760
        %2138 = vmatpush.msra.mxu0 %v2137
        %v2139 = vand.u32 %v267, 4294901760
        %2140 = vmatpush.msra.mxu0 %v2139
        %v2141 = vand.u32 %v266, 4294901760
        %2142 = vmatpush.msra.mxu0 %v2141
        %v2143 = vand.u32 %v265, 4294901760
        %2144 = vmatpush.msra.mxu0 %v2143
        %v2145 = vand.u32 %v264, 4294901760
        %2146 = vmatpush.msra.mxu0 %v2145
        %v2147 = vand.u32 %v263, 4294901760
        %2148 = vmatpush.msra.mxu0 %v2147
        %v2149 = vand.u32 %v262, 4294901760
        %2150 = vmatpush.msra.mxu0 %v2149
        %v2151 = vand.u32 %v261, 4294901760
        %2152 = vmatpush.msra.mxu0 %v2151
        %v2153 = vand.u32 %v260, 4294901760
        %2154 = vmatpush.msra.mxu0 %v2153
        %v2155 = vand.u32 %v259, 4294901760
        %2156 = vmatpush.msra.mxu0 %v2155
        %v2157 = vand.u32 %v258, 4294901760
        %2158 = vmatpush.msra.mxu0 %v2157
        %v2159 = vand.u32 %v257, 4294901760
        %2160 = vmatpush.msra.mxu0 %v2159
        %v2161 = vand.u32 %v256, 4294901760
        %2162 = vmatpush.msra.mxu0 %v2161
        %v2163 = vand.u32 %v255, 4294901760
        %2164 = vmatpush.msra.mxu0 %v2163
        %v2165 = vand.u32 %v254, 4294901760
        %2166 = vmatpush.msra.mxu0 %v2165
        %v2167 = vand.u32 %v163, 4294901760
        %v2168 = vsub.f32 %v163, %v2167
        %v2169 = vand.u32 %v2168, 4294901760
        %v2170 = vsub.f32 %v2168, %v2169
        %v2171 = vand.u32 %v2170, 4294901760
        %2172 = vmatmul.f32.gmra.mxu0 %v2171
        %v2173 = vpop.f32.mrf.mxu0
        %v2174 = vadd.f32 %v2133, %v2173
        %2175 = vdwg.mxu0
        %v2176 = vand.u32 %v269, 4294901760
        %v2177 = vsub.f32 %v269, %v2176
        %v2178 = vand.u32 %v2177, 4294901760
        %v2179 = vsub.f32 %v2177, %v2178
        %v2180 = vand.u32 %v2179, 4294901760
        %2181 = vmatpush.msra.mxu0 %v2180
        %v2182 = vand.u32 %v268, 4294901760
        %v2183 = vsub.f32 %v268, %v2182
        %v2184 = vand.u32 %v2183, 4294901760
        %v2185 = vsub.f32 %v2183, %v2184
        %v2186 = vand.u32 %v2185, 4294901760
        %2187 = vmatpush.msra.mxu0 %v2186
        %v2188 = vand.u32 %v267, 4294901760
        %v2189 = vsub.f32 %v267, %v2188
        %v2190 = vand.u32 %v2189, 4294901760
        %v2191 = vsub.f32 %v2189, %v2190
        %v2192 = vand.u32 %v2191, 4294901760
        %2193 = vmatpush.msra.mxu0 %v2192
        %v2194 = vand.u32 %v266, 4294901760
        %v2195 = vsub.f32 %v266, %v2194
        %v2196 = vand.u32 %v2195, 4294901760
        %v2197 = vsub.f32 %v2195, %v2196
        %v2198 = vand.u32 %v2197, 4294901760
        %2199 = vmatpush.msra.mxu0 %v2198
        %v2200 = vand.u32 %v265, 4294901760
        %v2201 = vsub.f32 %v265, %v2200
        %v2202 = vand.u32 %v2201, 4294901760
        %v2203 = vsub.f32 %v2201, %v2202
        %v2204 = vand.u32 %v2203, 4294901760
        %2205 = vmatpush.msra.mxu0 %v2204
        %v2206 = vand.u32 %v264, 4294901760
        %v2207 = vsub.f32 %v264, %v2206
        %v2208 = vand.u32 %v2207, 4294901760
        %v2209 = vsub.f32 %v2207, %v2208
        %v2210 = vand.u32 %v2209, 4294901760
        %2211 = vmatpush.msra.mxu0 %v2210
        %v2212 = vand.u32 %v263, 4294901760
        %v2213 = vsub.f32 %v263, %v2212
        %v2214 = vand.u32 %v2213, 4294901760
        %v2215 = vsub.f32 %v2213, %v2214
        %v2216 = vand.u32 %v2215, 4294901760
        %2217 = vmatpush.msra.mxu0 %v2216
        %v2218 = vand.u32 %v262, 4294901760
        %v2219 = vsub.f32 %v262, %v2218
        %v2220 = vand.u32 %v2219, 4294901760
        %v2221 = vsub.f32 %v2219, %v2220
        %v2222 = vand.u32 %v2221, 4294901760
        %2223 = vmatpush.msra.mxu0 %v2222
        %v2224 = vand.u32 %v261, 4294901760
        %v2225 = vsub.f32 %v261, %v2224
        %v2226 = vand.u32 %v2225, 4294901760
        %v2227 = vsub.f32 %v2225, %v2226
        %v2228 = vand.u32 %v2227, 4294901760
        %2229 = vmatpush.msra.mxu0 %v2228
        %v2230 = vand.u32 %v260, 4294901760
        %v2231 = vsub.f32 %v260, %v2230
        %v2232 = vand.u32 %v2231, 4294901760
        %v2233 = vsub.f32 %v2231, %v2232
        %v2234 = vand.u32 %v2233, 4294901760
        %2235 = vmatpush.msra.mxu0 %v2234
        %v2236 = vand.u32 %v259, 4294901760
        %v2237 = vsub.f32 %v259, %v2236
        %v2238 = vand.u32 %v2237, 4294901760
        %v2239 = vsub.f32 %v2237, %v2238
        %v2240 = vand.u32 %v2239, 4294901760
        %2241 = vmatpush.msra.mxu0 %v2240
        %v2242 = vand.u32 %v258, 4294901760
        %v2243 = vsub.f32 %v258, %v2242
        %v2244 = vand.u32 %v2243, 4294901760
        %v2245 = vsub.f32 %v2243, %v2244
        %v2246 = vand.u32 %v2245, 4294901760
        %2247 = vmatpush.msra.mxu0 %v2246
        %v2248 = vand.u32 %v257, 4294901760
        %v2249 = vsub.f32 %v257, %v2248
        %v2250 = vand.u32 %v2249, 4294901760
        %v2251 = vsub.f32 %v2249, %v2250
        %v2252 = vand.u32 %v2251, 4294901760
        %2253 = vmatpush.msra.mxu0 %v2252
        %v2254 = vand.u32 %v256, 4294901760
        %v2255 = vsub.f32 %v256, %v2254
        %v2256 = vand.u32 %v2255, 4294901760
        %v2257 = vsub.f32 %v2255, %v2256
        %v2258 = vand.u32 %v2257, 4294901760
        %2259 = vmatpush.msra.mxu0 %v2258
        %v2260 = vand.u32 %v255, 4294901760
        %v2261 = vsub.f32 %v255, %v2260
        %v2262 = vand.u32 %v2261, 4294901760
        %v2263 = vsub.f32 %v2261, %v2262
        %v2264 = vand.u32 %v2263, 4294901760
        %2265 = vmatpush.msra.mxu0 %v2264
        %v2266 = vand.u32 %v254, 4294901760
        %v2267 = vsub.f32 %v254, %v2266
        %v2268 = vand.u32 %v2267, 4294901760
        %v2269 = vsub.f32 %v2267, %v2268
        %v2270 = vand.u32 %v2269, 4294901760
        %2271 = vmatpush.msra.mxu0 %v2270
        %v2272 = vand.u32 %v163, 4294901760
        %2273 = vmatmul.f32.gmra.mxu0 %v2272
        %v2274 = vpop.f32.mrf.mxu0
        %v2275 = vadd.f32 %v2174, %v2274
        %2276 = vdwg.mxu0
        %v2277 = vand.u32 %v269, 4294901760
        %v2278 = vsub.f32 %v269, %v2277
        %2279 = vmatpush.msra.mxu0 %v2278
        %v2280 = vand.u32 %v268, 4294901760
        %v2281 = vsub.f32 %v268, %v2280
        %2282 = vmatpush.msra.mxu0 %v2281
        %v2283 = vand.u32 %v267, 4294901760
        %v2284 = vsub.f32 %v267, %v2283
        %2285 = vmatpush.msra.mxu0 %v2284
        %v2286 = vand.u32 %v266, 4294901760
        %v2287 = vsub.f32 %v266, %v2286
        %2288 = vmatpush.msra.mxu0 %v2287
        %v2289 = vand.u32 %v265, 4294901760
        %v2290 = vsub.f32 %v265, %v2289
        %2291 = vmatpush.msra.mxu0 %v2290
        %v2292 = vand.u32 %v264, 4294901760
        %v2293 = vsub.f32 %v264, %v2292
        %2294 = vmatpush.msra.mxu0 %v2293
        %v2295 = vand.u32 %v263, 4294901760
        %v2296 = vsub.f32 %v263, %v2295
        %2297 = vmatpush.msra.mxu0 %v2296
        %v2298 = vand.u32 %v262, 4294901760
        %v2299 = vsub.f32 %v262, %v2298
        %2300 = vmatpush.msra.mxu0 %v2299
        %v2301 = vand.u32 %v261, 4294901760
        %v2302 = vsub.f32 %v261, %v2301
        %2303 = vmatpush.msra.mxu0 %v2302
        %v2304 = vand.u32 %v260, 4294901760
        %v2305 = vsub.f32 %v260, %v2304
        %2306 = vmatpush.msra.mxu0 %v2305
        %v2307 = vand.u32 %v259, 4294901760
        %v2308 = vsub.f32 %v259, %v2307
        %2309 = vmatpush.msra.mxu0 %v2308
        %v2310 = vand.u32 %v258, 4294901760
        %v2311 = vsub.f32 %v258, %v2310
        %2312 = vmatpush.msra.mxu0 %v2311
        %v2313 = vand.u32 %v257, 4294901760
        %v2314 = vsub.f32 %v257, %v2313
        %2315 = vmatpush.msra.mxu0 %v2314
        %v2316 = vand.u32 %v256, 4294901760
        %v2317 = vsub.f32 %v256, %v2316
        %2318 = vmatpush.msra.mxu0 %v2317
        %v2319 = vand.u32 %v255, 4294901760
        %v2320 = vsub.f32 %v255, %v2319
        %2321 = vmatpush.msra.mxu0 %v2320
        %v2322 = vand.u32 %v254, 4294901760
        %v2323 = vsub.f32 %v254, %v2322
        %2324 = vmatpush.msra.mxu0 %v2323
        %v2325 = vand.u32 %v163, 4294901760
        %v2326 = vsub.f32 %v163, %v2325
        %2327 = vmatmul.f32.gmra.mxu0 %v2326
        %v2328 = vpop.f32.mrf.mxu0
        %v2329 = vadd.f32 %v2275, %v2328
        %2330 = vdwg.mxu0
        %v2331 = vand.u32 %v269, 4294901760
        %2332 = vmatpush.msra.mxu0 %v2331
        %v2333 = vand.u32 %v268, 4294901760
        %2334 = vmatpush.msra.mxu0 %v2333
        %v2335 = vand.u32 %v267, 4294901760
        %2336 = vmatpush.msra.mxu0 %v2335
        %v2337 = vand.u32 %v266, 4294901760
        %2338 = vmatpush.msra.mxu0 %v2337
        %v2339 = vand.u32 %v265, 4294901760
        %2340 = vmatpush.msra.mxu0 %v2339
        %v2341 = vand.u32 %v264, 4294901760
        %2342 = vmatpush.msra.mxu0 %v2341
        %v2343 = vand.u32 %v263, 4294901760
        %2344 = vmatpush.msra.mxu0 %v2343
        %v2345 = vand.u32 %v262, 4294901760
        %2346 = vmatpush.msra.mxu0 %v2345
        %v2347 = vand.u32 %v261, 4294901760
        %2348 = vmatpush.msra.mxu0 %v2347
        %v2349 = vand.u32 %v260, 4294901760
        %2350 = vmatpush.msra.mxu0 %v2349
        %v2351 = vand.u32 %v259, 4294901760
        %2352 = vmatpush.msra.mxu0 %v2351
        %v2353 = vand.u32 %v258, 4294901760
        %2354 = vmatpush.msra.mxu0 %v2353
        %v2355 = vand.u32 %v257, 4294901760
        %2356 = vmatpush.msra.mxu0 %v2355
        %v2357 = vand.u32 %v256, 4294901760
        %2358 = vmatpush.msra.mxu0 %v2357
        %v2359 = vand.u32 %v255, 4294901760
        %2360 = vmatpush.msra.mxu0 %v2359
        %v2361 = vand.u32 %v254, 4294901760
        %2362 = vmatpush.msra.mxu0 %v2361
        %v2363 = vand.u32 %v163, 4294901760
        %v2364 = vsub.f32 %v163, %v2363
        %v2365 = vand.u32 %v2364, 4294901760
        %2366 = vmatmul.f32.gmra.mxu0 %v2365
        %v2367 = vpop.f32.mrf.mxu0
        %v2368 = vadd.f32 %v2329, %v2367
        %2369 = vdwg.mxu0
        %v2370 = vand.u32 %v269, 4294901760
        %v2371 = vsub.f32 %v269, %v2370
        %v2372 = vand.u32 %v2371, 4294901760
        %2373 = vmatpush.msra.mxu0 %v2372
        %v2374 = vand.u32 %v268, 4294901760
        %v2375 = vsub.f32 %v268, %v2374
        %v2376 = vand.u32 %v2375, 4294901760
        %2377 = vmatpush.msra.mxu0 %v2376
        %v2378 = vand.u32 %v267, 4294901760
        %v2379 = vsub.f32 %v267, %v2378
        %v2380 = vand.u32 %v2379, 4294901760
        %2381 = vmatpush.msra.mxu0 %v2380
        %v2382 = vand.u32 %v266, 4294901760
        %v2383 = vsub.f32 %v266, %v2382
        %v2384 = vand.u32 %v2383, 4294901760
        %2385 = vmatpush.msra.mxu0 %v2384
        %v2386 = vand.u32 %v265, 4294901760
        %v2387 = vsub.f32 %v265, %v2386
        %v2388 = vand.u32 %v2387, 4294901760
        %2389 = vmatpush.msra.mxu0 %v2388
        %v2390 = vand.u32 %v264, 4294901760
        %v2391 = vsub.f32 %v264, %v2390
        %v2392 = vand.u32 %v2391, 4294901760
        %2393 = vmatpush.msra.mxu0 %v2392
        %v2394 = vand.u32 %v263, 4294901760
        %v2395 = vsub.f32 %v263, %v2394
        %v2396 = vand.u32 %v2395, 4294901760
        %2397 = vmatpush.msra.mxu0 %v2396
        %v2398 = vand.u32 %v262, 4294901760
        %v2399 = vsub.f32 %v262, %v2398
        %v2400 = vand.u32 %v2399, 4294901760
        %2401 = vmatpush.msra.mxu0 %v2400
        %v2402 = vand.u32 %v261, 4294901760
        %v2403 = vsub.f32 %v261, %v2402
        %v2404 = vand.u32 %v2403, 4294901760
        %2405 = vmatpush.msra.mxu0 %v2404
        %v2406 = vand.u32 %v260, 4294901760
        %v2407 = vsub.f32 %v260, %v2406
        %v2408 = vand.u32 %v2407, 4294901760
        %2409 = vmatpush.msra.mxu0 %v2408
        %v2410 = vand.u32 %v259, 4294901760
        %v2411 = vsub.f32 %v259, %v2410
        %v2412 = vand.u32 %v2411, 4294901760
        %2413 = vmatpush.msra.mxu0 %v2412
        %v2414 = vand.u32 %v258, 4294901760
        %v2415 = vsub.f32 %v258, %v2414
        %v2416 = vand.u32 %v2415, 4294901760
        %2417 = vmatpush.msra.mxu0 %v2416
        %v2418 = vand.u32 %v257, 4294901760
        %v2419 = vsub.f32 %v257, %v2418
        %v2420 = vand.u32 %v2419, 4294901760
        %2421 = vmatpush.msra.mxu0 %v2420
        %v2422 = vand.u32 %v256, 4294901760
        %v2423 = vsub.f32 %v256, %v2422
        %v2424 = vand.u32 %v2423, 4294901760
        %2425 = vmatpush.msra.mxu0 %v2424
        %v2426 = vand.u32 %v255, 4294901760
        %v2427 = vsub.f32 %v255, %v2426
        %v2428 = vand.u32 %v2427, 4294901760
        %2429 = vmatpush.msra.mxu0 %v2428
        %v2430 = vand.u32 %v254, 4294901760
        %v2431 = vsub.f32 %v254, %v2430
        %v2432 = vand.u32 %v2431, 4294901760
        %2433 = vmatpush.msra.mxu0 %v2432
        %v2434 = vand.u32 %v163, 4294901760
        %2435 = vmatmul.f32.gmra.mxu0 %v2434
        %v2436 = vpop.f32.mrf.mxu0
        %v2437 = vadd.f32 %v2368, %v2436
        %2438 = vdwg.mxu0
        %v2439 = vand.u32 %v269, 4294901760
        %2440 = vmatpush.msra.mxu0 %v2439
        %v2441 = vand.u32 %v268, 4294901760
        %2442 = vmatpush.msra.mxu0 %v2441
        %v2443 = vand.u32 %v267, 4294901760
        %2444 = vmatpush.msra.mxu0 %v2443
        %v2445 = vand.u32 %v266, 4294901760
        %2446 = vmatpush.msra.mxu0 %v2445
        %v2447 = vand.u32 %v265, 4294901760
        %2448 = vmatpush.msra.mxu0 %v2447
        %v2449 = vand.u32 %v264, 4294901760
        %2450 = vmatpush.msra.mxu0 %v2449
        %v2451 = vand.u32 %v263, 4294901760
        %2452 = vmatpush.msra.mxu0 %v2451
        %v2453 = vand.u32 %v262, 4294901760
        %2454 = vmatpush.msra.mxu0 %v2453
        %v2455 = vand.u32 %v261, 4294901760
        %2456 = vmatpush.msra.mxu0 %v2455
        %v2457 = vand.u32 %v260, 4294901760
        %2458 = vmatpush.msra.mxu0 %v2457
        %v2459 = vand.u32 %v259, 4294901760
        %2460 = vmatpush.msra.mxu0 %v2459
        %v2461 = vand.u32 %v258, 4294901760
        %2462 = vmatpush.msra.mxu0 %v2461
        %v2463 = vand.u32 %v257, 4294901760
        %2464 = vmatpush.msra.mxu0 %v2463
        %v2465 = vand.u32 %v256, 4294901760
        %2466 = vmatpush.msra.mxu0 %v2465
        %v2467 = vand.u32 %v255, 4294901760
        %2468 = vmatpush.msra.mxu0 %v2467
        %v2469 = vand.u32 %v254, 4294901760
        %2470 = vmatpush.msra.mxu0 %v2469
        %v2471 = vand.u32 %v163, 4294901760
        %2472 = vmatmul.f32.gmra.mxu0 %v2471
        %v2473 = vpop.f32.mrf.mxu0
        %v2474 = vadd.f32 %v2437, %v2473
        %2475 = vdwg.mxu0
        %v2476 = vand.u32 %v285, 4294901760
        %2477 = vmatpush.msra.mxu0 %v2476
        %v2478 = vand.u32 %v284, 4294901760
        %2479 = vmatpush.msra.mxu0 %v2478
        %v2480 = vand.u32 %v283, 4294901760
        %2481 = vmatpush.msra.mxu0 %v2480
        %v2482 = vand.u32 %v282, 4294901760
        %2483 = vmatpush.msra.mxu0 %v2482
        %v2484 = vand.u32 %v281, 4294901760
        %2485 = vmatpush.msra.mxu0 %v2484
        %v2486 = vand.u32 %v280, 4294901760
        %2487 = vmatpush.msra.mxu0 %v2486
        %v2488 = vand.u32 %v279, 4294901760
        %2489 = vmatpush.msra.mxu0 %v2488
        %v2490 = vand.u32 %v278, 4294901760
        %2491 = vmatpush.msra.mxu0 %v2490
        %v2492 = vand.u32 %v277, 4294901760
        %2493 = vmatpush.msra.mxu0 %v2492
        %v2494 = vand.u32 %v276, 4294901760
        %2495 = vmatpush.msra.mxu0 %v2494
        %v2496 = vand.u32 %v275, 4294901760
        %2497 = vmatpush.msra.mxu0 %v2496
        %v2498 = vand.u32 %v274, 4294901760
        %2499 = vmatpush.msra.mxu0 %v2498
        %v2500 = vand.u32 %v273, 4294901760
        %2501 = vmatpush.msra.mxu0 %v2500
        %v2502 = vand.u32 %v272, 4294901760
        %2503 = vmatpush.msra.mxu0 %v2502
        %v2504 = vand.u32 %v271, 4294901760
        %2505 = vmatpush.msra.mxu0 %v2504
        %v2506 = vand.u32 %v270, 4294901760
        %2507 = vmatpush.msra.mxu0 %v2506
        %v2508 = vand.u32 %v164, 4294901760
        %v2509 = vsub.f32 %v164, %v2508
        %v2510 = vand.u32 %v2509, 4294901760
        %v2511 = vsub.f32 %v2509, %v2510
        %v2512 = vand.u32 %v2511, 4294901760
        %2513 = vmatmul.f32.gmra.mxu0 %v2512
        %v2514 = vpop.f32.mrf.mxu0
        %v2515 = vadd.f32 %v2474, %v2514
        %2516 = vdwg.mxu0
        %v2517 = vand.u32 %v285, 4294901760
        %v2518 = vsub.f32 %v285, %v2517
        %v2519 = vand.u32 %v2518, 4294901760
        %v2520 = vsub.f32 %v2518, %v2519
        %v2521 = vand.u32 %v2520, 4294901760
        %2522 = vmatpush.msra.mxu0 %v2521
        %v2523 = vand.u32 %v284, 4294901760
        %v2524 = vsub.f32 %v284, %v2523
        %v2525 = vand.u32 %v2524, 4294901760
        %v2526 = vsub.f32 %v2524, %v2525
        %v2527 = vand.u32 %v2526, 4294901760
        %2528 = vmatpush.msra.mxu0 %v2527
        %v2529 = vand.u32 %v283, 4294901760
        %v2530 = vsub.f32 %v283, %v2529
        %v2531 = vand.u32 %v2530, 4294901760
        %v2532 = vsub.f32 %v2530, %v2531
        %v2533 = vand.u32 %v2532, 4294901760
        %2534 = vmatpush.msra.mxu0 %v2533
        %v2535 = vand.u32 %v282, 4294901760
        %v2536 = vsub.f32 %v282, %v2535
        %v2537 = vand.u32 %v2536, 4294901760
        %v2538 = vsub.f32 %v2536, %v2537
        %v2539 = vand.u32 %v2538, 4294901760
        %2540 = vmatpush.msra.mxu0 %v2539
        %v2541 = vand.u32 %v281, 4294901760
        %v2542 = vsub.f32 %v281, %v2541
        %v2543 = vand.u32 %v2542, 4294901760
        %v2544 = vsub.f32 %v2542, %v2543
        %v2545 = vand.u32 %v2544, 4294901760
        %2546 = vmatpush.msra.mxu0 %v2545
        %v2547 = vand.u32 %v280, 4294901760
        %v2548 = vsub.f32 %v280, %v2547
        %v2549 = vand.u32 %v2548, 4294901760
        %v2550 = vsub.f32 %v2548, %v2549
        %v2551 = vand.u32 %v2550, 4294901760
        %2552 = vmatpush.msra.mxu0 %v2551
        %v2553 = vand.u32 %v279, 4294901760
        %v2554 = vsub.f32 %v279, %v2553
        %v2555 = vand.u32 %v2554, 4294901760
        %v2556 = vsub.f32 %v2554, %v2555
        %v2557 = vand.u32 %v2556, 4294901760
        %2558 = vmatpush.msra.mxu0 %v2557
        %v2559 = vand.u32 %v278, 4294901760
        %v2560 = vsub.f32 %v278, %v2559
        %v2561 = vand.u32 %v2560, 4294901760
        %v2562 = vsub.f32 %v2560, %v2561
        %v2563 = vand.u32 %v2562, 4294901760
        %2564 = vmatpush.msra.mxu0 %v2563
        %v2565 = vand.u32 %v277, 4294901760
        %v2566 = vsub.f32 %v277, %v2565
        %v2567 = vand.u32 %v2566, 4294901760
        %v2568 = vsub.f32 %v2566, %v2567
        %v2569 = vand.u32 %v2568, 4294901760
        %2570 = vmatpush.msra.mxu0 %v2569
        %v2571 = vand.u32 %v276, 4294901760
        %v2572 = vsub.f32 %v276, %v2571
        %v2573 = vand.u32 %v2572, 4294901760
        %v2574 = vsub.f32 %v2572, %v2573
        %v2575 = vand.u32 %v2574, 4294901760
        %2576 = vmatpush.msra.mxu0 %v2575
        %v2577 = vand.u32 %v275, 4294901760
        %v2578 = vsub.f32 %v275, %v2577
        %v2579 = vand.u32 %v2578, 4294901760
        %v2580 = vsub.f32 %v2578, %v2579
        %v2581 = vand.u32 %v2580, 4294901760
        %2582 = vmatpush.msra.mxu0 %v2581
        %v2583 = vand.u32 %v274, 4294901760
        %v2584 = vsub.f32 %v274, %v2583
        %v2585 = vand.u32 %v2584, 4294901760
        %v2586 = vsub.f32 %v2584, %v2585
        %v2587 = vand.u32 %v2586, 4294901760
        %2588 = vmatpush.msra.mxu0 %v2587
        %v2589 = vand.u32 %v273, 4294901760
        %v2590 = vsub.f32 %v273, %v2589
        %v2591 = vand.u32 %v2590, 4294901760
        %v2592 = vsub.f32 %v2590, %v2591
        %v2593 = vand.u32 %v2592, 4294901760
        %2594 = vmatpush.msra.mxu0 %v2593
        %v2595 = vand.u32 %v272, 4294901760
        %v2596 = vsub.f32 %v272, %v2595
        %v2597 = vand.u32 %v2596, 4294901760
        %v2598 = vsub.f32 %v2596, %v2597
        %v2599 = vand.u32 %v2598, 4294901760
        %2600 = vmatpush.msra.mxu0 %v2599
        %v2601 = vand.u32 %v271, 4294901760
        %v2602 = vsub.f32 %v271, %v2601
        %v2603 = vand.u32 %v2602, 4294901760
        %v2604 = vsub.f32 %v2602, %v2603
        %v2605 = vand.u32 %v2604, 4294901760
        %2606 = vmatpush.msra.mxu0 %v2605
        %v2607 = vand.u32 %v270, 4294901760
        %v2608 = vsub.f32 %v270, %v2607
        %v2609 = vand.u32 %v2608, 4294901760
        %v2610 = vsub.f32 %v2608, %v2609
        %v2611 = vand.u32 %v2610, 4294901760
        %2612 = vmatpush.msra.mxu0 %v2611
        %v2613 = vand.u32 %v164, 4294901760
        %2614 = vmatmul.f32.gmra.mxu0 %v2613
        %v2615 = vpop.f32.mrf.mxu0
        %v2616 = vadd.f32 %v2515, %v2615
        %2617 = vdwg.mxu0
        %v2618 = vand.u32 %v285, 4294901760
        %v2619 = vsub.f32 %v285, %v2618
        %2620 = vmatpush.msra.mxu0 %v2619
        %v2621 = vand.u32 %v284, 4294901760
        %v2622 = vsub.f32 %v284, %v2621
        %2623 = vmatpush.msra.mxu0 %v2622
        %v2624 = vand.u32 %v283, 4294901760
        %v2625 = vsub.f32 %v283, %v2624
        %2626 = vmatpush.msra.mxu0 %v2625
        %v2627 = vand.u32 %v282, 4294901760
        %v2628 = vsub.f32 %v282, %v2627
        %2629 = vmatpush.msra.mxu0 %v2628
        %v2630 = vand.u32 %v281, 4294901760
        %v2631 = vsub.f32 %v281, %v2630
        %2632 = vmatpush.msra.mxu0 %v2631
        %v2633 = vand.u32 %v280, 4294901760
        %v2634 = vsub.f32 %v280, %v2633
        %2635 = vmatpush.msra.mxu0 %v2634
        %v2636 = vand.u32 %v279, 4294901760
        %v2637 = vsub.f32 %v279, %v2636
        %2638 = vmatpush.msra.mxu0 %v2637
        %v2639 = vand.u32 %v278, 4294901760
        %v2640 = vsub.f32 %v278, %v2639
        %2641 = vmatpush.msra.mxu0 %v2640
        %v2642 = vand.u32 %v277, 4294901760
        %v2643 = vsub.f32 %v277, %v2642
        %2644 = vmatpush.msra.mxu0 %v2643
        %v2645 = vand.u32 %v276, 4294901760
        %v2646 = vsub.f32 %v276, %v2645
        %2647 = vmatpush.msra.mxu0 %v2646
        %v2648 = vand.u32 %v275, 4294901760
        %v2649 = vsub.f32 %v275, %v2648
        %2650 = vmatpush.msra.mxu0 %v2649
        %v2651 = vand.u32 %v274, 4294901760
        %v2652 = vsub.f32 %v274, %v2651
        %2653 = vmatpush.msra.mxu0 %v2652
        %v2654 = vand.u32 %v273, 4294901760
        %v2655 = vsub.f32 %v273, %v2654
        %2656 = vmatpush.msra.mxu0 %v2655
        %v2657 = vand.u32 %v272, 4294901760
        %v2658 = vsub.f32 %v272, %v2657
        %2659 = vmatpush.msra.mxu0 %v2658
        %v2660 = vand.u32 %v271, 4294901760
        %v2661 = vsub.f32 %v271, %v2660
        %2662 = vmatpush.msra.mxu0 %v2661
        %v2663 = vand.u32 %v270, 4294901760
        %v2664 = vsub.f32 %v270, %v2663
        %2665 = vmatpush.msra.mxu0 %v2664
        %v2666 = vand.u32 %v164, 4294901760
        %v2667 = vsub.f32 %v164, %v2666
        %2668 = vmatmul.f32.gmra.mxu0 %v2667
        %v2669 = vpop.f32.mrf.mxu0
        %v2670 = vadd.f32 %v2616, %v2669
        %2671 = vdwg.mxu0
        %v2672 = vand.u32 %v285, 4294901760
        %2673 = vmatpush.msra.mxu0 %v2672
        %v2674 = vand.u32 %v284, 4294901760
        %2675 = vmatpush.msra.mxu0 %v2674
        %v2676 = vand.u32 %v283, 4294901760
        %2677 = vmatpush.msra.mxu0 %v2676
        %v2678 = vand.u32 %v282, 4294901760
        %2679 = vmatpush.msra.mxu0 %v2678
        %v2680 = vand.u32 %v281, 4294901760
        %2681 = vmatpush.msra.mxu0 %v2680
        %v2682 = vand.u32 %v280, 4294901760
        %2683 = vmatpush.msra.mxu0 %v2682
        %v2684 = vand.u32 %v279, 4294901760
        %2685 = vmatpush.msra.mxu0 %v2684
        %v2686 = vand.u32 %v278, 4294901760
        %2687 = vmatpush.msra.mxu0 %v2686
        %v2688 = vand.u32 %v277, 4294901760
        %2689 = vmatpush.msra.mxu0 %v2688
        %v2690 = vand.u32 %v276, 4294901760
        %2691 = vmatpush.msra.mxu0 %v2690
        %v2692 = vand.u32 %v275, 4294901760
        %2693 = vmatpush.msra.mxu0 %v2692
        %v2694 = vand.u32 %v274, 4294901760
        %2695 = vmatpush.msra.mxu0 %v2694
        %v2696 = vand.u32 %v273, 4294901760
        %2697 = vmatpush.msra.mxu0 %v2696
        %v2698 = vand.u32 %v272, 4294901760
        %2699 = vmatpush.msra.mxu0 %v2698
        %v2700 = vand.u32 %v271, 4294901760
        %2701 = vmatpush.msra.mxu0 %v2700
        %v2702 = vand.u32 %v270, 4294901760
        %2703 = vmatpush.msra.mxu0 %v2702
        %v2704 = vand.u32 %v164, 4294901760
        %v2705 = vsub.f32 %v164, %v2704
        %v2706 = vand.u32 %v2705, 4294901760
        %2707 = vmatmul.f32.gmra.mxu0 %v2706
        %v2708 = vpop.f32.mrf.mxu0
        %v2709 = vadd.f32 %v2670, %v2708
        %2710 = vdwg.mxu0
        %v2711 = vand.u32 %v285, 4294901760
        %v2712 = vsub.f32 %v285, %v2711
        %v2713 = vand.u32 %v2712, 4294901760
        %2714 = vmatpush.msra.mxu0 %v2713
        %v2715 = vand.u32 %v284, 4294901760
        %v2716 = vsub.f32 %v284, %v2715
        %v2717 = vand.u32 %v2716, 4294901760
        %2718 = vmatpush.msra.mxu0 %v2717
        %v2719 = vand.u32 %v283, 4294901760
        %v2720 = vsub.f32 %v283, %v2719
        %v2721 = vand.u32 %v2720, 4294901760
        %2722 = vmatpush.msra.mxu0 %v2721
        %v2723 = vand.u32 %v282, 4294901760
        %v2724 = vsub.f32 %v282, %v2723
        %v2725 = vand.u32 %v2724, 4294901760
        %2726 = vmatpush.msra.mxu0 %v2725
        %v2727 = vand.u32 %v281, 4294901760
        %v2728 = vsub.f32 %v281, %v2727
        %v2729 = vand.u32 %v2728, 4294901760
        %2730 = vmatpush.msra.mxu0 %v2729
        %v2731 = vand.u32 %v280, 4294901760
        %v2732 = vsub.f32 %v280, %v2731
        %v2733 = vand.u32 %v2732, 4294901760
        %2734 = vmatpush.msra.mxu0 %v2733
        %v2735 = vand.u32 %v279, 4294901760
        %v2736 = vsub.f32 %v279, %v2735
        %v2737 = vand.u32 %v2736, 4294901760
        %2738 = vmatpush.msra.mxu0 %v2737
        %v2739 = vand.u32 %v278, 4294901760
        %v2740 = vsub.f32 %v278, %v2739
        %v2741 = vand.u32 %v2740, 4294901760
        %2742 = vmatpush.msra.mxu0 %v2741
        %v2743 = vand.u32 %v277, 4294901760
        %v2744 = vsub.f32 %v277, %v2743
        %v2745 = vand.u32 %v2744, 4294901760
        %2746 = vmatpush.msra.mxu0 %v2745
        %v2747 = vand.u32 %v276, 4294901760
        %v2748 = vsub.f32 %v276, %v2747
        %v2749 = vand.u32 %v2748, 4294901760
        %2750 = vmatpush.msra.mxu0 %v2749
        %v2751 = vand.u32 %v275, 4294901760
        %v2752 = vsub.f32 %v275, %v2751
        %v2753 = vand.u32 %v2752, 4294901760
        %2754 = vmatpush.msra.mxu0 %v2753
        %v2755 = vand.u32 %v274, 4294901760
        %v2756 = vsub.f32 %v274, %v2755
        %v2757 = vand.u32 %v2756, 4294901760
        %2758 = vmatpush.msra.mxu0 %v2757
        %v2759 = vand.u32 %v273, 4294901760
        %v2760 = vsub.f32 %v273, %v2759
        %v2761 = vand.u32 %v2760, 4294901760
        %2762 = vmatpush.msra.mxu0 %v2761
        %v2763 = vand.u32 %v272, 4294901760
        %v2764 = vsub.f32 %v272, %v2763
        %v2765 = vand.u32 %v2764, 4294901760
        %2766 = vmatpush.msra.mxu0 %v2765
        %v2767 = vand.u32 %v271, 4294901760
        %v2768 = vsub.f32 %v271, %v2767
        %v2769 = vand.u32 %v2768, 4294901760
        %2770 = vmatpush.msra.mxu0 %v2769
        %v2771 = vand.u32 %v270, 4294901760
        %v2772 = vsub.f32 %v270, %v2771
        %v2773 = vand.u32 %v2772, 4294901760
        %2774 = vmatpush.msra.mxu0 %v2773
        %v2775 = vand.u32 %v164, 4294901760
        %2776 = vmatmul.f32.gmra.mxu0 %v2775
        %v2777 = vpop.f32.mrf.mxu0
        %v2778 = vadd.f32 %v2709, %v2777
        %2779 = vdwg.mxu0
        %v2780 = vand.u32 %v285, 4294901760
        %2781 = vmatpush.msra.mxu0 %v2780
        %v2782 = vand.u32 %v284, 4294901760
        %2783 = vmatpush.msra.mxu0 %v2782
        %v2784 = vand.u32 %v283, 4294901760
        %2785 = vmatpush.msra.mxu0 %v2784
        %v2786 = vand.u32 %v282, 4294901760
        %2787 = vmatpush.msra.mxu0 %v2786
        %v2788 = vand.u32 %v281, 4294901760
        %2789 = vmatpush.msra.mxu0 %v2788
        %v2790 = vand.u32 %v280, 4294901760
        %2791 = vmatpush.msra.mxu0 %v2790
        %v2792 = vand.u32 %v279, 4294901760
        %2793 = vmatpush.msra.mxu0 %v2792
        %v2794 = vand.u32 %v278, 4294901760
        %2795 = vmatpush.msra.mxu0 %v2794
        %v2796 = vand.u32 %v277, 4294901760
        %2797 = vmatpush.msra.mxu0 %v2796
        %v2798 = vand.u32 %v276, 4294901760
        %2799 = vmatpush.msra.mxu0 %v2798
        %v2800 = vand.u32 %v275, 4294901760
        %2801 = vmatpush.msra.mxu0 %v2800
        %v2802 = vand.u32 %v274, 4294901760
        %2803 = vmatpush.msra.mxu0 %v2802
        %v2804 = vand.u32 %v273, 4294901760
        %2805 = vmatpush.msra.mxu0 %v2804
        %v2806 = vand.u32 %v272, 4294901760
        %2807 = vmatpush.msra.mxu0 %v2806
        %v2808 = vand.u32 %v271, 4294901760
        %2809 = vmatpush.msra.mxu0 %v2808
        %v2810 = vand.u32 %v270, 4294901760
        %2811 = vmatpush.msra.mxu0 %v2810
        %v2812 = vand.u32 %v164, 4294901760
        %2813 = vmatmul.f32.gmra.mxu0 %v2812
        %v2814 = vpop.f32.mrf.mxu0
        %v2815 = vadd.f32 %v2778, %v2814
        %2816 = vdwg.mxu0
        %v2817 = vand.u32 %v301, 4294901760
        %2818 = vmatpush.msra.mxu0 %v2817
        %v2819 = vand.u32 %v300, 4294901760
        %2820 = vmatpush.msra.mxu0 %v2819
        %v2821 = vand.u32 %v299, 4294901760
        %2822 = vmatpush.msra.mxu0 %v2821
        %v2823 = vand.u32 %v298, 4294901760
        %2824 = vmatpush.msra.mxu0 %v2823
        %v2825 = vand.u32 %v297, 4294901760
        %2826 = vmatpush.msra.mxu0 %v2825
        %v2827 = vand.u32 %v296, 4294901760
        %2828 = vmatpush.msra.mxu0 %v2827
        %v2829 = vand.u32 %v295, 4294901760
        %2830 = vmatpush.msra.mxu0 %v2829
        %v2831 = vand.u32 %v294, 4294901760
        %2832 = vmatpush.msra.mxu0 %v2831
        %v2833 = vand.u32 %v293, 4294901760
        %2834 = vmatpush.msra.mxu0 %v2833
        %v2835 = vand.u32 %v292, 4294901760
        %2836 = vmatpush.msra.mxu0 %v2835
        %v2837 = vand.u32 %v291, 4294901760
        %2838 = vmatpush.msra.mxu0 %v2837
        %v2839 = vand.u32 %v290, 4294901760
        %2840 = vmatpush.msra.mxu0 %v2839
        %v2841 = vand.u32 %v289, 4294901760
        %2842 = vmatpush.msra.mxu0 %v2841
        %v2843 = vand.u32 %v288, 4294901760
        %2844 = vmatpush.msra.mxu0 %v2843
        %v2845 = vand.u32 %v287, 4294901760
        %2846 = vmatpush.msra.mxu0 %v2845
        %v2847 = vand.u32 %v286, 4294901760
        %2848 = vmatpush.msra.mxu0 %v2847
        %v2849 = vand.u32 %v165, 4294901760
        %v2850 = vsub.f32 %v165, %v2849
        %v2851 = vand.u32 %v2850, 4294901760
        %v2852 = vsub.f32 %v2850, %v2851
        %v2853 = vand.u32 %v2852, 4294901760
        %2854 = vmatmul.f32.gmra.mxu0 %v2853
        %v2855 = vpop.f32.mrf.mxu0
        %v2856 = vadd.f32 %v2815, %v2855
        %2857 = vdwg.mxu0
        %v2858 = vand.u32 %v301, 4294901760
        %v2859 = vsub.f32 %v301, %v2858
        %v2860 = vand.u32 %v2859, 4294901760
        %v2861 = vsub.f32 %v2859, %v2860
        %v2862 = vand.u32 %v2861, 4294901760
        %2863 = vmatpush.msra.mxu0 %v2862
        %v2864 = vand.u32 %v300, 4294901760
        %v2865 = vsub.f32 %v300, %v2864
        %v2866 = vand.u32 %v2865, 4294901760
        %v2867 = vsub.f32 %v2865, %v2866
        %v2868 = vand.u32 %v2867, 4294901760
        %2869 = vmatpush.msra.mxu0 %v2868
        %v2870 = vand.u32 %v299, 4294901760
        %v2871 = vsub.f32 %v299, %v2870
        %v2872 = vand.u32 %v2871, 4294901760
        %v2873 = vsub.f32 %v2871, %v2872
        %v2874 = vand.u32 %v2873, 4294901760
        %2875 = vmatpush.msra.mxu0 %v2874
        %v2876 = vand.u32 %v298, 4294901760
        %v2877 = vsub.f32 %v298, %v2876
        %v2878 = vand.u32 %v2877, 4294901760
        %v2879 = vsub.f32 %v2877, %v2878
        %v2880 = vand.u32 %v2879, 4294901760
        %2881 = vmatpush.msra.mxu0 %v2880
        %v2882 = vand.u32 %v297, 4294901760
        %v2883 = vsub.f32 %v297, %v2882
        %v2884 = vand.u32 %v2883, 4294901760
        %v2885 = vsub.f32 %v2883, %v2884
        %v2886 = vand.u32 %v2885, 4294901760
        %2887 = vmatpush.msra.mxu0 %v2886
        %v2888 = vand.u32 %v296, 4294901760
        %v2889 = vsub.f32 %v296, %v2888
        %v2890 = vand.u32 %v2889, 4294901760
        %v2891 = vsub.f32 %v2889, %v2890
        %v2892 = vand.u32 %v2891, 4294901760
        %2893 = vmatpush.msra.mxu0 %v2892
        %v2894 = vand.u32 %v295, 4294901760
        %v2895 = vsub.f32 %v295, %v2894
        %v2896 = vand.u32 %v2895, 4294901760
        %v2897 = vsub.f32 %v2895, %v2896
        %v2898 = vand.u32 %v2897, 4294901760
        %2899 = vmatpush.msra.mxu0 %v2898
        %v2900 = vand.u32 %v294, 4294901760
        %v2901 = vsub.f32 %v294, %v2900
        %v2902 = vand.u32 %v2901, 4294901760
        %v2903 = vsub.f32 %v2901, %v2902
        %v2904 = vand.u32 %v2903, 4294901760
        %2905 = vmatpush.msra.mxu0 %v2904
        %v2906 = vand.u32 %v293, 4294901760
        %v2907 = vsub.f32 %v293, %v2906
        %v2908 = vand.u32 %v2907, 4294901760
        %v2909 = vsub.f32 %v2907, %v2908
        %v2910 = vand.u32 %v2909, 4294901760
        %2911 = vmatpush.msra.mxu0 %v2910
        %v2912 = vand.u32 %v292, 4294901760
        %v2913 = vsub.f32 %v292, %v2912
        %v2914 = vand.u32 %v2913, 4294901760
        %v2915 = vsub.f32 %v2913, %v2914
        %v2916 = vand.u32 %v2915, 4294901760
        %2917 = vmatpush.msra.mxu0 %v2916
        %v2918 = vand.u32 %v291, 4294901760
        %v2919 = vsub.f32 %v291, %v2918
        %v2920 = vand.u32 %v2919, 4294901760
        %v2921 = vsub.f32 %v2919, %v2920
        %v2922 = vand.u32 %v2921, 4294901760
        %2923 = vmatpush.msra.mxu0 %v2922
        %v2924 = vand.u32 %v290, 4294901760
        %v2925 = vsub.f32 %v290, %v2924
        %v2926 = vand.u32 %v2925, 4294901760
        %v2927 = vsub.f32 %v2925, %v2926
        %v2928 = vand.u32 %v2927, 4294901760
        %2929 = vmatpush.msra.mxu0 %v2928
        %v2930 = vand.u32 %v289, 4294901760
        %v2931 = vsub.f32 %v289, %v2930
        %v2932 = vand.u32 %v2931, 4294901760
        %v2933 = vsub.f32 %v2931, %v2932
        %v2934 = vand.u32 %v2933, 4294901760
        %2935 = vmatpush.msra.mxu0 %v2934
        %v2936 = vand.u32 %v288, 4294901760
        %v2937 = vsub.f32 %v288, %v2936
        %v2938 = vand.u32 %v2937, 4294901760
        %v2939 = vsub.f32 %v2937, %v2938
        %v2940 = vand.u32 %v2939, 4294901760
        %2941 = vmatpush.msra.mxu0 %v2940
        %v2942 = vand.u32 %v287, 4294901760
        %v2943 = vsub.f32 %v287, %v2942
        %v2944 = vand.u32 %v2943, 4294901760
        %v2945 = vsub.f32 %v2943, %v2944
        %v2946 = vand.u32 %v2945, 4294901760
        %2947 = vmatpush.msra.mxu0 %v2946
        %v2948 = vand.u32 %v286, 4294901760
        %v2949 = vsub.f32 %v286, %v2948
        %v2950 = vand.u32 %v2949, 4294901760
        %v2951 = vsub.f32 %v2949, %v2950
        %v2952 = vand.u32 %v2951, 4294901760
        %2953 = vmatpush.msra.mxu0 %v2952
        %v2954 = vand.u32 %v165, 4294901760
        %2955 = vmatmul.f32.gmra.mxu0 %v2954
        %v2956 = vpop.f32.mrf.mxu0
        %v2957 = vadd.f32 %v2856, %v2956
        %2958 = vdwg.mxu0
        %v2959 = vand.u32 %v301, 4294901760
        %v2960 = vsub.f32 %v301, %v2959
        %2961 = vmatpush.msra.mxu0 %v2960
        %v2962 = vand.u32 %v300, 4294901760
        %v2963 = vsub.f32 %v300, %v2962
        %2964 = vmatpush.msra.mxu0 %v2963
        %v2965 = vand.u32 %v299, 4294901760
        %v2966 = vsub.f32 %v299, %v2965
        %2967 = vmatpush.msra.mxu0 %v2966
        %v2968 = vand.u32 %v298, 4294901760
        %v2969 = vsub.f32 %v298, %v2968
        %2970 = vmatpush.msra.mxu0 %v2969
        %v2971 = vand.u32 %v297, 4294901760
        %v2972 = vsub.f32 %v297, %v2971
        %2973 = vmatpush.msra.mxu0 %v2972
        %v2974 = vand.u32 %v296, 4294901760
        %v2975 = vsub.f32 %v296, %v2974
        %2976 = vmatpush.msra.mxu0 %v2975
        %v2977 = vand.u32 %v295, 4294901760
        %v2978 = vsub.f32 %v295, %v2977
        %2979 = vmatpush.msra.mxu0 %v2978
        %v2980 = vand.u32 %v294, 4294901760
        %v2981 = vsub.f32 %v294, %v2980
        %2982 = vmatpush.msra.mxu0 %v2981
        %v2983 = vand.u32 %v293, 4294901760
        %v2984 = vsub.f32 %v293, %v2983
        %2985 = vmatpush.msra.mxu0 %v2984
        %v2986 = vand.u32 %v292, 4294901760
        %v2987 = vsub.f32 %v292, %v2986
        %2988 = vmatpush.msra.mxu0 %v2987
        %v2989 = vand.u32 %v291, 4294901760
        %v2990 = vsub.f32 %v291, %v2989
        %2991 = vmatpush.msra.mxu0 %v2990
        %v2992 = vand.u32 %v290, 4294901760
        %v2993 = vsub.f32 %v290, %v2992
        %2994 = vmatpush.msra.mxu0 %v2993
        %v2995 = vand.u32 %v289, 4294901760
        %v2996 = vsub.f32 %v289, %v2995
        %2997 = vmatpush.msra.mxu0 %v2996
        %v2998 = vand.u32 %v288, 4294901760
        %v2999 = vsub.f32 %v288, %v2998
        %3000 = vmatpush.msra.mxu0 %v2999
        %v3001 = vand.u32 %v287, 4294901760
        %v3002 = vsub.f32 %v287, %v3001
        %3003 = vmatpush.msra.mxu0 %v3002
        %v3004 = vand.u32 %v286, 4294901760
        %v3005 = vsub.f32 %v286, %v3004
        %3006 = vmatpush.msra.mxu0 %v3005
        %v3007 = vand.u32 %v165, 4294901760
        %v3008 = vsub.f32 %v165, %v3007
        %3009 = vmatmul.f32.gmra.mxu0 %v3008
        %v3010 = vpop.f32.mrf.mxu0
        %v3011 = vadd.f32 %v2957, %v3010
        %3012 = vdwg.mxu0
        %v3013 = vand.u32 %v301, 4294901760
        %3014 = vmatpush.msra.mxu0 %v3013
        %v3015 = vand.u32 %v300, 4294901760
        %3016 = vmatpush.msra.mxu0 %v3015
        %v3017 = vand.u32 %v299, 4294901760
        %3018 = vmatpush.msra.mxu0 %v3017
        %v3019 = vand.u32 %v298, 4294901760
        %3020 = vmatpush.msra.mxu0 %v3019
        %v3021 = vand.u32 %v297, 4294901760
        %3022 = vmatpush.msra.mxu0 %v3021
        %v3023 = vand.u32 %v296, 4294901760
        %3024 = vmatpush.msra.mxu0 %v3023
        %v3025 = vand.u32 %v295, 4294901760
        %3026 = vmatpush.msra.mxu0 %v3025
        %v3027 = vand.u32 %v294, 4294901760
        %3028 = vmatpush.msra.mxu0 %v3027
        %v3029 = vand.u32 %v293, 4294901760
        %3030 = vmatpush.msra.mxu0 %v3029
        %v3031 = vand.u32 %v292, 4294901760
        %3032 = vmatpush.msra.mxu0 %v3031
        %v3033 = vand.u32 %v291, 4294901760
        %3034 = vmatpush.msra.mxu0 %v3033
        %v3035 = vand.u32 %v290, 4294901760
        %3036 = vmatpush.msra.mxu0 %v3035
        %v3037 = vand.u32 %v289, 4294901760
        %3038 = vmatpush.msra.mxu0 %v3037
        %v3039 = vand.u32 %v288, 4294901760
        %3040 = vmatpush.msra.mxu0 %v3039
        %v3041 = vand.u32 %v287, 4294901760
        %3042 = vmatpush.msra.mxu0 %v3041
        %v3043 = vand.u32 %v286, 4294901760
        %3044 = vmatpush.msra.mxu0 %v3043
        %v3045 = vand.u32 %v165, 4294901760
        %v3046 = vsub.f32 %v165, %v3045
        %v3047 = vand.u32 %v3046, 4294901760
        %3048 = vmatmul.f32.gmra.mxu0 %v3047
        %v3049 = vpop.f32.mrf.mxu0
        %v3050 = vadd.f32 %v3011, %v3049
        %3051 = vdwg.mxu0
        %v3052 = vand.u32 %v301, 4294901760
        %v3053 = vsub.f32 %v301, %v3052
        %v3054 = vand.u32 %v3053, 4294901760
        %3055 = vmatpush.msra.mxu0 %v3054
        %v3056 = vand.u32 %v300, 4294901760
        %v3057 = vsub.f32 %v300, %v3056
        %v3058 = vand.u32 %v3057, 4294901760
        %3059 = vmatpush.msra.mxu0 %v3058
        %v3060 = vand.u32 %v299, 4294901760
        %v3061 = vsub.f32 %v299, %v3060
        %v3062 = vand.u32 %v3061, 4294901760
        %3063 = vmatpush.msra.mxu0 %v3062
        %v3064 = vand.u32 %v298, 4294901760
        %v3065 = vsub.f32 %v298, %v3064
        %v3066 = vand.u32 %v3065, 4294901760
        %3067 = vmatpush.msra.mxu0 %v3066
        %v3068 = vand.u32 %v297, 4294901760
        %v3069 = vsub.f32 %v297, %v3068
        %v3070 = vand.u32 %v3069, 4294901760
        %3071 = vmatpush.msra.mxu0 %v3070
        %v3072 = vand.u32 %v296, 4294901760
        %v3073 = vsub.f32 %v296, %v3072
        %v3074 = vand.u32 %v3073, 4294901760
        %3075 = vmatpush.msra.mxu0 %v3074
        %v3076 = vand.u32 %v295, 4294901760
        %v3077 = vsub.f32 %v295, %v3076
        %v3078 = vand.u32 %v3077, 4294901760
        %3079 = vmatpush.msra.mxu0 %v3078
        %v3080 = vand.u32 %v294, 4294901760
        %v3081 = vsub.f32 %v294, %v3080
        %v3082 = vand.u32 %v3081, 4294901760
        %3083 = vmatpush.msra.mxu0 %v3082
        %v3084 = vand.u32 %v293, 4294901760
        %v3085 = vsub.f32 %v293, %v3084
        %v3086 = vand.u32 %v3085, 4294901760
        %3087 = vmatpush.msra.mxu0 %v3086
        %v3088 = vand.u32 %v292, 4294901760
        %v3089 = vsub.f32 %v292, %v3088
        %v3090 = vand.u32 %v3089, 4294901760
        %3091 = vmatpush.msra.mxu0 %v3090
        %v3092 = vand.u32 %v291, 4294901760
        %v3093 = vsub.f32 %v291, %v3092
        %v3094 = vand.u32 %v3093, 4294901760
        %3095 = vmatpush.msra.mxu0 %v3094
        %v3096 = vand.u32 %v290, 4294901760
        %v3097 = vsub.f32 %v290, %v3096
        %v3098 = vand.u32 %v3097, 4294901760
        %3099 = vmatpush.msra.mxu0 %v3098
        %v3100 = vand.u32 %v289, 4294901760
        %v3101 = vsub.f32 %v289, %v3100
        %v3102 = vand.u32 %v3101, 4294901760
        %3103 = vmatpush.msra.mxu0 %v3102
        %v3104 = vand.u32 %v288, 4294901760
        %v3105 = vsub.f32 %v288, %v3104
        %v3106 = vand.u32 %v3105, 4294901760
        %3107 = vmatpush.msra.mxu0 %v3106
        %v3108 = vand.u32 %v287, 4294901760
        %v3109 = vsub.f32 %v287, %v3108
        %v3110 = vand.u32 %v3109, 4294901760
        %3111 = vmatpush.msra.mxu0 %v3110
        %v3112 = vand.u32 %v286, 4294901760
        %v3113 = vsub.f32 %v286, %v3112
        %v3114 = vand.u32 %v3113, 4294901760
        %3115 = vmatpush.msra.mxu0 %v3114
        %v3116 = vand.u32 %v165, 4294901760
        %3117 = vmatmul.f32.gmra.mxu0 %v3116
        %v3118 = vpop.f32.mrf.mxu0
        %v3119 = vadd.f32 %v3050, %v3118
        %3120 = vdwg.mxu0
        %v3121 = vand.u32 %v301, 4294901760
        %3122 = vmatpush.msra.mxu0 %v3121
        %v3123 = vand.u32 %v300, 4294901760
        %3124 = vmatpush.msra.mxu0 %v3123
        %v3125 = vand.u32 %v299, 4294901760
        %3126 = vmatpush.msra.mxu0 %v3125
        %v3127 = vand.u32 %v298, 4294901760
        %3128 = vmatpush.msra.mxu0 %v3127
        %v3129 = vand.u32 %v297, 4294901760
        %3130 = vmatpush.msra.mxu0 %v3129
        %v3131 = vand.u32 %v296, 4294901760
        %3132 = vmatpush.msra.mxu0 %v3131
        %v3133 = vand.u32 %v295, 4294901760
        %3134 = vmatpush.msra.mxu0 %v3133
        %v3135 = vand.u32 %v294, 4294901760
        %3136 = vmatpush.msra.mxu0 %v3135
        %v3137 = vand.u32 %v293, 4294901760
        %3138 = vmatpush.msra.mxu0 %v3137
        %v3139 = vand.u32 %v292, 4294901760
        %3140 = vmatpush.msra.mxu0 %v3139
        %v3141 = vand.u32 %v291, 4294901760
        %3142 = vmatpush.msra.mxu0 %v3141
        %v3143 = vand.u32 %v290, 4294901760
        %3144 = vmatpush.msra.mxu0 %v3143
        %v3145 = vand.u32 %v289, 4294901760
        %3146 = vmatpush.msra.mxu0 %v3145
        %v3147 = vand.u32 %v288, 4294901760
        %3148 = vmatpush.msra.mxu0 %v3147
        %v3149 = vand.u32 %v287, 4294901760
        %3150 = vmatpush.msra.mxu0 %v3149
        %v3151 = vand.u32 %v286, 4294901760
        %3152 = vmatpush.msra.mxu0 %v3151
        %v3153 = vand.u32 %v165, 4294901760
        %3154 = vmatmul.f32.gmra.mxu0 %v3153
        %v3155 = vpop.f32.mrf.mxu0
        %v3156 = vadd.f32 %v3119, %v3155
        %3157 = vdwg.mxu0
        %v3158 = vand.u32 %v317, 4294901760
        %3159 = vmatpush.msra.mxu0 %v3158
        %v3160 = vand.u32 %v316, 4294901760
        %3161 = vmatpush.msra.mxu0 %v3160
        %v3162 = vand.u32 %v315, 4294901760
        %3163 = vmatpush.msra.mxu0 %v3162
        %v3164 = vand.u32 %v314, 4294901760
        %3165 = vmatpush.msra.mxu0 %v3164
        %v3166 = vand.u32 %v313, 4294901760
        %3167 = vmatpush.msra.mxu0 %v3166
        %v3168 = vand.u32 %v312, 4294901760
        %3169 = vmatpush.msra.mxu0 %v3168
        %v3170 = vand.u32 %v311, 4294901760
        %3171 = vmatpush.msra.mxu0 %v3170
        %v3172 = vand.u32 %v310, 4294901760
        %3173 = vmatpush.msra.mxu0 %v3172
        %v3174 = vand.u32 %v309, 4294901760
        %3175 = vmatpush.msra.mxu0 %v3174
        %v3176 = vand.u32 %v308, 4294901760
        %3177 = vmatpush.msra.mxu0 %v3176
        %v3178 = vand.u32 %v307, 4294901760
        %3179 = vmatpush.msra.mxu0 %v3178
        %v3180 = vand.u32 %v306, 4294901760
        %3181 = vmatpush.msra.mxu0 %v3180
        %v3182 = vand.u32 %v305, 4294901760
        %3183 = vmatpush.msra.mxu0 %v3182
        %v3184 = vand.u32 %v304, 4294901760
        %3185 = vmatpush.msra.mxu0 %v3184
        %v3186 = vand.u32 %v303, 4294901760
        %3187 = vmatpush.msra.mxu0 %v3186
        %v3188 = vand.u32 %v302, 4294901760
        %3189 = vmatpush.msra.mxu0 %v3188
        %v3190 = vand.u32 %v166, 4294901760
        %v3191 = vsub.f32 %v166, %v3190
        %v3192 = vand.u32 %v3191, 4294901760
        %v3193 = vsub.f32 %v3191, %v3192
        %v3194 = vand.u32 %v3193, 4294901760
        %3195 = vmatmul.f32.gmra.mxu0 %v3194
        %v3196 = vpop.f32.mrf.mxu0
        %v3197 = vadd.f32 %v3156, %v3196
        %3198 = vdwg.mxu0
        %v3199 = vand.u32 %v317, 4294901760
        %v3200 = vsub.f32 %v317, %v3199
        %v3201 = vand.u32 %v3200, 4294901760
        %v3202 = vsub.f32 %v3200, %v3201
        %v3203 = vand.u32 %v3202, 4294901760
        %3204 = vmatpush.msra.mxu0 %v3203
        %v3205 = vand.u32 %v316, 4294901760
        %v3206 = vsub.f32 %v316, %v3205
        %v3207 = vand.u32 %v3206, 4294901760
        %v3208 = vsub.f32 %v3206, %v3207
        %v3209 = vand.u32 %v3208, 4294901760
        %3210 = vmatpush.msra.mxu0 %v3209
        %v3211 = vand.u32 %v315, 4294901760
        %v3212 = vsub.f32 %v315, %v3211
        %v3213 = vand.u32 %v3212, 4294901760
        %v3214 = vsub.f32 %v3212, %v3213
        %v3215 = vand.u32 %v3214, 4294901760
        %3216 = vmatpush.msra.mxu0 %v3215
        %v3217 = vand.u32 %v314, 4294901760
        %v3218 = vsub.f32 %v314, %v3217
        %v3219 = vand.u32 %v3218, 4294901760
        %v3220 = vsub.f32 %v3218, %v3219
        %v3221 = vand.u32 %v3220, 4294901760
        %3222 = vmatpush.msra.mxu0 %v3221
        %v3223 = vand.u32 %v313, 4294901760
        %v3224 = vsub.f32 %v313, %v3223
        %v3225 = vand.u32 %v3224, 4294901760
        %v3226 = vsub.f32 %v3224, %v3225
        %v3227 = vand.u32 %v3226, 4294901760
        %3228 = vmatpush.msra.mxu0 %v3227
        %v3229 = vand.u32 %v312, 4294901760
        %v3230 = vsub.f32 %v312, %v3229
        %v3231 = vand.u32 %v3230, 4294901760
        %v3232 = vsub.f32 %v3230, %v3231
        %v3233 = vand.u32 %v3232, 4294901760
        %3234 = vmatpush.msra.mxu0 %v3233
        %v3235 = vand.u32 %v311, 4294901760
        %v3236 = vsub.f32 %v311, %v3235
        %v3237 = vand.u32 %v3236, 4294901760
        %v3238 = vsub.f32 %v3236, %v3237
        %v3239 = vand.u32 %v3238, 4294901760
        %3240 = vmatpush.msra.mxu0 %v3239
        %v3241 = vand.u32 %v310, 4294901760
        %v3242 = vsub.f32 %v310, %v3241
        %v3243 = vand.u32 %v3242, 4294901760
        %v3244 = vsub.f32 %v3242, %v3243
        %v3245 = vand.u32 %v3244, 4294901760
        %3246 = vmatpush.msra.mxu0 %v3245
        %v3247 = vand.u32 %v309, 4294901760
        %v3248 = vsub.f32 %v309, %v3247
        %v3249 = vand.u32 %v3248, 4294901760
        %v3250 = vsub.f32 %v3248, %v3249
        %v3251 = vand.u32 %v3250, 4294901760
        %3252 = vmatpush.msra.mxu0 %v3251
        %v3253 = vand.u32 %v308, 4294901760
        %v3254 = vsub.f32 %v308, %v3253
        %v3255 = vand.u32 %v3254, 4294901760
        %v3256 = vsub.f32 %v3254, %v3255
        %v3257 = vand.u32 %v3256, 4294901760
        %3258 = vmatpush.msra.mxu0 %v3257
        %v3259 = vand.u32 %v307, 4294901760
        %v3260 = vsub.f32 %v307, %v3259
        %v3261 = vand.u32 %v3260, 4294901760
        %v3262 = vsub.f32 %v3260, %v3261
        %v3263 = vand.u32 %v3262, 4294901760
        %3264 = vmatpush.msra.mxu0 %v3263
        %v3265 = vand.u32 %v306, 4294901760
        %v3266 = vsub.f32 %v306, %v3265
        %v3267 = vand.u32 %v3266, 4294901760
        %v3268 = vsub.f32 %v3266, %v3267
        %v3269 = vand.u32 %v3268, 4294901760
        %3270 = vmatpush.msra.mxu0 %v3269
        %v3271 = vand.u32 %v305, 4294901760
        %v3272 = vsub.f32 %v305, %v3271
        %v3273 = vand.u32 %v3272, 4294901760
        %v3274 = vsub.f32 %v3272, %v3273
        %v3275 = vand.u32 %v3274, 4294901760
        %3276 = vmatpush.msra.mxu0 %v3275
        %v3277 = vand.u32 %v304, 4294901760
        %v3278 = vsub.f32 %v304, %v3277
        %v3279 = vand.u32 %v3278, 4294901760
        %v3280 = vsub.f32 %v3278, %v3279
        %v3281 = vand.u32 %v3280, 4294901760
        %3282 = vmatpush.msra.mxu0 %v3281
        %v3283 = vand.u32 %v303, 4294901760
        %v3284 = vsub.f32 %v303, %v3283
        %v3285 = vand.u32 %v3284, 4294901760
        %v3286 = vsub.f32 %v3284, %v3285
        %v3287 = vand.u32 %v3286, 4294901760
        %3288 = vmatpush.msra.mxu0 %v3287
        %v3289 = vand.u32 %v302, 4294901760
        %v3290 = vsub.f32 %v302, %v3289
        %v3291 = vand.u32 %v3290, 4294901760
        %v3292 = vsub.f32 %v3290, %v3291
        %v3293 = vand.u32 %v3292, 4294901760
        %3294 = vmatpush.msra.mxu0 %v3293
        %v3295 = vand.u32 %v166, 4294901760
        %3296 = vmatmul.f32.gmra.mxu0 %v3295
        %v3297 = vpop.f32.mrf.mxu0
        %v3298 = vadd.f32 %v3197, %v3297
        %3299 = vdwg.mxu0
        %v3300 = vand.u32 %v317, 4294901760
        %v3301 = vsub.f32 %v317, %v3300
        %3302 = vmatpush.msra.mxu0 %v3301
        %v3303 = vand.u32 %v316, 4294901760
        %v3304 = vsub.f32 %v316, %v3303
        %3305 = vmatpush.msra.mxu0 %v3304
        %v3306 = vand.u32 %v315, 4294901760
        %v3307 = vsub.f32 %v315, %v3306
        %3308 = vmatpush.msra.mxu0 %v3307
        %v3309 = vand.u32 %v314, 4294901760
        %v3310 = vsub.f32 %v314, %v3309
        %3311 = vmatpush.msra.mxu0 %v3310
        %v3312 = vand.u32 %v313, 4294901760
        %v3313 = vsub.f32 %v313, %v3312
        %3314 = vmatpush.msra.mxu0 %v3313
        %v3315 = vand.u32 %v312, 4294901760
        %v3316 = vsub.f32 %v312, %v3315
        %3317 = vmatpush.msra.mxu0 %v3316
        %v3318 = vand.u32 %v311, 4294901760
        %v3319 = vsub.f32 %v311, %v3318
        %3320 = vmatpush.msra.mxu0 %v3319
        %v3321 = vand.u32 %v310, 4294901760
        %v3322 = vsub.f32 %v310, %v3321
        %3323 = vmatpush.msra.mxu0 %v3322
        %v3324 = vand.u32 %v309, 4294901760
        %v3325 = vsub.f32 %v309, %v3324
        %3326 = vmatpush.msra.mxu0 %v3325
        %v3327 = vand.u32 %v308, 4294901760
        %v3328 = vsub.f32 %v308, %v3327
        %3329 = vmatpush.msra.mxu0 %v3328
        %v3330 = vand.u32 %v307, 4294901760
        %v3331 = vsub.f32 %v307, %v3330
        %3332 = vmatpush.msra.mxu0 %v3331
        %v3333 = vand.u32 %v306, 4294901760
        %v3334 = vsub.f32 %v306, %v3333
        %3335 = vmatpush.msra.mxu0 %v3334
        %v3336 = vand.u32 %v305, 4294901760
        %v3337 = vsub.f32 %v305, %v3336
        %3338 = vmatpush.msra.mxu0 %v3337
        %v3339 = vand.u32 %v304, 4294901760
        %v3340 = vsub.f32 %v304, %v3339
        %3341 = vmatpush.msra.mxu0 %v3340
        %v3342 = vand.u32 %v303, 4294901760
        %v3343 = vsub.f32 %v303, %v3342
        %3344 = vmatpush.msra.mxu0 %v3343
        %v3345 = vand.u32 %v302, 4294901760
        %v3346 = vsub.f32 %v302, %v3345
        %3347 = vmatpush.msra.mxu0 %v3346
        %v3348 = vand.u32 %v166, 4294901760
        %v3349 = vsub.f32 %v166, %v3348
        %3350 = vmatmul.f32.gmra.mxu0 %v3349
        %v3351 = vpop.f32.mrf.mxu0
        %v3352 = vadd.f32 %v3298, %v3351
        %3353 = vdwg.mxu0
        %v3354 = vand.u32 %v317, 4294901760
        %3355 = vmatpush.msra.mxu0 %v3354
        %v3356 = vand.u32 %v316, 4294901760
        %3357 = vmatpush.msra.mxu0 %v3356
        %v3358 = vand.u32 %v315, 4294901760
        %3359 = vmatpush.msra.mxu0 %v3358
        %v3360 = vand.u32 %v314, 4294901760
        %3361 = vmatpush.msra.mxu0 %v3360
        %v3362 = vand.u32 %v313, 4294901760
        %3363 = vmatpush.msra.mxu0 %v3362
        %v3364 = vand.u32 %v312, 4294901760
        %3365 = vmatpush.msra.mxu0 %v3364
        %v3366 = vand.u32 %v311, 4294901760
        %3367 = vmatpush.msra.mxu0 %v3366
        %v3368 = vand.u32 %v310, 4294901760
        %3369 = vmatpush.msra.mxu0 %v3368
        %v3370 = vand.u32 %v309, 4294901760
        %3371 = vmatpush.msra.mxu0 %v3370
        %v3372 = vand.u32 %v308, 4294901760
        %3373 = vmatpush.msra.mxu0 %v3372
        %v3374 = vand.u32 %v307, 4294901760
        %3375 = vmatpush.msra.mxu0 %v3374
        %v3376 = vand.u32 %v306, 4294901760
        %3377 = vmatpush.msra.mxu0 %v3376
        %v3378 = vand.u32 %v305, 4294901760
        %3379 = vmatpush.msra.mxu0 %v3378
        %v3380 = vand.u32 %v304, 4294901760
        %3381 = vmatpush.msra.mxu0 %v3380
        %v3382 = vand.u32 %v303, 4294901760
        %3383 = vmatpush.msra.mxu0 %v3382
        %v3384 = vand.u32 %v302, 4294901760
        %3385 = vmatpush.msra.mxu0 %v3384
        %v3386 = vand.u32 %v166, 4294901760
        %v3387 = vsub.f32 %v166, %v3386
        %v3388 = vand.u32 %v3387, 4294901760
        %3389 = vmatmul.f32.gmra.mxu0 %v3388
        %v3390 = vpop.f32.mrf.mxu0
        %v3391 = vadd.f32 %v3352, %v3390
        %3392 = vdwg.mxu0
        %v3393 = vand.u32 %v317, 4294901760
        %v3394 = vsub.f32 %v317, %v3393
        %v3395 = vand.u32 %v3394, 4294901760
        %3396 = vmatpush.msra.mxu0 %v3395
        %v3397 = vand.u32 %v316, 4294901760
        %v3398 = vsub.f32 %v316, %v3397
        %v3399 = vand.u32 %v3398, 4294901760
        %3400 = vmatpush.msra.mxu0 %v3399
        %v3401 = vand.u32 %v315, 4294901760
        %v3402 = vsub.f32 %v315, %v3401
        %v3403 = vand.u32 %v3402, 4294901760
        %3404 = vmatpush.msra.mxu0 %v3403
        %v3405 = vand.u32 %v314, 4294901760
        %v3406 = vsub.f32 %v314, %v3405
        %v3407 = vand.u32 %v3406, 4294901760
        %3408 = vmatpush.msra.mxu0 %v3407
        %v3409 = vand.u32 %v313, 4294901760
        %v3410 = vsub.f32 %v313, %v3409
        %v3411 = vand.u32 %v3410, 4294901760
        %3412 = vmatpush.msra.mxu0 %v3411
        %v3413 = vand.u32 %v312, 4294901760
        %v3414 = vsub.f32 %v312, %v3413
        %v3415 = vand.u32 %v3414, 4294901760
        %3416 = vmatpush.msra.mxu0 %v3415
        %v3417 = vand.u32 %v311, 4294901760
        %v3418 = vsub.f32 %v311, %v3417
        %v3419 = vand.u32 %v3418, 4294901760
        %3420 = vmatpush.msra.mxu0 %v3419
        %v3421 = vand.u32 %v310, 4294901760
        %v3422 = vsub.f32 %v310, %v3421
        %v3423 = vand.u32 %v3422, 4294901760
        %3424 = vmatpush.msra.mxu0 %v3423
        %v3425 = vand.u32 %v309, 4294901760
        %v3426 = vsub.f32 %v309, %v3425
        %v3427 = vand.u32 %v3426, 4294901760
        %3428 = vmatpush.msra.mxu0 %v3427
        %v3429 = vand.u32 %v308, 4294901760
        %v3430 = vsub.f32 %v308, %v3429
        %v3431 = vand.u32 %v3430, 4294901760
        %3432 = vmatpush.msra.mxu0 %v3431
        %v3433 = vand.u32 %v307, 4294901760
        %v3434 = vsub.f32 %v307, %v3433
        %v3435 = vand.u32 %v3434, 4294901760
        %3436 = vmatpush.msra.mxu0 %v3435
        %v3437 = vand.u32 %v306, 4294901760
        %v3438 = vsub.f32 %v306, %v3437
        %v3439 = vand.u32 %v3438, 4294901760
        %3440 = vmatpush.msra.mxu0 %v3439
        %v3441 = vand.u32 %v305, 4294901760
        %v3442 = vsub.f32 %v305, %v3441
        %v3443 = vand.u32 %v3442, 4294901760
        %3444 = vmatpush.msra.mxu0 %v3443
        %v3445 = vand.u32 %v304, 4294901760
        %v3446 = vsub.f32 %v304, %v3445
        %v3447 = vand.u32 %v3446, 4294901760
        %3448 = vmatpush.msra.mxu0 %v3447
        %v3449 = vand.u32 %v303, 4294901760
        %v3450 = vsub.f32 %v303, %v3449
        %v3451 = vand.u32 %v3450, 4294901760
        %3452 = vmatpush.msra.mxu0 %v3451
        %v3453 = vand.u32 %v302, 4294901760
        %v3454 = vsub.f32 %v302, %v3453
        %v3455 = vand.u32 %v3454, 4294901760
        %3456 = vmatpush.msra.mxu0 %v3455
        %v3457 = vand.u32 %v166, 4294901760
        %3458 = vmatmul.f32.gmra.mxu0 %v3457
        %v3459 = vpop.f32.mrf.mxu0
        %v3460 = vadd.f32 %v3391, %v3459
        %3461 = vdwg.mxu0
        %v3462 = vand.u32 %v317, 4294901760
        %3463 = vmatpush.msra.mxu0 %v3462
        %v3464 = vand.u32 %v316, 4294901760
        %3465 = vmatpush.msra.mxu0 %v3464
        %v3466 = vand.u32 %v315, 4294901760
        %3467 = vmatpush.msra.mxu0 %v3466
        %v3468 = vand.u32 %v314, 4294901760
        %3469 = vmatpush.msra.mxu0 %v3468
        %v3470 = vand.u32 %v313, 4294901760
        %3471 = vmatpush.msra.mxu0 %v3470
        %v3472 = vand.u32 %v312, 4294901760
        %3473 = vmatpush.msra.mxu0 %v3472
        %v3474 = vand.u32 %v311, 4294901760
        %3475 = vmatpush.msra.mxu0 %v3474
        %v3476 = vand.u32 %v310, 4294901760
        %3477 = vmatpush.msra.mxu0 %v3476
        %v3478 = vand.u32 %v309, 4294901760
        %3479 = vmatpush.msra.mxu0 %v3478
        %v3480 = vand.u32 %v308, 4294901760
        %3481 = vmatpush.msra.mxu0 %v3480
        %v3482 = vand.u32 %v307, 4294901760
        %3483 = vmatpush.msra.mxu0 %v3482
        %v3484 = vand.u32 %v306, 4294901760
        %3485 = vmatpush.msra.mxu0 %v3484
        %v3486 = vand.u32 %v305, 4294901760
        %3487 = vmatpush.msra.mxu0 %v3486
        %v3488 = vand.u32 %v304, 4294901760
        %3489 = vmatpush.msra.mxu0 %v3488
        %v3490 = vand.u32 %v303, 4294901760
        %3491 = vmatpush.msra.mxu0 %v3490
        %v3492 = vand.u32 %v302, 4294901760
        %3493 = vmatpush.msra.mxu0 %v3492
        %v3494 = vand.u32 %v166, 4294901760
        %3495 = vmatmul.f32.gmra.mxu0 %v3494
        %v3496 = vpop.f32.mrf.mxu0
        %v3497 = vadd.f32 %v3460, %v3496
        %3498 = vdwg.mxu0
        %v3499 = vand.u32 %v333, 4294901760
        %3500 = vmatpush.msra.mxu0 %v3499
        %v3501 = vand.u32 %v332, 4294901760
        %3502 = vmatpush.msra.mxu0 %v3501
        %v3503 = vand.u32 %v331, 4294901760
        %3504 = vmatpush.msra.mxu0 %v3503
        %v3505 = vand.u32 %v330, 4294901760
        %3506 = vmatpush.msra.mxu0 %v3505
        %v3507 = vand.u32 %v329, 4294901760
        %3508 = vmatpush.msra.mxu0 %v3507
        %v3509 = vand.u32 %v328, 4294901760
        %3510 = vmatpush.msra.mxu0 %v3509
        %v3511 = vand.u32 %v327, 4294901760
        %3512 = vmatpush.msra.mxu0 %v3511
        %v3513 = vand.u32 %v326, 4294901760
        %3514 = vmatpush.msra.mxu0 %v3513
        %v3515 = vand.u32 %v325, 4294901760
        %3516 = vmatpush.msra.mxu0 %v3515
        %v3517 = vand.u32 %v324, 4294901760
        %3518 = vmatpush.msra.mxu0 %v3517
        %v3519 = vand.u32 %v323, 4294901760
        %3520 = vmatpush.msra.mxu0 %v3519
        %v3521 = vand.u32 %v322, 4294901760
        %3522 = vmatpush.msra.mxu0 %v3521
        %v3523 = vand.u32 %v321, 4294901760
        %3524 = vmatpush.msra.mxu0 %v3523
        %v3525 = vand.u32 %v320, 4294901760
        %3526 = vmatpush.msra.mxu0 %v3525
        %v3527 = vand.u32 %v319, 4294901760
        %3528 = vmatpush.msra.mxu0 %v3527
        %v3529 = vand.u32 %v318, 4294901760
        %3530 = vmatpush.msra.mxu0 %v3529
        %v3531 = vand.u32 %v167, 4294901760
        %v3532 = vsub.f32 %v167, %v3531
        %v3533 = vand.u32 %v3532, 4294901760
        %v3534 = vsub.f32 %v3532, %v3533
        %v3535 = vand.u32 %v3534, 4294901760
        %3536 = vmatmul.f32.gmra.mxu0 %v3535
        %v3537 = vpop.f32.mrf.mxu0
        %v3538 = vadd.f32 %v3497, %v3537
        %3539 = vdwg.mxu0
        %v3540 = vand.u32 %v333, 4294901760
        %v3541 = vsub.f32 %v333, %v3540
        %v3542 = vand.u32 %v3541, 4294901760
        %v3543 = vsub.f32 %v3541, %v3542
        %v3544 = vand.u32 %v3543, 4294901760
        %3545 = vmatpush.msra.mxu0 %v3544
        %v3546 = vand.u32 %v332, 4294901760
        %v3547 = vsub.f32 %v332, %v3546
        %v3548 = vand.u32 %v3547, 4294901760
        %v3549 = vsub.f32 %v3547, %v3548
        %v3550 = vand.u32 %v3549, 4294901760
        %3551 = vmatpush.msra.mxu0 %v3550
        %v3552 = vand.u32 %v331, 4294901760
        %v3553 = vsub.f32 %v331, %v3552
        %v3554 = vand.u32 %v3553, 4294901760
        %v3555 = vsub.f32 %v3553, %v3554
        %v3556 = vand.u32 %v3555, 4294901760
        %3557 = vmatpush.msra.mxu0 %v3556
        %v3558 = vand.u32 %v330, 4294901760
        %v3559 = vsub.f32 %v330, %v3558
        %v3560 = vand.u32 %v3559, 4294901760
        %v3561 = vsub.f32 %v3559, %v3560
        %v3562 = vand.u32 %v3561, 4294901760
        %3563 = vmatpush.msra.mxu0 %v3562
        %v3564 = vand.u32 %v329, 4294901760
        %v3565 = vsub.f32 %v329, %v3564
        %v3566 = vand.u32 %v3565, 4294901760
        %v3567 = vsub.f32 %v3565, %v3566
        %v3568 = vand.u32 %v3567, 4294901760
        %3569 = vmatpush.msra.mxu0 %v3568
        %v3570 = vand.u32 %v328, 4294901760
        %v3571 = vsub.f32 %v328, %v3570
        %v3572 = vand.u32 %v3571, 4294901760
        %v3573 = vsub.f32 %v3571, %v3572
        %v3574 = vand.u32 %v3573, 4294901760
        %3575 = vmatpush.msra.mxu0 %v3574
        %v3576 = vand.u32 %v327, 4294901760
        %v3577 = vsub.f32 %v327, %v3576
        %v3578 = vand.u32 %v3577, 4294901760
        %v3579 = vsub.f32 %v3577, %v3578
        %v3580 = vand.u32 %v3579, 4294901760
        %3581 = vmatpush.msra.mxu0 %v3580
        %v3582 = vand.u32 %v326, 4294901760
        %v3583 = vsub.f32 %v326, %v3582
        %v3584 = vand.u32 %v3583, 4294901760
        %v3585 = vsub.f32 %v3583, %v3584
        %v3586 = vand.u32 %v3585, 4294901760
        %3587 = vmatpush.msra.mxu0 %v3586
        %v3588 = vand.u32 %v325, 4294901760
        %v3589 = vsub.f32 %v325, %v3588
        %v3590 = vand.u32 %v3589, 4294901760
        %v3591 = vsub.f32 %v3589, %v3590
        %v3592 = vand.u32 %v3591, 4294901760
        %3593 = vmatpush.msra.mxu0 %v3592
        %v3594 = vand.u32 %v324, 4294901760
        %v3595 = vsub.f32 %v324, %v3594
        %v3596 = vand.u32 %v3595, 4294901760
        %v3597 = vsub.f32 %v3595, %v3596
        %v3598 = vand.u32 %v3597, 4294901760
        %3599 = vmatpush.msra.mxu0 %v3598
        %v3600 = vand.u32 %v323, 4294901760
        %v3601 = vsub.f32 %v323, %v3600
        %v3602 = vand.u32 %v3601, 4294901760
        %v3603 = vsub.f32 %v3601, %v3602
        %v3604 = vand.u32 %v3603, 4294901760
        %3605 = vmatpush.msra.mxu0 %v3604
        %v3606 = vand.u32 %v322, 4294901760
        %v3607 = vsub.f32 %v322, %v3606
        %v3608 = vand.u32 %v3607, 4294901760
        %v3609 = vsub.f32 %v3607, %v3608
        %v3610 = vand.u32 %v3609, 4294901760
        %3611 = vmatpush.msra.mxu0 %v3610
        %v3612 = vand.u32 %v321, 4294901760
        %v3613 = vsub.f32 %v321, %v3612
        %v3614 = vand.u32 %v3613, 4294901760
        %v3615 = vsub.f32 %v3613, %v3614
        %v3616 = vand.u32 %v3615, 4294901760
        %3617 = vmatpush.msra.mxu0 %v3616
        %v3618 = vand.u32 %v320, 4294901760
        %v3619 = vsub.f32 %v320, %v3618
        %v3620 = vand.u32 %v3619, 4294901760
        %v3621 = vsub.f32 %v3619, %v3620
        %v3622 = vand.u32 %v3621, 4294901760
        %3623 = vmatpush.msra.mxu0 %v3622
        %v3624 = vand.u32 %v319, 4294901760
        %v3625 = vsub.f32 %v319, %v3624
        %v3626 = vand.u32 %v3625, 4294901760
        %v3627 = vsub.f32 %v3625, %v3626
        %v3628 = vand.u32 %v3627, 4294901760
        %3629 = vmatpush.msra.mxu0 %v3628
        %v3630 = vand.u32 %v318, 4294901760
        %v3631 = vsub.f32 %v318, %v3630
        %v3632 = vand.u32 %v3631, 4294901760
        %v3633 = vsub.f32 %v3631, %v3632
        %v3634 = vand.u32 %v3633, 4294901760
        %3635 = vmatpush.msra.mxu0 %v3634
        %v3636 = vand.u32 %v167, 4294901760
        %3637 = vmatmul.f32.gmra.mxu0 %v3636
        %v3638 = vpop.f32.mrf.mxu0
        %v3639 = vadd.f32 %v3538, %v3638
        %3640 = vdwg.mxu0
        %v3641 = vand.u32 %v333, 4294901760
        %v3642 = vsub.f32 %v333, %v3641
        %3643 = vmatpush.msra.mxu0 %v3642
        %v3644 = vand.u32 %v332, 4294901760
        %v3645 = vsub.f32 %v332, %v3644
        %3646 = vmatpush.msra.mxu0 %v3645
        %v3647 = vand.u32 %v331, 4294901760
        %v3648 = vsub.f32 %v331, %v3647
        %3649 = vmatpush.msra.mxu0 %v3648
        %v3650 = vand.u32 %v330, 4294901760
        %v3651 = vsub.f32 %v330, %v3650
        %3652 = vmatpush.msra.mxu0 %v3651
        %v3653 = vand.u32 %v329, 4294901760
        %v3654 = vsub.f32 %v329, %v3653
        %3655 = vmatpush.msra.mxu0 %v3654
        %v3656 = vand.u32 %v328, 4294901760
        %v3657 = vsub.f32 %v328, %v3656
        %3658 = vmatpush.msra.mxu0 %v3657
        %v3659 = vand.u32 %v327, 4294901760
        %v3660 = vsub.f32 %v327, %v3659
        %3661 = vmatpush.msra.mxu0 %v3660
        %v3662 = vand.u32 %v326, 4294901760
        %v3663 = vsub.f32 %v326, %v3662
        %3664 = vmatpush.msra.mxu0 %v3663
        %v3665 = vand.u32 %v325, 4294901760
        %v3666 = vsub.f32 %v325, %v3665
        %3667 = vmatpush.msra.mxu0 %v3666
        %v3668 = vand.u32 %v324, 4294901760
        %v3669 = vsub.f32 %v324, %v3668
        %3670 = vmatpush.msra.mxu0 %v3669
        %v3671 = vand.u32 %v323, 4294901760
        %v3672 = vsub.f32 %v323, %v3671
        %3673 = vmatpush.msra.mxu0 %v3672
        %v3674 = vand.u32 %v322, 4294901760
        %v3675 = vsub.f32 %v322, %v3674
        %3676 = vmatpush.msra.mxu0 %v3675
        %v3677 = vand.u32 %v321, 4294901760
        %v3678 = vsub.f32 %v321, %v3677
        %3679 = vmatpush.msra.mxu0 %v3678
        %v3680 = vand.u32 %v320, 4294901760
        %v3681 = vsub.f32 %v320, %v3680
        %3682 = vmatpush.msra.mxu0 %v3681
        %v3683 = vand.u32 %v319, 4294901760
        %v3684 = vsub.f32 %v319, %v3683
        %3685 = vmatpush.msra.mxu0 %v3684
        %v3686 = vand.u32 %v318, 4294901760
        %v3687 = vsub.f32 %v318, %v3686
        %3688 = vmatpush.msra.mxu0 %v3687
        %v3689 = vand.u32 %v167, 4294901760
        %v3690 = vsub.f32 %v167, %v3689
        %3691 = vmatmul.f32.gmra.mxu0 %v3690
        %v3692 = vpop.f32.mrf.mxu0
        %v3693 = vadd.f32 %v3639, %v3692
        %3694 = vdwg.mxu0
        %v3695 = vand.u32 %v333, 4294901760
        %3696 = vmatpush.msra.mxu0 %v3695
        %v3697 = vand.u32 %v332, 4294901760
        %3698 = vmatpush.msra.mxu0 %v3697
        %v3699 = vand.u32 %v331, 4294901760
        %3700 = vmatpush.msra.mxu0 %v3699
        %v3701 = vand.u32 %v330, 4294901760
        %3702 = vmatpush.msra.mxu0 %v3701
        %v3703 = vand.u32 %v329, 4294901760
        %3704 = vmatpush.msra.mxu0 %v3703
        %v3705 = vand.u32 %v328, 4294901760
        %3706 = vmatpush.msra.mxu0 %v3705
        %v3707 = vand.u32 %v327, 4294901760
        %3708 = vmatpush.msra.mxu0 %v3707
        %v3709 = vand.u32 %v326, 4294901760
        %3710 = vmatpush.msra.mxu0 %v3709
        %v3711 = vand.u32 %v325, 4294901760
        %3712 = vmatpush.msra.mxu0 %v3711
        %v3713 = vand.u32 %v324, 4294901760
        %3714 = vmatpush.msra.mxu0 %v3713
        %v3715 = vand.u32 %v323, 4294901760
        %3716 = vmatpush.msra.mxu0 %v3715
        %v3717 = vand.u32 %v322, 4294901760
        %3718 = vmatpush.msra.mxu0 %v3717
        %v3719 = vand.u32 %v321, 4294901760
        %3720 = vmatpush.msra.mxu0 %v3719
        %v3721 = vand.u32 %v320, 4294901760
        %3722 = vmatpush.msra.mxu0 %v3721
        %v3723 = vand.u32 %v319, 4294901760
        %3724 = vmatpush.msra.mxu0 %v3723
        %v3725 = vand.u32 %v318, 4294901760
        %3726 = vmatpush.msra.mxu0 %v3725
        %v3727 = vand.u32 %v167, 4294901760
        %v3728 = vsub.f32 %v167, %v3727
        %v3729 = vand.u32 %v3728, 4294901760
        %3730 = vmatmul.f32.gmra.mxu0 %v3729
        %v3731 = vpop.f32.mrf.mxu0
        %v3732 = vadd.f32 %v3693, %v3731
        %3733 = vdwg.mxu0
        %v3734 = vand.u32 %v333, 4294901760
        %v3735 = vsub.f32 %v333, %v3734
        %v3736 = vand.u32 %v3735, 4294901760
        %3737 = vmatpush.msra.mxu0 %v3736
        %v3738 = vand.u32 %v332, 4294901760
        %v3739 = vsub.f32 %v332, %v3738
        %v3740 = vand.u32 %v3739, 4294901760
        %3741 = vmatpush.msra.mxu0 %v3740
        %v3742 = vand.u32 %v331, 4294901760
        %v3743 = vsub.f32 %v331, %v3742
        %v3744 = vand.u32 %v3743, 4294901760
        %3745 = vmatpush.msra.mxu0 %v3744
        %v3746 = vand.u32 %v330, 4294901760
        %v3747 = vsub.f32 %v330, %v3746
        %v3748 = vand.u32 %v3747, 4294901760
        %3749 = vmatpush.msra.mxu0 %v3748
        %v3750 = vand.u32 %v329, 4294901760
        %v3751 = vsub.f32 %v329, %v3750
        %v3752 = vand.u32 %v3751, 4294901760
        %3753 = vmatpush.msra.mxu0 %v3752
        %v3754 = vand.u32 %v328, 4294901760
        %v3755 = vsub.f32 %v328, %v3754
        %v3756 = vand.u32 %v3755, 4294901760
        %3757 = vmatpush.msra.mxu0 %v3756
        %v3758 = vand.u32 %v327, 4294901760
        %v3759 = vsub.f32 %v327, %v3758
        %v3760 = vand.u32 %v3759, 4294901760
        %3761 = vmatpush.msra.mxu0 %v3760
        %v3762 = vand.u32 %v326, 4294901760
        %v3763 = vsub.f32 %v326, %v3762
        %v3764 = vand.u32 %v3763, 4294901760
        %3765 = vmatpush.msra.mxu0 %v3764
        %v3766 = vand.u32 %v325, 4294901760
        %v3767 = vsub.f32 %v325, %v3766
        %v3768 = vand.u32 %v3767, 4294901760
        %3769 = vmatpush.msra.mxu0 %v3768
        %v3770 = vand.u32 %v324, 4294901760
        %v3771 = vsub.f32 %v324, %v3770
        %v3772 = vand.u32 %v3771, 4294901760
        %3773 = vmatpush.msra.mxu0 %v3772
        %v3774 = vand.u32 %v323, 4294901760
        %v3775 = vsub.f32 %v323, %v3774
        %v3776 = vand.u32 %v3775, 4294901760
        %3777 = vmatpush.msra.mxu0 %v3776
        %v3778 = vand.u32 %v322, 4294901760
        %v3779 = vsub.f32 %v322, %v3778
        %v3780 = vand.u32 %v3779, 4294901760
        %3781 = vmatpush.msra.mxu0 %v3780
        %v3782 = vand.u32 %v321, 4294901760
        %v3783 = vsub.f32 %v321, %v3782
        %v3784 = vand.u32 %v3783, 4294901760
        %3785 = vmatpush.msra.mxu0 %v3784
        %v3786 = vand.u32 %v320, 4294901760
        %v3787 = vsub.f32 %v320, %v3786
        %v3788 = vand.u32 %v3787, 4294901760
        %3789 = vmatpush.msra.mxu0 %v3788
        %v3790 = vand.u32 %v319, 4294901760
        %v3791 = vsub.f32 %v319, %v3790
        %v3792 = vand.u32 %v3791, 4294901760
        %3793 = vmatpush.msra.mxu0 %v3792
        %v3794 = vand.u32 %v318, 4294901760
        %v3795 = vsub.f32 %v318, %v3794
        %v3796 = vand.u32 %v3795, 4294901760
        %3797 = vmatpush.msra.mxu0 %v3796
        %v3798 = vand.u32 %v167, 4294901760
        %3799 = vmatmul.f32.gmra.mxu0 %v3798
        %v3800 = vpop.f32.mrf.mxu0
        %v3801 = vadd.f32 %v3732, %v3800
        %3802 = vdwg.mxu0
        %v3803 = vand.u32 %v333, 4294901760
        %3804 = vmatpush.msra.mxu0 %v3803
        %v3805 = vand.u32 %v332, 4294901760
        %3806 = vmatpush.msra.mxu0 %v3805
        %v3807 = vand.u32 %v331, 4294901760
        %3808 = vmatpush.msra.mxu0 %v3807
        %v3809 = vand.u32 %v330, 4294901760
        %3810 = vmatpush.msra.mxu0 %v3809
        %v3811 = vand.u32 %v329, 4294901760
        %3812 = vmatpush.msra.mxu0 %v3811
        %v3813 = vand.u32 %v328, 4294901760
        %3814 = vmatpush.msra.mxu0 %v3813
        %v3815 = vand.u32 %v327, 4294901760
        %3816 = vmatpush.msra.mxu0 %v3815
        %v3817 = vand.u32 %v326, 4294901760
        %3818 = vmatpush.msra.mxu0 %v3817
        %v3819 = vand.u32 %v325, 4294901760
        %3820 = vmatpush.msra.mxu0 %v3819
        %v3821 = vand.u32 %v324, 4294901760
        %3822 = vmatpush.msra.mxu0 %v3821
        %v3823 = vand.u32 %v323, 4294901760
        %3824 = vmatpush.msra.mxu0 %v3823
        %v3825 = vand.u32 %v322, 4294901760
        %3826 = vmatpush.msra.mxu0 %v3825
        %v3827 = vand.u32 %v321, 4294901760
        %3828 = vmatpush.msra.mxu0 %v3827
        %v3829 = vand.u32 %v320, 4294901760
        %3830 = vmatpush.msra.mxu0 %v3829
        %v3831 = vand.u32 %v319, 4294901760
        %3832 = vmatpush.msra.mxu0 %v3831
        %v3833 = vand.u32 %v318, 4294901760
        %3834 = vmatpush.msra.mxu0 %v3833
        %v3835 = vand.u32 %v167, 4294901760
        %3836 = vmatmul.f32.gmra.mxu0 %v3835
        %v3837 = vpop.f32.mrf.mxu0
        %v3838 = vadd.f32 %v3801, %v3837
        %3839 = vdwg.mxu0
        %v3840 = vand.u32 %v349, 4294901760
        %3841 = vmatpush.msra.mxu0 %v3840
        %v3842 = vand.u32 %v348, 4294901760
        %3843 = vmatpush.msra.mxu0 %v3842
        %v3844 = vand.u32 %v347, 4294901760
        %3845 = vmatpush.msra.mxu0 %v3844
        %v3846 = vand.u32 %v346, 4294901760
        %3847 = vmatpush.msra.mxu0 %v3846
        %v3848 = vand.u32 %v345, 4294901760
        %3849 = vmatpush.msra.mxu0 %v3848
        %v3850 = vand.u32 %v344, 4294901760
        %3851 = vmatpush.msra.mxu0 %v3850
        %v3852 = vand.u32 %v343, 4294901760
        %3853 = vmatpush.msra.mxu0 %v3852
        %v3854 = vand.u32 %v342, 4294901760
        %3855 = vmatpush.msra.mxu0 %v3854
        %v3856 = vand.u32 %v341, 4294901760
        %3857 = vmatpush.msra.mxu0 %v3856
        %v3858 = vand.u32 %v340, 4294901760
        %3859 = vmatpush.msra.mxu0 %v3858
        %v3860 = vand.u32 %v339, 4294901760
        %3861 = vmatpush.msra.mxu0 %v3860
        %v3862 = vand.u32 %v338, 4294901760
        %3863 = vmatpush.msra.mxu0 %v3862
        %v3864 = vand.u32 %v337, 4294901760
        %3865 = vmatpush.msra.mxu0 %v3864
        %v3866 = vand.u32 %v336, 4294901760
        %3867 = vmatpush.msra.mxu0 %v3866
        %v3868 = vand.u32 %v335, 4294901760
        %3869 = vmatpush.msra.mxu0 %v3868
        %v3870 = vand.u32 %v334, 4294901760
        %3871 = vmatpush.msra.mxu0 %v3870
        %v3872 = vand.u32 %v168, 4294901760
        %v3873 = vsub.f32 %v168, %v3872
        %v3874 = vand.u32 %v3873, 4294901760
        %v3875 = vsub.f32 %v3873, %v3874
        %v3876 = vand.u32 %v3875, 4294901760
        %3877 = vmatmul.f32.gmra.mxu0 %v3876
        %v3878 = vpop.f32.mrf.mxu0
        %v3879 = vadd.f32 %v3838, %v3878
        %3880 = vdwg.mxu0
        %v3881 = vand.u32 %v349, 4294901760
        %v3882 = vsub.f32 %v349, %v3881
        %v3883 = vand.u32 %v3882, 4294901760
        %v3884 = vsub.f32 %v3882, %v3883
        %v3885 = vand.u32 %v3884, 4294901760
        %3886 = vmatpush.msra.mxu0 %v3885
        %v3887 = vand.u32 %v348, 4294901760
        %v3888 = vsub.f32 %v348, %v3887
        %v3889 = vand.u32 %v3888, 4294901760
        %v3890 = vsub.f32 %v3888, %v3889
        %v3891 = vand.u32 %v3890, 4294901760
        %3892 = vmatpush.msra.mxu0 %v3891
        %v3893 = vand.u32 %v347, 4294901760
        %v3894 = vsub.f32 %v347, %v3893
        %v3895 = vand.u32 %v3894, 4294901760
        %v3896 = vsub.f32 %v3894, %v3895
        %v3897 = vand.u32 %v3896, 4294901760
        %3898 = vmatpush.msra.mxu0 %v3897
        %v3899 = vand.u32 %v346, 4294901760
        %v3900 = vsub.f32 %v346, %v3899
        %v3901 = vand.u32 %v3900, 4294901760
        %v3902 = vsub.f32 %v3900, %v3901
        %v3903 = vand.u32 %v3902, 4294901760
        %3904 = vmatpush.msra.mxu0 %v3903
        %v3905 = vand.u32 %v345, 4294901760
        %v3906 = vsub.f32 %v345, %v3905
        %v3907 = vand.u32 %v3906, 4294901760
        %v3908 = vsub.f32 %v3906, %v3907
        %v3909 = vand.u32 %v3908, 4294901760
        %3910 = vmatpush.msra.mxu0 %v3909
        %v3911 = vand.u32 %v344, 4294901760
        %v3912 = vsub.f32 %v344, %v3911
        %v3913 = vand.u32 %v3912, 4294901760
        %v3914 = vsub.f32 %v3912, %v3913
        %v3915 = vand.u32 %v3914, 4294901760
        %3916 = vmatpush.msra.mxu0 %v3915
        %v3917 = vand.u32 %v343, 4294901760
        %v3918 = vsub.f32 %v343, %v3917
        %v3919 = vand.u32 %v3918, 4294901760
        %v3920 = vsub.f32 %v3918, %v3919
        %v3921 = vand.u32 %v3920, 4294901760
        %3922 = vmatpush.msra.mxu0 %v3921
        %v3923 = vand.u32 %v342, 4294901760
        %v3924 = vsub.f32 %v342, %v3923
        %v3925 = vand.u32 %v3924, 4294901760
        %v3926 = vsub.f32 %v3924, %v3925
        %v3927 = vand.u32 %v3926, 4294901760
        %3928 = vmatpush.msra.mxu0 %v3927
        %v3929 = vand.u32 %v341, 4294901760
        %v3930 = vsub.f32 %v341, %v3929
        %v3931 = vand.u32 %v3930, 4294901760
        %v3932 = vsub.f32 %v3930, %v3931
        %v3933 = vand.u32 %v3932, 4294901760
        %3934 = vmatpush.msra.mxu0 %v3933
        %v3935 = vand.u32 %v340, 4294901760
        %v3936 = vsub.f32 %v340, %v3935
        %v3937 = vand.u32 %v3936, 4294901760
        %v3938 = vsub.f32 %v3936, %v3937
        %v3939 = vand.u32 %v3938, 4294901760
        %3940 = vmatpush.msra.mxu0 %v3939
        %v3941 = vand.u32 %v339, 4294901760
        %v3942 = vsub.f32 %v339, %v3941
        %v3943 = vand.u32 %v3942, 4294901760
        %v3944 = vsub.f32 %v3942, %v3943
        %v3945 = vand.u32 %v3944, 4294901760
        %3946 = vmatpush.msra.mxu0 %v3945
        %v3947 = vand.u32 %v338, 4294901760
        %v3948 = vsub.f32 %v338, %v3947
        %v3949 = vand.u32 %v3948, 4294901760
        %v3950 = vsub.f32 %v3948, %v3949
        %v3951 = vand.u32 %v3950, 4294901760
        %3952 = vmatpush.msra.mxu0 %v3951
        %v3953 = vand.u32 %v337, 4294901760
        %v3954 = vsub.f32 %v337, %v3953
        %v3955 = vand.u32 %v3954, 4294901760
        %v3956 = vsub.f32 %v3954, %v3955
        %v3957 = vand.u32 %v3956, 4294901760
        %3958 = vmatpush.msra.mxu0 %v3957
        %v3959 = vand.u32 %v336, 4294901760
        %v3960 = vsub.f32 %v336, %v3959
        %v3961 = vand.u32 %v3960, 4294901760
        %v3962 = vsub.f32 %v3960, %v3961
        %v3963 = vand.u32 %v3962, 4294901760
        %3964 = vmatpush.msra.mxu0 %v3963
        %v3965 = vand.u32 %v335, 4294901760
        %v3966 = vsub.f32 %v335, %v3965
        %v3967 = vand.u32 %v3966, 4294901760
        %v3968 = vsub.f32 %v3966, %v3967
        %v3969 = vand.u32 %v3968, 4294901760
        %3970 = vmatpush.msra.mxu0 %v3969
        %v3971 = vand.u32 %v334, 4294901760
        %v3972 = vsub.f32 %v334, %v3971
        %v3973 = vand.u32 %v3972, 4294901760
        %v3974 = vsub.f32 %v3972, %v3973
        %v3975 = vand.u32 %v3974, 4294901760
        %3976 = vmatpush.msra.mxu0 %v3975
        %v3977 = vand.u32 %v168, 4294901760
        %3978 = vmatmul.f32.gmra.mxu0 %v3977
        %v3979 = vpop.f32.mrf.mxu0
        %v3980 = vadd.f32 %v3879, %v3979
        %3981 = vdwg.mxu0
        %v3982 = vand.u32 %v349, 4294901760
        %v3983 = vsub.f32 %v349, %v3982
        %3984 = vmatpush.msra.mxu0 %v3983
        %v3985 = vand.u32 %v348, 4294901760
        %v3986 = vsub.f32 %v348, %v3985
        %3987 = vmatpush.msra.mxu0 %v3986
        %v3988 = vand.u32 %v347, 4294901760
        %v3989 = vsub.f32 %v347, %v3988
        %3990 = vmatpush.msra.mxu0 %v3989
        %v3991 = vand.u32 %v346, 4294901760
        %v3992 = vsub.f32 %v346, %v3991
        %3993 = vmatpush.msra.mxu0 %v3992
        %v3994 = vand.u32 %v345, 4294901760
        %v3995 = vsub.f32 %v345, %v3994
        %3996 = vmatpush.msra.mxu0 %v3995
        %v3997 = vand.u32 %v344, 4294901760
        %v3998 = vsub.f32 %v344, %v3997
        %3999 = vmatpush.msra.mxu0 %v3998
        %v4000 = vand.u32 %v343, 4294901760
        %v4001 = vsub.f32 %v343, %v4000
        %4002 = vmatpush.msra.mxu0 %v4001
        %v4003 = vand.u32 %v342, 4294901760
        %v4004 = vsub.f32 %v342, %v4003
        %4005 = vmatpush.msra.mxu0 %v4004
        %v4006 = vand.u32 %v341, 4294901760
        %v4007 = vsub.f32 %v341, %v4006
        %4008 = vmatpush.msra.mxu0 %v4007
        %v4009 = vand.u32 %v340, 4294901760
        %v4010 = vsub.f32 %v340, %v4009
        %4011 = vmatpush.msra.mxu0 %v4010
        %v4012 = vand.u32 %v339, 4294901760
        %v4013 = vsub.f32 %v339, %v4012
        %4014 = vmatpush.msra.mxu0 %v4013
        %v4015 = vand.u32 %v338, 4294901760
        %v4016 = vsub.f32 %v338, %v4015
        %4017 = vmatpush.msra.mxu0 %v4016
        %v4018 = vand.u32 %v337, 4294901760
        %v4019 = vsub.f32 %v337, %v4018
        %4020 = vmatpush.msra.mxu0 %v4019
        %v4021 = vand.u32 %v336, 4294901760
        %v4022 = vsub.f32 %v336, %v4021
        %4023 = vmatpush.msra.mxu0 %v4022
        %v4024 = vand.u32 %v335, 4294901760
        %v4025 = vsub.f32 %v335, %v4024
        %4026 = vmatpush.msra.mxu0 %v4025
        %v4027 = vand.u32 %v334, 4294901760
        %v4028 = vsub.f32 %v334, %v4027
        %4029 = vmatpush.msra.mxu0 %v4028
        %v4030 = vand.u32 %v168, 4294901760
        %v4031 = vsub.f32 %v168, %v4030
        %4032 = vmatmul.f32.gmra.mxu0 %v4031
        %v4033 = vpop.f32.mrf.mxu0
        %v4034 = vadd.f32 %v3980, %v4033
        %4035 = vdwg.mxu0
        %v4036 = vand.u32 %v349, 4294901760
        %4037 = vmatpush.msra.mxu0 %v4036
        %v4038 = vand.u32 %v348, 4294901760
        %4039 = vmatpush.msra.mxu0 %v4038
        %v4040 = vand.u32 %v347, 4294901760
        %4041 = vmatpush.msra.mxu0 %v4040
        %v4042 = vand.u32 %v346, 4294901760
        %4043 = vmatpush.msra.mxu0 %v4042
        %v4044 = vand.u32 %v345, 4294901760
        %4045 = vmatpush.msra.mxu0 %v4044
        %v4046 = vand.u32 %v344, 4294901760
        %4047 = vmatpush.msra.mxu0 %v4046
        %v4048 = vand.u32 %v343, 4294901760
        %4049 = vmatpush.msra.mxu0 %v4048
        %v4050 = vand.u32 %v342, 4294901760
        %4051 = vmatpush.msra.mxu0 %v4050
        %v4052 = vand.u32 %v341, 4294901760
        %4053 = vmatpush.msra.mxu0 %v4052
        %v4054 = vand.u32 %v340, 4294901760
        %4055 = vmatpush.msra.mxu0 %v4054
        %v4056 = vand.u32 %v339, 4294901760
        %4057 = vmatpush.msra.mxu0 %v4056
        %v4058 = vand.u32 %v338, 4294901760
        %4059 = vmatpush.msra.mxu0 %v4058
        %v4060 = vand.u32 %v337, 4294901760
        %4061 = vmatpush.msra.mxu0 %v4060
        %v4062 = vand.u32 %v336, 4294901760
        %4063 = vmatpush.msra.mxu0 %v4062
        %v4064 = vand.u32 %v335, 4294901760
        %4065 = vmatpush.msra.mxu0 %v4064
        %v4066 = vand.u32 %v334, 4294901760
        %4067 = vmatpush.msra.mxu0 %v4066
        %v4068 = vand.u32 %v168, 4294901760
        %v4069 = vsub.f32 %v168, %v4068
        %v4070 = vand.u32 %v4069, 4294901760
        %4071 = vmatmul.f32.gmra.mxu0 %v4070
        %v4072 = vpop.f32.mrf.mxu0
        %v4073 = vadd.f32 %v4034, %v4072
        %4074 = vdwg.mxu0
        %v4075 = vand.u32 %v349, 4294901760
        %v4076 = vsub.f32 %v349, %v4075
        %v4077 = vand.u32 %v4076, 4294901760
        %4078 = vmatpush.msra.mxu0 %v4077
        %v4079 = vand.u32 %v348, 4294901760
        %v4080 = vsub.f32 %v348, %v4079
        %v4081 = vand.u32 %v4080, 4294901760
        %4082 = vmatpush.msra.mxu0 %v4081
        %v4083 = vand.u32 %v347, 4294901760
        %v4084 = vsub.f32 %v347, %v4083
        %v4085 = vand.u32 %v4084, 4294901760
        %4086 = vmatpush.msra.mxu0 %v4085
        %v4087 = vand.u32 %v346, 4294901760
        %v4088 = vsub.f32 %v346, %v4087
        %v4089 = vand.u32 %v4088, 4294901760
        %4090 = vmatpush.msra.mxu0 %v4089
        %v4091 = vand.u32 %v345, 4294901760
        %v4092 = vsub.f32 %v345, %v4091
        %v4093 = vand.u32 %v4092, 4294901760
        %4094 = vmatpush.msra.mxu0 %v4093
        %v4095 = vand.u32 %v344, 4294901760
        %v4096 = vsub.f32 %v344, %v4095
        %v4097 = vand.u32 %v4096, 4294901760
        %4098 = vmatpush.msra.mxu0 %v4097
        %v4099 = vand.u32 %v343, 4294901760
        %v4100 = vsub.f32 %v343, %v4099
        %v4101 = vand.u32 %v4100, 4294901760
        %4102 = vmatpush.msra.mxu0 %v4101
        %v4103 = vand.u32 %v342, 4294901760
        %v4104 = vsub.f32 %v342, %v4103
        %v4105 = vand.u32 %v4104, 4294901760
        %4106 = vmatpush.msra.mxu0 %v4105
        %v4107 = vand.u32 %v341, 4294901760
        %v4108 = vsub.f32 %v341, %v4107
        %v4109 = vand.u32 %v4108, 4294901760
        %4110 = vmatpush.msra.mxu0 %v4109
        %v4111 = vand.u32 %v340, 4294901760
        %v4112 = vsub.f32 %v340, %v4111
        %v4113 = vand.u32 %v4112, 4294901760
        %4114 = vmatpush.msra.mxu0 %v4113
        %v4115 = vand.u32 %v339, 4294901760
        %v4116 = vsub.f32 %v339, %v4115
        %v4117 = vand.u32 %v4116, 4294901760
        %4118 = vmatpush.msra.mxu0 %v4117
        %v4119 = vand.u32 %v338, 4294901760
        %v4120 = vsub.f32 %v338, %v4119
        %v4121 = vand.u32 %v4120, 4294901760
        %4122 = vmatpush.msra.mxu0 %v4121
        %v4123 = vand.u32 %v337, 4294901760
        %v4124 = vsub.f32 %v337, %v4123
        %v4125 = vand.u32 %v4124, 4294901760
        %4126 = vmatpush.msra.mxu0 %v4125
        %v4127 = vand.u32 %v336, 4294901760
        %v4128 = vsub.f32 %v336, %v4127
        %v4129 = vand.u32 %v4128, 4294901760
        %4130 = vmatpush.msra.mxu0 %v4129
        %v4131 = vand.u32 %v335, 4294901760
        %v4132 = vsub.f32 %v335, %v4131
        %v4133 = vand.u32 %v4132, 4294901760
        %4134 = vmatpush.msra.mxu0 %v4133
        %v4135 = vand.u32 %v334, 4294901760
        %v4136 = vsub.f32 %v334, %v4135
        %v4137 = vand.u32 %v4136, 4294901760
        %4138 = vmatpush.msra.mxu0 %v4137
        %v4139 = vand.u32 %v168, 4294901760
        %4140 = vmatmul.f32.gmra.mxu0 %v4139
        %v4141 = vpop.f32.mrf.mxu0
        %v4142 = vadd.f32 %v4073, %v4141
        %4143 = vdwg.mxu0
        %v4144 = vand.u32 %v349, 4294901760
        %4145 = vmatpush.msra.mxu0 %v4144
        %v4146 = vand.u32 %v348, 4294901760
        %4147 = vmatpush.msra.mxu0 %v4146
        %v4148 = vand.u32 %v347, 4294901760
        %4149 = vmatpush.msra.mxu0 %v4148
        %v4150 = vand.u32 %v346, 4294901760
        %4151 = vmatpush.msra.mxu0 %v4150
        %v4152 = vand.u32 %v345, 4294901760
        %4153 = vmatpush.msra.mxu0 %v4152
        %v4154 = vand.u32 %v344, 4294901760
        %4155 = vmatpush.msra.mxu0 %v4154
        %v4156 = vand.u32 %v343, 4294901760
        %4157 = vmatpush.msra.mxu0 %v4156
        %v4158 = vand.u32 %v342, 4294901760
        %4159 = vmatpush.msra.mxu0 %v4158
        %v4160 = vand.u32 %v341, 4294901760
        %4161 = vmatpush.msra.mxu0 %v4160
        %v4162 = vand.u32 %v340, 4294901760
        %4163 = vmatpush.msra.mxu0 %v4162
        %v4164 = vand.u32 %v339, 4294901760
        %4165 = vmatpush.msra.mxu0 %v4164
        %v4166 = vand.u32 %v338, 4294901760
        %4167 = vmatpush.msra.mxu0 %v4166
        %v4168 = vand.u32 %v337, 4294901760
        %4169 = vmatpush.msra.mxu0 %v4168
        %v4170 = vand.u32 %v336, 4294901760
        %4171 = vmatpush.msra.mxu0 %v4170
        %v4172 = vand.u32 %v335, 4294901760
        %4173 = vmatpush.msra.mxu0 %v4172
        %v4174 = vand.u32 %v334, 4294901760
        %4175 = vmatpush.msra.mxu0 %v4174
        %v4176 = vand.u32 %v168, 4294901760
        %4177 = vmatmul.f32.gmra.mxu0 %v4176
        %v4178 = vpop.f32.mrf.mxu0
        %v4179 = vadd.f32 %v4142, %v4178
        %4180 = vdwg.mxu0
        %v4181 = vand.u32 %v365, 4294901760
        %4182 = vmatpush.msra.mxu0 %v4181
        %v4183 = vand.u32 %v364, 4294901760
        %4184 = vmatpush.msra.mxu0 %v4183
        %v4185 = vand.u32 %v363, 4294901760
        %4186 = vmatpush.msra.mxu0 %v4185
        %v4187 = vand.u32 %v362, 4294901760
        %4188 = vmatpush.msra.mxu0 %v4187
        %v4189 = vand.u32 %v361, 4294901760
        %4190 = vmatpush.msra.mxu0 %v4189
        %v4191 = vand.u32 %v360, 4294901760
        %4192 = vmatpush.msra.mxu0 %v4191
        %v4193 = vand.u32 %v359, 4294901760
        %4194 = vmatpush.msra.mxu0 %v4193
        %v4195 = vand.u32 %v358, 4294901760
        %4196 = vmatpush.msra.mxu0 %v4195
        %v4197 = vand.u32 %v357, 4294901760
        %4198 = vmatpush.msra.mxu0 %v4197
        %v4199 = vand.u32 %v356, 4294901760
        %4200 = vmatpush.msra.mxu0 %v4199
        %v4201 = vand.u32 %v355, 4294901760
        %4202 = vmatpush.msra.mxu0 %v4201
        %v4203 = vand.u32 %v354, 4294901760
        %4204 = vmatpush.msra.mxu0 %v4203
        %v4205 = vand.u32 %v353, 4294901760
        %4206 = vmatpush.msra.mxu0 %v4205
        %v4207 = vand.u32 %v352, 4294901760
        %4208 = vmatpush.msra.mxu0 %v4207
        %v4209 = vand.u32 %v351, 4294901760
        %4210 = vmatpush.msra.mxu0 %v4209
        %v4211 = vand.u32 %v350, 4294901760
        %4212 = vmatpush.msra.mxu0 %v4211
        %v4213 = vand.u32 %v169, 4294901760
        %v4214 = vsub.f32 %v169, %v4213
        %v4215 = vand.u32 %v4214, 4294901760
        %v4216 = vsub.f32 %v4214, %v4215
        %v4217 = vand.u32 %v4216, 4294901760
        %4218 = vmatmul.f32.gmra.mxu0 %v4217
        %v4219 = vpop.f32.mrf.mxu0
        %v4220 = vadd.f32 %v4179, %v4219
        %4221 = vdwg.mxu0
        %v4222 = vand.u32 %v365, 4294901760
        %v4223 = vsub.f32 %v365, %v4222
        %v4224 = vand.u32 %v4223, 4294901760
        %v4225 = vsub.f32 %v4223, %v4224
        %v4226 = vand.u32 %v4225, 4294901760
        %4227 = vmatpush.msra.mxu0 %v4226
        %v4228 = vand.u32 %v364, 4294901760
        %v4229 = vsub.f32 %v364, %v4228
        %v4230 = vand.u32 %v4229, 4294901760
        %v4231 = vsub.f32 %v4229, %v4230
        %v4232 = vand.u32 %v4231, 4294901760
        %4233 = vmatpush.msra.mxu0 %v4232
        %v4234 = vand.u32 %v363, 4294901760
        %v4235 = vsub.f32 %v363, %v4234
        %v4236 = vand.u32 %v4235, 4294901760
        %v4237 = vsub.f32 %v4235, %v4236
        %v4238 = vand.u32 %v4237, 4294901760
        %4239 = vmatpush.msra.mxu0 %v4238
        %v4240 = vand.u32 %v362, 4294901760
        %v4241 = vsub.f32 %v362, %v4240
        %v4242 = vand.u32 %v4241, 4294901760
        %v4243 = vsub.f32 %v4241, %v4242
        %v4244 = vand.u32 %v4243, 4294901760
        %4245 = vmatpush.msra.mxu0 %v4244
        %v4246 = vand.u32 %v361, 4294901760
        %v4247 = vsub.f32 %v361, %v4246
        %v4248 = vand.u32 %v4247, 4294901760
        %v4249 = vsub.f32 %v4247, %v4248
        %v4250 = vand.u32 %v4249, 4294901760
        %4251 = vmatpush.msra.mxu0 %v4250
        %v4252 = vand.u32 %v360, 4294901760
        %v4253 = vsub.f32 %v360, %v4252
        %v4254 = vand.u32 %v4253, 4294901760
        %v4255 = vsub.f32 %v4253, %v4254
        %v4256 = vand.u32 %v4255, 4294901760
        %4257 = vmatpush.msra.mxu0 %v4256
        %v4258 = vand.u32 %v359, 4294901760
        %v4259 = vsub.f32 %v359, %v4258
        %v4260 = vand.u32 %v4259, 4294901760
        %v4261 = vsub.f32 %v4259, %v4260
        %v4262 = vand.u32 %v4261, 4294901760
        %4263 = vmatpush.msra.mxu0 %v4262
        %v4264 = vand.u32 %v358, 4294901760
        %v4265 = vsub.f32 %v358, %v4264
        %v4266 = vand.u32 %v4265, 4294901760
        %v4267 = vsub.f32 %v4265, %v4266
        %v4268 = vand.u32 %v4267, 4294901760
        %4269 = vmatpush.msra.mxu0 %v4268
        %v4270 = vand.u32 %v357, 4294901760
        %v4271 = vsub.f32 %v357, %v4270
        %v4272 = vand.u32 %v4271, 4294901760
        %v4273 = vsub.f32 %v4271, %v4272
        %v4274 = vand.u32 %v4273, 4294901760
        %4275 = vmatpush.msra.mxu0 %v4274
        %v4276 = vand.u32 %v356, 4294901760
        %v4277 = vsub.f32 %v356, %v4276
        %v4278 = vand.u32 %v4277, 4294901760
        %v4279 = vsub.f32 %v4277, %v4278
        %v4280 = vand.u32 %v4279, 4294901760
        %4281 = vmatpush.msra.mxu0 %v4280
        %v4282 = vand.u32 %v355, 4294901760
        %v4283 = vsub.f32 %v355, %v4282
        %v4284 = vand.u32 %v4283, 4294901760
        %v4285 = vsub.f32 %v4283, %v4284
        %v4286 = vand.u32 %v4285, 4294901760
        %4287 = vmatpush.msra.mxu0 %v4286
        %v4288 = vand.u32 %v354, 4294901760
        %v4289 = vsub.f32 %v354, %v4288
        %v4290 = vand.u32 %v4289, 4294901760
        %v4291 = vsub.f32 %v4289, %v4290
        %v4292 = vand.u32 %v4291, 4294901760
        %4293 = vmatpush.msra.mxu0 %v4292
        %v4294 = vand.u32 %v353, 4294901760
        %v4295 = vsub.f32 %v353, %v4294
        %v4296 = vand.u32 %v4295, 4294901760
        %v4297 = vsub.f32 %v4295, %v4296
        %v4298 = vand.u32 %v4297, 4294901760
        %4299 = vmatpush.msra.mxu0 %v4298
        %v4300 = vand.u32 %v352, 4294901760
        %v4301 = vsub.f32 %v352, %v4300
        %v4302 = vand.u32 %v4301, 4294901760
        %v4303 = vsub.f32 %v4301, %v4302
        %v4304 = vand.u32 %v4303, 4294901760
        %4305 = vmatpush.msra.mxu0 %v4304
        %v4306 = vand.u32 %v351, 4294901760
        %v4307 = vsub.f32 %v351, %v4306
        %v4308 = vand.u32 %v4307, 4294901760
        %v4309 = vsub.f32 %v4307, %v4308
        %v4310 = vand.u32 %v4309, 4294901760
        %4311 = vmatpush.msra.mxu0 %v4310
        %v4312 = vand.u32 %v350, 4294901760
        %v4313 = vsub.f32 %v350, %v4312
        %v4314 = vand.u32 %v4313, 4294901760
        %v4315 = vsub.f32 %v4313, %v4314
        %v4316 = vand.u32 %v4315, 4294901760
        %4317 = vmatpush.msra.mxu0 %v4316
        %v4318 = vand.u32 %v169, 4294901760
        %4319 = vmatmul.f32.gmra.mxu0 %v4318
        %v4320 = vpop.f32.mrf.mxu0
        %v4321 = vadd.f32 %v4220, %v4320
        %4322 = vdwg.mxu0
        %v4323 = vand.u32 %v365, 4294901760
        %v4324 = vsub.f32 %v365, %v4323
        %4325 = vmatpush.msra.mxu0 %v4324
        %v4326 = vand.u32 %v364, 4294901760
        %v4327 = vsub.f32 %v364, %v4326
        %4328 = vmatpush.msra.mxu0 %v4327
        %v4329 = vand.u32 %v363, 4294901760
        %v4330 = vsub.f32 %v363, %v4329
        %4331 = vmatpush.msra.mxu0 %v4330
        %v4332 = vand.u32 %v362, 4294901760
        %v4333 = vsub.f32 %v362, %v4332
        %4334 = vmatpush.msra.mxu0 %v4333
        %v4335 = vand.u32 %v361, 4294901760
        %v4336 = vsub.f32 %v361, %v4335
        %4337 = vmatpush.msra.mxu0 %v4336
        %v4338 = vand.u32 %v360, 4294901760
        %v4339 = vsub.f32 %v360, %v4338
        %4340 = vmatpush.msra.mxu0 %v4339
        %v4341 = vand.u32 %v359, 4294901760
        %v4342 = vsub.f32 %v359, %v4341
        %4343 = vmatpush.msra.mxu0 %v4342
        %v4344 = vand.u32 %v358, 4294901760
        %v4345 = vsub.f32 %v358, %v4344
        %4346 = vmatpush.msra.mxu0 %v4345
        %v4347 = vand.u32 %v357, 4294901760
        %v4348 = vsub.f32 %v357, %v4347
        %4349 = vmatpush.msra.mxu0 %v4348
        %v4350 = vand.u32 %v356, 4294901760
        %v4351 = vsub.f32 %v356, %v4350
        %4352 = vmatpush.msra.mxu0 %v4351
        %v4353 = vand.u32 %v355, 4294901760
        %v4354 = vsub.f32 %v355, %v4353
        %4355 = vmatpush.msra.mxu0 %v4354
        %v4356 = vand.u32 %v354, 4294901760
        %v4357 = vsub.f32 %v354, %v4356
        %4358 = vmatpush.msra.mxu0 %v4357
        %v4359 = vand.u32 %v353, 4294901760
        %v4360 = vsub.f32 %v353, %v4359
        %4361 = vmatpush.msra.mxu0 %v4360
        %v4362 = vand.u32 %v352, 4294901760
        %v4363 = vsub.f32 %v352, %v4362
        %4364 = vmatpush.msra.mxu0 %v4363
        %v4365 = vand.u32 %v351, 4294901760
        %v4366 = vsub.f32 %v351, %v4365
        %4367 = vmatpush.msra.mxu0 %v4366
        %v4368 = vand.u32 %v350, 4294901760
        %v4369 = vsub.f32 %v350, %v4368
        %4370 = vmatpush.msra.mxu0 %v4369
        %v4371 = vand.u32 %v169, 4294901760
        %v4372 = vsub.f32 %v169, %v4371
        %4373 = vmatmul.f32.gmra.mxu0 %v4372
        %v4374 = vpop.f32.mrf.mxu0
        %v4375 = vadd.f32 %v4321, %v4374
        %4376 = vdwg.mxu0
        %v4377 = vand.u32 %v365, 4294901760
        %4378 = vmatpush.msra.mxu0 %v4377
        %v4379 = vand.u32 %v364, 4294901760
        %4380 = vmatpush.msra.mxu0 %v4379
        %v4381 = vand.u32 %v363, 4294901760
        %4382 = vmatpush.msra.mxu0 %v4381
        %v4383 = vand.u32 %v362, 4294901760
        %4384 = vmatpush.msra.mxu0 %v4383
        %v4385 = vand.u32 %v361, 4294901760
        %4386 = vmatpush.msra.mxu0 %v4385
        %v4387 = vand.u32 %v360, 4294901760
        %4388 = vmatpush.msra.mxu0 %v4387
        %v4389 = vand.u32 %v359, 4294901760
        %4390 = vmatpush.msra.mxu0 %v4389
        %v4391 = vand.u32 %v358, 4294901760
        %4392 = vmatpush.msra.mxu0 %v4391
        %v4393 = vand.u32 %v357, 4294901760
        %4394 = vmatpush.msra.mxu0 %v4393
        %v4395 = vand.u32 %v356, 4294901760
        %4396 = vmatpush.msra.mxu0 %v4395
        %v4397 = vand.u32 %v355, 4294901760
        %4398 = vmatpush.msra.mxu0 %v4397
        %v4399 = vand.u32 %v354, 4294901760
        %4400 = vmatpush.msra.mxu0 %v4399
        %v4401 = vand.u32 %v353, 4294901760
        %4402 = vmatpush.msra.mxu0 %v4401
        %v4403 = vand.u32 %v352, 4294901760
        %4404 = vmatpush.msra.mxu0 %v4403
        %v4405 = vand.u32 %v351, 4294901760
        %4406 = vmatpush.msra.mxu0 %v4405
        %v4407 = vand.u32 %v350, 4294901760
        %4408 = vmatpush.msra.mxu0 %v4407
        %v4409 = vand.u32 %v169, 4294901760
        %v4410 = vsub.f32 %v169, %v4409
        %v4411 = vand.u32 %v4410, 4294901760
        %4412 = vmatmul.f32.gmra.mxu0 %v4411
        %v4413 = vpop.f32.mrf.mxu0
        %v4414 = vadd.f32 %v4375, %v4413
        %4415 = vdwg.mxu0
        %v4416 = vand.u32 %v365, 4294901760
        %v4417 = vsub.f32 %v365, %v4416
        %v4418 = vand.u32 %v4417, 4294901760
        %4419 = vmatpush.msra.mxu0 %v4418
        %v4420 = vand.u32 %v364, 4294901760
        %v4421 = vsub.f32 %v364, %v4420
        %v4422 = vand.u32 %v4421, 4294901760
        %4423 = vmatpush.msra.mxu0 %v4422
        %v4424 = vand.u32 %v363, 4294901760
        %v4425 = vsub.f32 %v363, %v4424
        %v4426 = vand.u32 %v4425, 4294901760
        %4427 = vmatpush.msra.mxu0 %v4426
        %v4428 = vand.u32 %v362, 4294901760
        %v4429 = vsub.f32 %v362, %v4428
        %v4430 = vand.u32 %v4429, 4294901760
        %4431 = vmatpush.msra.mxu0 %v4430
        %v4432 = vand.u32 %v361, 4294901760
        %v4433 = vsub.f32 %v361, %v4432
        %v4434 = vand.u32 %v4433, 4294901760
        %4435 = vmatpush.msra.mxu0 %v4434
        %v4436 = vand.u32 %v360, 4294901760
        %v4437 = vsub.f32 %v360, %v4436
        %v4438 = vand.u32 %v4437, 4294901760
        %4439 = vmatpush.msra.mxu0 %v4438
        %v4440 = vand.u32 %v359, 4294901760
        %v4441 = vsub.f32 %v359, %v4440
        %v4442 = vand.u32 %v4441, 4294901760
        %4443 = vmatpush.msra.mxu0 %v4442
        %v4444 = vand.u32 %v358, 4294901760
        %v4445 = vsub.f32 %v358, %v4444
        %v4446 = vand.u32 %v4445, 4294901760
        %4447 = vmatpush.msra.mxu0 %v4446
        %v4448 = vand.u32 %v357, 4294901760
        %v4449 = vsub.f32 %v357, %v4448
        %v4450 = vand.u32 %v4449, 4294901760
        %4451 = vmatpush.msra.mxu0 %v4450
        %v4452 = vand.u32 %v356, 4294901760
        %v4453 = vsub.f32 %v356, %v4452
        %v4454 = vand.u32 %v4453, 4294901760
        %4455 = vmatpush.msra.mxu0 %v4454
        %v4456 = vand.u32 %v355, 4294901760
        %v4457 = vsub.f32 %v355, %v4456
        %v4458 = vand.u32 %v4457, 4294901760
        %4459 = vmatpush.msra.mxu0 %v4458
        %v4460 = vand.u32 %v354, 4294901760
        %v4461 = vsub.f32 %v354, %v4460
        %v4462 = vand.u32 %v4461, 4294901760
        %4463 = vmatpush.msra.mxu0 %v4462
        %v4464 = vand.u32 %v353, 4294901760
        %v4465 = vsub.f32 %v353, %v4464
        %v4466 = vand.u32 %v4465, 4294901760
        %4467 = vmatpush.msra.mxu0 %v4466
        %v4468 = vand.u32 %v352, 4294901760
        %v4469 = vsub.f32 %v352, %v4468
        %v4470 = vand.u32 %v4469, 4294901760
        %4471 = vmatpush.msra.mxu0 %v4470
        %v4472 = vand.u32 %v351, 4294901760
        %v4473 = vsub.f32 %v351, %v4472
        %v4474 = vand.u32 %v4473, 4294901760
        %4475 = vmatpush.msra.mxu0 %v4474
        %v4476 = vand.u32 %v350, 4294901760
        %v4477 = vsub.f32 %v350, %v4476
        %v4478 = vand.u32 %v4477, 4294901760
        %4479 = vmatpush.msra.mxu0 %v4478
        %v4480 = vand.u32 %v169, 4294901760
        %4481 = vmatmul.f32.gmra.mxu0 %v4480
        %v4482 = vpop.f32.mrf.mxu0
        %v4483 = vadd.f32 %v4414, %v4482
        %4484 = vdwg.mxu0
        %v4485 = vand.u32 %v365, 4294901760
        %4486 = vmatpush.msra.mxu0 %v4485
        %v4487 = vand.u32 %v364, 4294901760
        %4488 = vmatpush.msra.mxu0 %v4487
        %v4489 = vand.u32 %v363, 4294901760
        %4490 = vmatpush.msra.mxu0 %v4489
        %v4491 = vand.u32 %v362, 4294901760
        %4492 = vmatpush.msra.mxu0 %v4491
        %v4493 = vand.u32 %v361, 4294901760
        %4494 = vmatpush.msra.mxu0 %v4493
        %v4495 = vand.u32 %v360, 4294901760
        %4496 = vmatpush.msra.mxu0 %v4495
        %v4497 = vand.u32 %v359, 4294901760
        %4498 = vmatpush.msra.mxu0 %v4497
        %v4499 = vand.u32 %v358, 4294901760
        %4500 = vmatpush.msra.mxu0 %v4499
        %v4501 = vand.u32 %v357, 4294901760
        %4502 = vmatpush.msra.mxu0 %v4501
        %v4503 = vand.u32 %v356, 4294901760
        %4504 = vmatpush.msra.mxu0 %v4503
        %v4505 = vand.u32 %v355, 4294901760
        %4506 = vmatpush.msra.mxu0 %v4505
        %v4507 = vand.u32 %v354, 4294901760
        %4508 = vmatpush.msra.mxu0 %v4507
        %v4509 = vand.u32 %v353, 4294901760
        %4510 = vmatpush.msra.mxu0 %v4509
        %v4511 = vand.u32 %v352, 4294901760
        %4512 = vmatpush.msra.mxu0 %v4511
        %v4513 = vand.u32 %v351, 4294901760
        %4514 = vmatpush.msra.mxu0 %v4513
        %v4515 = vand.u32 %v350, 4294901760
        %4516 = vmatpush.msra.mxu0 %v4515
        %v4517 = vand.u32 %v169, 4294901760
        %4518 = vmatmul.f32.gmra.mxu0 %v4517
        %v4519 = vpop.f32.mrf.mxu0
        %v4520 = vadd.f32 %v4483, %v4519
        %4521 = vdwg.mxu0
        %v4522 = vand.u32 %v381, 4294901760
        %4523 = vmatpush.msra.mxu0 %v4522
        %v4524 = vand.u32 %v380, 4294901760
        %4525 = vmatpush.msra.mxu0 %v4524
        %v4526 = vand.u32 %v379, 4294901760
        %4527 = vmatpush.msra.mxu0 %v4526
        %v4528 = vand.u32 %v378, 4294901760
        %4529 = vmatpush.msra.mxu0 %v4528
        %v4530 = vand.u32 %v377, 4294901760
        %4531 = vmatpush.msra.mxu0 %v4530
        %v4532 = vand.u32 %v376, 4294901760
        %4533 = vmatpush.msra.mxu0 %v4532
        %v4534 = vand.u32 %v375, 4294901760
        %4535 = vmatpush.msra.mxu0 %v4534
        %v4536 = vand.u32 %v374, 4294901760
        %4537 = vmatpush.msra.mxu0 %v4536
        %v4538 = vand.u32 %v373, 4294901760
        %4539 = vmatpush.msra.mxu0 %v4538
        %v4540 = vand.u32 %v372, 4294901760
        %4541 = vmatpush.msra.mxu0 %v4540
        %v4542 = vand.u32 %v371, 4294901760
        %4543 = vmatpush.msra.mxu0 %v4542
        %v4544 = vand.u32 %v370, 4294901760
        %4545 = vmatpush.msra.mxu0 %v4544
        %v4546 = vand.u32 %v369, 4294901760
        %4547 = vmatpush.msra.mxu0 %v4546
        %v4548 = vand.u32 %v368, 4294901760
        %4549 = vmatpush.msra.mxu0 %v4548
        %v4550 = vand.u32 %v367, 4294901760
        %4551 = vmatpush.msra.mxu0 %v4550
        %v4552 = vand.u32 %v366, 4294901760
        %4553 = vmatpush.msra.mxu0 %v4552
        %v4554 = vand.u32 %v170, 4294901760
        %v4555 = vsub.f32 %v170, %v4554
        %v4556 = vand.u32 %v4555, 4294901760
        %v4557 = vsub.f32 %v4555, %v4556
        %v4558 = vand.u32 %v4557, 4294901760
        %4559 = vmatmul.f32.gmra.mxu0 %v4558
        %v4560 = vpop.f32.mrf.mxu0
        %v4561 = vadd.f32 %v4520, %v4560
        %4562 = vdwg.mxu0
        %v4563 = vand.u32 %v381, 4294901760
        %v4564 = vsub.f32 %v381, %v4563
        %v4565 = vand.u32 %v4564, 4294901760
        %v4566 = vsub.f32 %v4564, %v4565
        %v4567 = vand.u32 %v4566, 4294901760
        %4568 = vmatpush.msra.mxu0 %v4567
        %v4569 = vand.u32 %v380, 4294901760
        %v4570 = vsub.f32 %v380, %v4569
        %v4571 = vand.u32 %v4570, 4294901760
        %v4572 = vsub.f32 %v4570, %v4571
        %v4573 = vand.u32 %v4572, 4294901760
        %4574 = vmatpush.msra.mxu0 %v4573
        %v4575 = vand.u32 %v379, 4294901760
        %v4576 = vsub.f32 %v379, %v4575
        %v4577 = vand.u32 %v4576, 4294901760
        %v4578 = vsub.f32 %v4576, %v4577
        %v4579 = vand.u32 %v4578, 4294901760
        %4580 = vmatpush.msra.mxu0 %v4579
        %v4581 = vand.u32 %v378, 4294901760
        %v4582 = vsub.f32 %v378, %v4581
        %v4583 = vand.u32 %v4582, 4294901760
        %v4584 = vsub.f32 %v4582, %v4583
        %v4585 = vand.u32 %v4584, 4294901760
        %4586 = vmatpush.msra.mxu0 %v4585
        %v4587 = vand.u32 %v377, 4294901760
        %v4588 = vsub.f32 %v377, %v4587
        %v4589 = vand.u32 %v4588, 4294901760
        %v4590 = vsub.f32 %v4588, %v4589
        %v4591 = vand.u32 %v4590, 4294901760
        %4592 = vmatpush.msra.mxu0 %v4591
        %v4593 = vand.u32 %v376, 4294901760
        %v4594 = vsub.f32 %v376, %v4593
        %v4595 = vand.u32 %v4594, 4294901760
        %v4596 = vsub.f32 %v4594, %v4595
        %v4597 = vand.u32 %v4596, 4294901760
        %4598 = vmatpush.msra.mxu0 %v4597
        %v4599 = vand.u32 %v375, 4294901760
        %v4600 = vsub.f32 %v375, %v4599
        %v4601 = vand.u32 %v4600, 4294901760
        %v4602 = vsub.f32 %v4600, %v4601
        %v4603 = vand.u32 %v4602, 4294901760
        %4604 = vmatpush.msra.mxu0 %v4603
        %v4605 = vand.u32 %v374, 4294901760
        %v4606 = vsub.f32 %v374, %v4605
        %v4607 = vand.u32 %v4606, 4294901760
        %v4608 = vsub.f32 %v4606, %v4607
        %v4609 = vand.u32 %v4608, 4294901760
        %4610 = vmatpush.msra.mxu0 %v4609
        %v4611 = vand.u32 %v373, 4294901760
        %v4612 = vsub.f32 %v373, %v4611
        %v4613 = vand.u32 %v4612, 4294901760
        %v4614 = vsub.f32 %v4612, %v4613
        %v4615 = vand.u32 %v4614, 4294901760
        %4616 = vmatpush.msra.mxu0 %v4615
        %v4617 = vand.u32 %v372, 4294901760
        %v4618 = vsub.f32 %v372, %v4617
        %v4619 = vand.u32 %v4618, 4294901760
        %v4620 = vsub.f32 %v4618, %v4619
        %v4621 = vand.u32 %v4620, 4294901760
        %4622 = vmatpush.msra.mxu0 %v4621
        %v4623 = vand.u32 %v371, 4294901760
        %v4624 = vsub.f32 %v371, %v4623
        %v4625 = vand.u32 %v4624, 4294901760
        %v4626 = vsub.f32 %v4624, %v4625
        %v4627 = vand.u32 %v4626, 4294901760
        %4628 = vmatpush.msra.mxu0 %v4627
        %v4629 = vand.u32 %v370, 4294901760
        %v4630 = vsub.f32 %v370, %v4629
        %v4631 = vand.u32 %v4630, 4294901760
        %v4632 = vsub.f32 %v4630, %v4631
        %v4633 = vand.u32 %v4632, 4294901760
        %4634 = vmatpush.msra.mxu0 %v4633
        %v4635 = vand.u32 %v369, 4294901760
        %v4636 = vsub.f32 %v369, %v4635
        %v4637 = vand.u32 %v4636, 4294901760
        %v4638 = vsub.f32 %v4636, %v4637
        %v4639 = vand.u32 %v4638, 4294901760
        %4640 = vmatpush.msra.mxu0 %v4639
        %v4641 = vand.u32 %v368, 4294901760
        %v4642 = vsub.f32 %v368, %v4641
        %v4643 = vand.u32 %v4642, 4294901760
        %v4644 = vsub.f32 %v4642, %v4643
        %v4645 = vand.u32 %v4644, 4294901760
        %4646 = vmatpush.msra.mxu0 %v4645
        %v4647 = vand.u32 %v367, 4294901760
        %v4648 = vsub.f32 %v367, %v4647
        %v4649 = vand.u32 %v4648, 4294901760
        %v4650 = vsub.f32 %v4648, %v4649
        %v4651 = vand.u32 %v4650, 4294901760
        %4652 = vmatpush.msra.mxu0 %v4651
        %v4653 = vand.u32 %v366, 4294901760
        %v4654 = vsub.f32 %v366, %v4653
        %v4655 = vand.u32 %v4654, 4294901760
        %v4656 = vsub.f32 %v4654, %v4655
        %v4657 = vand.u32 %v4656, 4294901760
        %4658 = vmatpush.msra.mxu0 %v4657
        %v4659 = vand.u32 %v170, 4294901760
        %4660 = vmatmul.f32.gmra.mxu0 %v4659
        %v4661 = vpop.f32.mrf.mxu0
        %v4662 = vadd.f32 %v4561, %v4661
        %4663 = vdwg.mxu0
        %v4664 = vand.u32 %v381, 4294901760
        %v4665 = vsub.f32 %v381, %v4664
        %4666 = vmatpush.msra.mxu0 %v4665
        %v4667 = vand.u32 %v380, 4294901760
        %v4668 = vsub.f32 %v380, %v4667
        %4669 = vmatpush.msra.mxu0 %v4668
        %v4670 = vand.u32 %v379, 4294901760
        %v4671 = vsub.f32 %v379, %v4670
        %4672 = vmatpush.msra.mxu0 %v4671
        %v4673 = vand.u32 %v378, 4294901760
        %v4674 = vsub.f32 %v378, %v4673
        %4675 = vmatpush.msra.mxu0 %v4674
        %v4676 = vand.u32 %v377, 4294901760
        %v4677 = vsub.f32 %v377, %v4676
        %4678 = vmatpush.msra.mxu0 %v4677
        %v4679 = vand.u32 %v376, 4294901760
        %v4680 = vsub.f32 %v376, %v4679
        %4681 = vmatpush.msra.mxu0 %v4680
        %v4682 = vand.u32 %v375, 4294901760
        %v4683 = vsub.f32 %v375, %v4682
        %4684 = vmatpush.msra.mxu0 %v4683
        %v4685 = vand.u32 %v374, 4294901760
        %v4686 = vsub.f32 %v374, %v4685
        %4687 = vmatpush.msra.mxu0 %v4686
        %v4688 = vand.u32 %v373, 4294901760
        %v4689 = vsub.f32 %v373, %v4688
        %4690 = vmatpush.msra.mxu0 %v4689
        %v4691 = vand.u32 %v372, 4294901760
        %v4692 = vsub.f32 %v372, %v4691
        %4693 = vmatpush.msra.mxu0 %v4692
        %v4694 = vand.u32 %v371, 4294901760
        %v4695 = vsub.f32 %v371, %v4694
        %4696 = vmatpush.msra.mxu0 %v4695
        %v4697 = vand.u32 %v370, 4294901760
        %v4698 = vsub.f32 %v370, %v4697
        %4699 = vmatpush.msra.mxu0 %v4698
        %v4700 = vand.u32 %v369, 4294901760
        %v4701 = vsub.f32 %v369, %v4700
        %4702 = vmatpush.msra.mxu0 %v4701
        %v4703 = vand.u32 %v368, 4294901760
        %v4704 = vsub.f32 %v368, %v4703
        %4705 = vmatpush.msra.mxu0 %v4704
        %v4706 = vand.u32 %v367, 4294901760
        %v4707 = vsub.f32 %v367, %v4706
        %4708 = vmatpush.msra.mxu0 %v4707
        %v4709 = vand.u32 %v366, 4294901760
        %v4710 = vsub.f32 %v366, %v4709
        %4711 = vmatpush.msra.mxu0 %v4710
        %v4712 = vand.u32 %v170, 4294901760
        %v4713 = vsub.f32 %v170, %v4712
        %4714 = vmatmul.f32.gmra.mxu0 %v4713
        %v4715 = vpop.f32.mrf.mxu0
        %v4716 = vadd.f32 %v4662, %v4715
        %4717 = vdwg.mxu0
        %v4718 = vand.u32 %v381, 4294901760
        %4719 = vmatpush.msra.mxu0 %v4718
        %v4720 = vand.u32 %v380, 4294901760
        %4721 = vmatpush.msra.mxu0 %v4720
        %v4722 = vand.u32 %v379, 4294901760
        %4723 = vmatpush.msra.mxu0 %v4722
        %v4724 = vand.u32 %v378, 4294901760
        %4725 = vmatpush.msra.mxu0 %v4724
        %v4726 = vand.u32 %v377, 4294901760
        %4727 = vmatpush.msra.mxu0 %v4726
        %v4728 = vand.u32 %v376, 4294901760
        %4729 = vmatpush.msra.mxu0 %v4728
        %v4730 = vand.u32 %v375, 4294901760
        %4731 = vmatpush.msra.mxu0 %v4730
        %v4732 = vand.u32 %v374, 4294901760
        %4733 = vmatpush.msra.mxu0 %v4732
        %v4734 = vand.u32 %v373, 4294901760
        %4735 = vmatpush.msra.mxu0 %v4734
        %v4736 = vand.u32 %v372, 4294901760
        %4737 = vmatpush.msra.mxu0 %v4736
        %v4738 = vand.u32 %v371, 4294901760
        %4739 = vmatpush.msra.mxu0 %v4738
        %v4740 = vand.u32 %v370, 4294901760
        %4741 = vmatpush.msra.mxu0 %v4740
        %v4742 = vand.u32 %v369, 4294901760
        %4743 = vmatpush.msra.mxu0 %v4742
        %v4744 = vand.u32 %v368, 4294901760
        %4745 = vmatpush.msra.mxu0 %v4744
        %v4746 = vand.u32 %v367, 4294901760
        %4747 = vmatpush.msra.mxu0 %v4746
        %v4748 = vand.u32 %v366, 4294901760
        %4749 = vmatpush.msra.mxu0 %v4748
        %v4750 = vand.u32 %v170, 4294901760
        %v4751 = vsub.f32 %v170, %v4750
        %v4752 = vand.u32 %v4751, 4294901760
        %4753 = vmatmul.f32.gmra.mxu0 %v4752
        %v4754 = vpop.f32.mrf.mxu0
        %v4755 = vadd.f32 %v4716, %v4754
        %4756 = vdwg.mxu0
        %v4757 = vand.u32 %v381, 4294901760
        %v4758 = vsub.f32 %v381, %v4757
        %v4759 = vand.u32 %v4758, 4294901760
        %4760 = vmatpush.msra.mxu0 %v4759
        %v4761 = vand.u32 %v380, 4294901760
        %v4762 = vsub.f32 %v380, %v4761
        %v4763 = vand.u32 %v4762, 4294901760
        %4764 = vmatpush.msra.mxu0 %v4763
        %v4765 = vand.u32 %v379, 4294901760
        %v4766 = vsub.f32 %v379, %v4765
        %v4767 = vand.u32 %v4766, 4294901760
        %4768 = vmatpush.msra.mxu0 %v4767
        %v4769 = vand.u32 %v378, 4294901760
        %v4770 = vsub.f32 %v378, %v4769
        %v4771 = vand.u32 %v4770, 4294901760
        %4772 = vmatpush.msra.mxu0 %v4771
        %v4773 = vand.u32 %v377, 4294901760
        %v4774 = vsub.f32 %v377, %v4773
        %v4775 = vand.u32 %v4774, 4294901760
        %4776 = vmatpush.msra.mxu0 %v4775
        %v4777 = vand.u32 %v376, 4294901760
        %v4778 = vsub.f32 %v376, %v4777
        %v4779 = vand.u32 %v4778, 4294901760
        %4780 = vmatpush.msra.mxu0 %v4779
        %v4781 = vand.u32 %v375, 4294901760
        %v4782 = vsub.f32 %v375, %v4781
        %v4783 = vand.u32 %v4782, 4294901760
        %4784 = vmatpush.msra.mxu0 %v4783
        %v4785 = vand.u32 %v374, 4294901760
        %v4786 = vsub.f32 %v374, %v4785
        %v4787 = vand.u32 %v4786, 4294901760
        %4788 = vmatpush.msra.mxu0 %v4787
        %v4789 = vand.u32 %v373, 4294901760
        %v4790 = vsub.f32 %v373, %v4789
        %v4791 = vand.u32 %v4790, 4294901760
        %4792 = vmatpush.msra.mxu0 %v4791
        %v4793 = vand.u32 %v372, 4294901760
        %v4794 = vsub.f32 %v372, %v4793
        %v4795 = vand.u32 %v4794, 4294901760
        %4796 = vmatpush.msra.mxu0 %v4795
        %v4797 = vand.u32 %v371, 4294901760
        %v4798 = vsub.f32 %v371, %v4797
        %v4799 = vand.u32 %v4798, 4294901760
        %4800 = vmatpush.msra.mxu0 %v4799
        %v4801 = vand.u32 %v370, 4294901760
        %v4802 = vsub.f32 %v370, %v4801
        %v4803 = vand.u32 %v4802, 4294901760
        %4804 = vmatpush.msra.mxu0 %v4803
        %v4805 = vand.u32 %v369, 4294901760
        %v4806 = vsub.f32 %v369, %v4805
        %v4807 = vand.u32 %v4806, 4294901760
        %4808 = vmatpush.msra.mxu0 %v4807
        %v4809 = vand.u32 %v368, 4294901760
        %v4810 = vsub.f32 %v368, %v4809
        %v4811 = vand.u32 %v4810, 4294901760
        %4812 = vmatpush.msra.mxu0 %v4811
        %v4813 = vand.u32 %v367, 4294901760
        %v4814 = vsub.f32 %v367, %v4813
        %v4815 = vand.u32 %v4814, 4294901760
        %4816 = vmatpush.msra.mxu0 %v4815
        %v4817 = vand.u32 %v366, 4294901760
        %v4818 = vsub.f32 %v366, %v4817
        %v4819 = vand.u32 %v4818, 4294901760
        %4820 = vmatpush.msra.mxu0 %v4819
        %v4821 = vand.u32 %v170, 4294901760
        %4822 = vmatmul.f32.gmra.mxu0 %v4821
        %v4823 = vpop.f32.mrf.mxu0
        %v4824 = vadd.f32 %v4755, %v4823
        %4825 = vdwg.mxu0
        %v4826 = vand.u32 %v381, 4294901760
        %4827 = vmatpush.msra.mxu0 %v4826
        %v4828 = vand.u32 %v380, 4294901760
        %4829 = vmatpush.msra.mxu0 %v4828
        %v4830 = vand.u32 %v379, 4294901760
        %4831 = vmatpush.msra.mxu0 %v4830
        %v4832 = vand.u32 %v378, 4294901760
        %4833 = vmatpush.msra.mxu0 %v4832
        %v4834 = vand.u32 %v377, 4294901760
        %4835 = vmatpush.msra.mxu0 %v4834
        %v4836 = vand.u32 %v376, 4294901760
        %4837 = vmatpush.msra.mxu0 %v4836
        %v4838 = vand.u32 %v375, 4294901760
        %4839 = vmatpush.msra.mxu0 %v4838
        %v4840 = vand.u32 %v374, 4294901760
        %4841 = vmatpush.msra.mxu0 %v4840
        %v4842 = vand.u32 %v373, 4294901760
        %4843 = vmatpush.msra.mxu0 %v4842
        %v4844 = vand.u32 %v372, 4294901760
        %4845 = vmatpush.msra.mxu0 %v4844
        %v4846 = vand.u32 %v371, 4294901760
        %4847 = vmatpush.msra.mxu0 %v4846
        %v4848 = vand.u32 %v370, 4294901760
        %4849 = vmatpush.msra.mxu0 %v4848
        %v4850 = vand.u32 %v369, 4294901760
        %4851 = vmatpush.msra.mxu0 %v4850
        %v4852 = vand.u32 %v368, 4294901760
        %4853 = vmatpush.msra.mxu0 %v4852
        %v4854 = vand.u32 %v367, 4294901760
        %4855 = vmatpush.msra.mxu0 %v4854
        %v4856 = vand.u32 %v366, 4294901760
        %4857 = vmatpush.msra.mxu0 %v4856
        %v4858 = vand.u32 %v170, 4294901760
        %4859 = vmatmul.f32.gmra.mxu0 %v4858
        %v4860 = vpop.f32.mrf.mxu0
        %v4861 = vadd.f32 %v4824, %v4860
        %4862 = vdwg.mxu0
        %v4863 = vand.u32 %v397, 4294901760
        %4864 = vmatpush.msra.mxu0 %v4863
        %v4865 = vand.u32 %v396, 4294901760
        %4866 = vmatpush.msra.mxu0 %v4865
        %v4867 = vand.u32 %v395, 4294901760
        %4868 = vmatpush.msra.mxu0 %v4867
        %v4869 = vand.u32 %v394, 4294901760
        %4870 = vmatpush.msra.mxu0 %v4869
        %v4871 = vand.u32 %v393, 4294901760
        %4872 = vmatpush.msra.mxu0 %v4871
        %v4873 = vand.u32 %v392, 4294901760
        %4874 = vmatpush.msra.mxu0 %v4873
        %v4875 = vand.u32 %v391, 4294901760
        %4876 = vmatpush.msra.mxu0 %v4875
        %v4877 = vand.u32 %v390, 4294901760
        %4878 = vmatpush.msra.mxu0 %v4877
        %v4879 = vand.u32 %v389, 4294901760
        %4880 = vmatpush.msra.mxu0 %v4879
        %v4881 = vand.u32 %v388, 4294901760
        %4882 = vmatpush.msra.mxu0 %v4881
        %v4883 = vand.u32 %v387, 4294901760
        %4884 = vmatpush.msra.mxu0 %v4883
        %v4885 = vand.u32 %v386, 4294901760
        %4886 = vmatpush.msra.mxu0 %v4885
        %v4887 = vand.u32 %v385, 4294901760
        %4888 = vmatpush.msra.mxu0 %v4887
        %v4889 = vand.u32 %v384, 4294901760
        %4890 = vmatpush.msra.mxu0 %v4889
        %v4891 = vand.u32 %v383, 4294901760
        %4892 = vmatpush.msra.mxu0 %v4891
        %v4893 = vand.u32 %v382, 4294901760
        %4894 = vmatpush.msra.mxu0 %v4893
        %v4895 = vand.u32 %v171, 4294901760
        %v4896 = vsub.f32 %v171, %v4895
        %v4897 = vand.u32 %v4896, 4294901760
        %v4898 = vsub.f32 %v4896, %v4897
        %v4899 = vand.u32 %v4898, 4294901760
        %4900 = vmatmul.f32.gmra.mxu0 %v4899
        %v4901 = vpop.f32.mrf.mxu0
        %v4902 = vadd.f32 %v4861, %v4901
        %4903 = vdwg.mxu0
        %v4904 = vand.u32 %v397, 4294901760
        %v4905 = vsub.f32 %v397, %v4904
        %v4906 = vand.u32 %v4905, 4294901760
        %v4907 = vsub.f32 %v4905, %v4906
        %v4908 = vand.u32 %v4907, 4294901760
        %4909 = vmatpush.msra.mxu0 %v4908
        %v4910 = vand.u32 %v396, 4294901760
        %v4911 = vsub.f32 %v396, %v4910
        %v4912 = vand.u32 %v4911, 4294901760
        %v4913 = vsub.f32 %v4911, %v4912
        %v4914 = vand.u32 %v4913, 4294901760
        %4915 = vmatpush.msra.mxu0 %v4914
        %v4916 = vand.u32 %v395, 4294901760
        %v4917 = vsub.f32 %v395, %v4916
        %v4918 = vand.u32 %v4917, 4294901760
        %v4919 = vsub.f32 %v4917, %v4918
        %v4920 = vand.u32 %v4919, 4294901760
        %4921 = vmatpush.msra.mxu0 %v4920
        %v4922 = vand.u32 %v394, 4294901760
        %v4923 = vsub.f32 %v394, %v4922
        %v4924 = vand.u32 %v4923, 4294901760
        %v4925 = vsub.f32 %v4923, %v4924
        %v4926 = vand.u32 %v4925, 4294901760
        %4927 = vmatpush.msra.mxu0 %v4926
        %v4928 = vand.u32 %v393, 4294901760
        %v4929 = vsub.f32 %v393, %v4928
        %v4930 = vand.u32 %v4929, 4294901760
        %v4931 = vsub.f32 %v4929, %v4930
        %v4932 = vand.u32 %v4931, 4294901760
        %4933 = vmatpush.msra.mxu0 %v4932
        %v4934 = vand.u32 %v392, 4294901760
        %v4935 = vsub.f32 %v392, %v4934
        %v4936 = vand.u32 %v4935, 4294901760
        %v4937 = vsub.f32 %v4935, %v4936
        %v4938 = vand.u32 %v4937, 4294901760
        %4939 = vmatpush.msra.mxu0 %v4938
        %v4940 = vand.u32 %v391, 4294901760
        %v4941 = vsub.f32 %v391, %v4940
        %v4942 = vand.u32 %v4941, 4294901760
        %v4943 = vsub.f32 %v4941, %v4942
        %v4944 = vand.u32 %v4943, 4294901760
        %4945 = vmatpush.msra.mxu0 %v4944
        %v4946 = vand.u32 %v390, 4294901760
        %v4947 = vsub.f32 %v390, %v4946
        %v4948 = vand.u32 %v4947, 4294901760
        %v4949 = vsub.f32 %v4947, %v4948
        %v4950 = vand.u32 %v4949, 4294901760
        %4951 = vmatpush.msra.mxu0 %v4950
        %v4952 = vand.u32 %v389, 4294901760
        %v4953 = vsub.f32 %v389, %v4952
        %v4954 = vand.u32 %v4953, 4294901760
        %v4955 = vsub.f32 %v4953, %v4954
        %v4956 = vand.u32 %v4955, 4294901760
        %4957 = vmatpush.msra.mxu0 %v4956
        %v4958 = vand.u32 %v388, 4294901760
        %v4959 = vsub.f32 %v388, %v4958
        %v4960 = vand.u32 %v4959, 4294901760
        %v4961 = vsub.f32 %v4959, %v4960
        %v4962 = vand.u32 %v4961, 4294901760
        %4963 = vmatpush.msra.mxu0 %v4962
        %v4964 = vand.u32 %v387, 4294901760
        %v4965 = vsub.f32 %v387, %v4964
        %v4966 = vand.u32 %v4965, 4294901760
        %v4967 = vsub.f32 %v4965, %v4966
        %v4968 = vand.u32 %v4967, 4294901760
        %4969 = vmatpush.msra.mxu0 %v4968
        %v4970 = vand.u32 %v386, 4294901760
        %v4971 = vsub.f32 %v386, %v4970
        %v4972 = vand.u32 %v4971, 4294901760
        %v4973 = vsub.f32 %v4971, %v4972
        %v4974 = vand.u32 %v4973, 4294901760
        %4975 = vmatpush.msra.mxu0 %v4974
        %v4976 = vand.u32 %v385, 4294901760
        %v4977 = vsub.f32 %v385, %v4976
        %v4978 = vand.u32 %v4977, 4294901760
        %v4979 = vsub.f32 %v4977, %v4978
        %v4980 = vand.u32 %v4979, 4294901760
        %4981 = vmatpush.msra.mxu0 %v4980
        %v4982 = vand.u32 %v384, 4294901760
        %v4983 = vsub.f32 %v384, %v4982
        %v4984 = vand.u32 %v4983, 4294901760
        %v4985 = vsub.f32 %v4983, %v4984
        %v4986 = vand.u32 %v4985, 4294901760
        %4987 = vmatpush.msra.mxu0 %v4986
        %v4988 = vand.u32 %v383, 4294901760
        %v4989 = vsub.f32 %v383, %v4988
        %v4990 = vand.u32 %v4989, 4294901760
        %v4991 = vsub.f32 %v4989, %v4990
        %v4992 = vand.u32 %v4991, 4294901760
        %4993 = vmatpush.msra.mxu0 %v4992
        %v4994 = vand.u32 %v382, 4294901760
        %v4995 = vsub.f32 %v382, %v4994
        %v4996 = vand.u32 %v4995, 4294901760
        %v4997 = vsub.f32 %v4995, %v4996
        %v4998 = vand.u32 %v4997, 4294901760
        %4999 = vmatpush.msra.mxu0 %v4998
        %v5000 = vand.u32 %v171, 4294901760
        %5001 = vmatmul.f32.gmra.mxu0 %v5000
        %v5002 = vpop.f32.mrf.mxu0
        %v5003 = vadd.f32 %v4902, %v5002
        %5004 = vdwg.mxu0
        %v5005 = vand.u32 %v397, 4294901760
        %v5006 = vsub.f32 %v397, %v5005
        %5007 = vmatpush.msra.mxu0 %v5006
        %v5008 = vand.u32 %v396, 4294901760
        %v5009 = vsub.f32 %v396, %v5008
        %5010 = vmatpush.msra.mxu0 %v5009
        %v5011 = vand.u32 %v395, 4294901760
        %v5012 = vsub.f32 %v395, %v5011
        %5013 = vmatpush.msra.mxu0 %v5012
        %v5014 = vand.u32 %v394, 4294901760
        %v5015 = vsub.f32 %v394, %v5014
        %5016 = vmatpush.msra.mxu0 %v5015
        %v5017 = vand.u32 %v393, 4294901760
        %v5018 = vsub.f32 %v393, %v5017
        %5019 = vmatpush.msra.mxu0 %v5018
        %v5020 = vand.u32 %v392, 4294901760
        %v5021 = vsub.f32 %v392, %v5020
        %5022 = vmatpush.msra.mxu0 %v5021
        %v5023 = vand.u32 %v391, 4294901760
        %v5024 = vsub.f32 %v391, %v5023
        %5025 = vmatpush.msra.mxu0 %v5024
        %v5026 = vand.u32 %v390, 4294901760
        %v5027 = vsub.f32 %v390, %v5026
        %5028 = vmatpush.msra.mxu0 %v5027
        %v5029 = vand.u32 %v389, 4294901760
        %v5030 = vsub.f32 %v389, %v5029
        %5031 = vmatpush.msra.mxu0 %v5030
        %v5032 = vand.u32 %v388, 4294901760
        %v5033 = vsub.f32 %v388, %v5032
        %5034 = vmatpush.msra.mxu0 %v5033
        %v5035 = vand.u32 %v387, 4294901760
        %v5036 = vsub.f32 %v387, %v5035
        %5037 = vmatpush.msra.mxu0 %v5036
        %v5038 = vand.u32 %v386, 4294901760
        %v5039 = vsub.f32 %v386, %v5038
        %5040 = vmatpush.msra.mxu0 %v5039
        %v5041 = vand.u32 %v385, 4294901760
        %v5042 = vsub.f32 %v385, %v5041
        %5043 = vmatpush.msra.mxu0 %v5042
        %v5044 = vand.u32 %v384, 4294901760
        %v5045 = vsub.f32 %v384, %v5044
        %5046 = vmatpush.msra.mxu0 %v5045
        %v5047 = vand.u32 %v383, 4294901760
        %v5048 = vsub.f32 %v383, %v5047
        %5049 = vmatpush.msra.mxu0 %v5048
        %v5050 = vand.u32 %v382, 4294901760
        %v5051 = vsub.f32 %v382, %v5050
        %5052 = vmatpush.msra.mxu0 %v5051
        %v5053 = vand.u32 %v171, 4294901760
        %v5054 = vsub.f32 %v171, %v5053
        %5055 = vmatmul.f32.gmra.mxu0 %v5054
        %v5056 = vpop.f32.mrf.mxu0
        %v5057 = vadd.f32 %v5003, %v5056
        %5058 = vdwg.mxu0
        %v5059 = vand.u32 %v397, 4294901760
        %5060 = vmatpush.msra.mxu0 %v5059
        %v5061 = vand.u32 %v396, 4294901760
        %5062 = vmatpush.msra.mxu0 %v5061
        %v5063 = vand.u32 %v395, 4294901760
        %5064 = vmatpush.msra.mxu0 %v5063
        %v5065 = vand.u32 %v394, 4294901760
        %5066 = vmatpush.msra.mxu0 %v5065
        %v5067 = vand.u32 %v393, 4294901760
        %5068 = vmatpush.msra.mxu0 %v5067
        %v5069 = vand.u32 %v392, 4294901760
        %5070 = vmatpush.msra.mxu0 %v5069
        %v5071 = vand.u32 %v391, 4294901760
        %5072 = vmatpush.msra.mxu0 %v5071
        %v5073 = vand.u32 %v390, 4294901760
        %5074 = vmatpush.msra.mxu0 %v5073
        %v5075 = vand.u32 %v389, 4294901760
        %5076 = vmatpush.msra.mxu0 %v5075
        %v5077 = vand.u32 %v388, 4294901760
        %5078 = vmatpush.msra.mxu0 %v5077
        %v5079 = vand.u32 %v387, 4294901760
        %5080 = vmatpush.msra.mxu0 %v5079
        %v5081 = vand.u32 %v386, 4294901760
        %5082 = vmatpush.msra.mxu0 %v5081
        %v5083 = vand.u32 %v385, 4294901760
        %5084 = vmatpush.msra.mxu0 %v5083
        %v5085 = vand.u32 %v384, 4294901760
        %5086 = vmatpush.msra.mxu0 %v5085
        %v5087 = vand.u32 %v383, 4294901760
        %5088 = vmatpush.msra.mxu0 %v5087
        %v5089 = vand.u32 %v382, 4294901760
        %5090 = vmatpush.msra.mxu0 %v5089
        %v5091 = vand.u32 %v171, 4294901760
        %v5092 = vsub.f32 %v171, %v5091
        %v5093 = vand.u32 %v5092, 4294901760
        %5094 = vmatmul.f32.gmra.mxu0 %v5093
        %v5095 = vpop.f32.mrf.mxu0
        %v5096 = vadd.f32 %v5057, %v5095
        %5097 = vdwg.mxu0
        %v5098 = vand.u32 %v397, 4294901760
        %v5099 = vsub.f32 %v397, %v5098
        %v5100 = vand.u32 %v5099, 4294901760
        %5101 = vmatpush.msra.mxu0 %v5100
        %v5102 = vand.u32 %v396, 4294901760
        %v5103 = vsub.f32 %v396, %v5102
        %v5104 = vand.u32 %v5103, 4294901760
        %5105 = vmatpush.msra.mxu0 %v5104
        %v5106 = vand.u32 %v395, 4294901760
        %v5107 = vsub.f32 %v395, %v5106
        %v5108 = vand.u32 %v5107, 4294901760
        %5109 = vmatpush.msra.mxu0 %v5108
        %v5110 = vand.u32 %v394, 4294901760
        %v5111 = vsub.f32 %v394, %v5110
        %v5112 = vand.u32 %v5111, 4294901760
        %5113 = vmatpush.msra.mxu0 %v5112
        %v5114 = vand.u32 %v393, 4294901760
        %v5115 = vsub.f32 %v393, %v5114
        %v5116 = vand.u32 %v5115, 4294901760
        %5117 = vmatpush.msra.mxu0 %v5116
        %v5118 = vand.u32 %v392, 4294901760
        %v5119 = vsub.f32 %v392, %v5118
        %v5120 = vand.u32 %v5119, 4294901760
        %5121 = vmatpush.msra.mxu0 %v5120
        %v5122 = vand.u32 %v391, 4294901760
        %v5123 = vsub.f32 %v391, %v5122
        %v5124 = vand.u32 %v5123, 4294901760
        %5125 = vmatpush.msra.mxu0 %v5124
        %v5126 = vand.u32 %v390, 4294901760
        %v5127 = vsub.f32 %v390, %v5126
        %v5128 = vand.u32 %v5127, 4294901760
        %5129 = vmatpush.msra.mxu0 %v5128
        %v5130 = vand.u32 %v389, 4294901760
        %v5131 = vsub.f32 %v389, %v5130
        %v5132 = vand.u32 %v5131, 4294901760
        %5133 = vmatpush.msra.mxu0 %v5132
        %v5134 = vand.u32 %v388, 4294901760
        %v5135 = vsub.f32 %v388, %v5134
        %v5136 = vand.u32 %v5135, 4294901760
        %5137 = vmatpush.msra.mxu0 %v5136
        %v5138 = vand.u32 %v387, 4294901760
        %v5139 = vsub.f32 %v387, %v5138
        %v5140 = vand.u32 %v5139, 4294901760
        %5141 = vmatpush.msra.mxu0 %v5140
        %v5142 = vand.u32 %v386, 4294901760
        %v5143 = vsub.f32 %v386, %v5142
        %v5144 = vand.u32 %v5143, 4294901760
        %5145 = vmatpush.msra.mxu0 %v5144
        %v5146 = vand.u32 %v385, 4294901760
        %v5147 = vsub.f32 %v385, %v5146
        %v5148 = vand.u32 %v5147, 4294901760
        %5149 = vmatpush.msra.mxu0 %v5148
        %v5150 = vand.u32 %v384, 4294901760
        %v5151 = vsub.f32 %v384, %v5150
        %v5152 = vand.u32 %v5151, 4294901760
        %5153 = vmatpush.msra.mxu0 %v5152
        %v5154 = vand.u32 %v383, 4294901760
        %v5155 = vsub.f32 %v383, %v5154
        %v5156 = vand.u32 %v5155, 4294901760
        %5157 = vmatpush.msra.mxu0 %v5156
        %v5158 = vand.u32 %v382, 4294901760
        %v5159 = vsub.f32 %v382, %v5158
        %v5160 = vand.u32 %v5159, 4294901760
        %5161 = vmatpush.msra.mxu0 %v5160
        %v5162 = vand.u32 %v171, 4294901760
        %5163 = vmatmul.f32.gmra.mxu0 %v5162
        %v5164 = vpop.f32.mrf.mxu0
        %v5165 = vadd.f32 %v5096, %v5164
        %5166 = vdwg.mxu0
        %v5167 = vand.u32 %v397, 4294901760
        %5168 = vmatpush.msra.mxu0 %v5167
        %v5169 = vand.u32 %v396, 4294901760
        %5170 = vmatpush.msra.mxu0 %v5169
        %v5171 = vand.u32 %v395, 4294901760
        %5172 = vmatpush.msra.mxu0 %v5171
        %v5173 = vand.u32 %v394, 4294901760
        %5174 = vmatpush.msra.mxu0 %v5173
        %v5175 = vand.u32 %v393, 4294901760
        %5176 = vmatpush.msra.mxu0 %v5175
        %v5177 = vand.u32 %v392, 4294901760
        %5178 = vmatpush.msra.mxu0 %v5177
        %v5179 = vand.u32 %v391, 4294901760
        %5180 = vmatpush.msra.mxu0 %v5179
        %v5181 = vand.u32 %v390, 4294901760
        %5182 = vmatpush.msra.mxu0 %v5181
        %v5183 = vand.u32 %v389, 4294901760
        %5184 = vmatpush.msra.mxu0 %v5183
        %v5185 = vand.u32 %v388, 4294901760
        %5186 = vmatpush.msra.mxu0 %v5185
        %v5187 = vand.u32 %v387, 4294901760
        %5188 = vmatpush.msra.mxu0 %v5187
        %v5189 = vand.u32 %v386, 4294901760
        %5190 = vmatpush.msra.mxu0 %v5189
        %v5191 = vand.u32 %v385, 4294901760
        %5192 = vmatpush.msra.mxu0 %v5191
        %v5193 = vand.u32 %v384, 4294901760
        %5194 = vmatpush.msra.mxu0 %v5193
        %v5195 = vand.u32 %v383, 4294901760
        %5196 = vmatpush.msra.mxu0 %v5195
        %v5197 = vand.u32 %v382, 4294901760
        %5198 = vmatpush.msra.mxu0 %v5197
        %v5199 = vand.u32 %v171, 4294901760
        %5200 = vmatmul.f32.gmra.mxu0 %v5199
        %v5201 = vpop.f32.mrf.mxu0
        %v5202 = vadd.f32 %v5165, %v5201
        %5203 = vdwg.mxu0
        %v5204 = vand.u32 %v413, 4294901760
        %5205 = vmatpush.msra.mxu0 %v5204
        %v5206 = vand.u32 %v412, 4294901760
        %5207 = vmatpush.msra.mxu0 %v5206
        %v5208 = vand.u32 %v411, 4294901760
        %5209 = vmatpush.msra.mxu0 %v5208
        %v5210 = vand.u32 %v410, 4294901760
        %5211 = vmatpush.msra.mxu0 %v5210
        %v5212 = vand.u32 %v409, 4294901760
        %5213 = vmatpush.msra.mxu0 %v5212
        %v5214 = vand.u32 %v408, 4294901760
        %5215 = vmatpush.msra.mxu0 %v5214
        %v5216 = vand.u32 %v407, 4294901760
        %5217 = vmatpush.msra.mxu0 %v5216
        %v5218 = vand.u32 %v406, 4294901760
        %5219 = vmatpush.msra.mxu0 %v5218
        %v5220 = vand.u32 %v405, 4294901760
        %5221 = vmatpush.msra.mxu0 %v5220
        %v5222 = vand.u32 %v404, 4294901760
        %5223 = vmatpush.msra.mxu0 %v5222
        %v5224 = vand.u32 %v403, 4294901760
        %5225 = vmatpush.msra.mxu0 %v5224
        %v5226 = vand.u32 %v402, 4294901760
        %5227 = vmatpush.msra.mxu0 %v5226
        %v5228 = vand.u32 %v401, 4294901760
        %5229 = vmatpush.msra.mxu0 %v5228
        %v5230 = vand.u32 %v400, 4294901760
        %5231 = vmatpush.msra.mxu0 %v5230
        %v5232 = vand.u32 %v399, 4294901760
        %5233 = vmatpush.msra.mxu0 %v5232
        %v5234 = vand.u32 %v398, 4294901760
        %5235 = vmatpush.msra.mxu0 %v5234
        %v5236 = vand.u32 %v172, 4294901760
        %v5237 = vsub.f32 %v172, %v5236
        %v5238 = vand.u32 %v5237, 4294901760
        %v5239 = vsub.f32 %v5237, %v5238
        %v5240 = vand.u32 %v5239, 4294901760
        %5241 = vmatmul.f32.gmra.mxu0 %v5240
        %v5242 = vpop.f32.mrf.mxu0
        %v5243 = vadd.f32 %v5202, %v5242
        %5244 = vdwg.mxu0
        %v5245 = vand.u32 %v413, 4294901760
        %v5246 = vsub.f32 %v413, %v5245
        %v5247 = vand.u32 %v5246, 4294901760
        %v5248 = vsub.f32 %v5246, %v5247
        %v5249 = vand.u32 %v5248, 4294901760
        %5250 = vmatpush.msra.mxu0 %v5249
        %v5251 = vand.u32 %v412, 4294901760
        %v5252 = vsub.f32 %v412, %v5251
        %v5253 = vand.u32 %v5252, 4294901760
        %v5254 = vsub.f32 %v5252, %v5253
        %v5255 = vand.u32 %v5254, 4294901760
        %5256 = vmatpush.msra.mxu0 %v5255
        %v5257 = vand.u32 %v411, 4294901760
        %v5258 = vsub.f32 %v411, %v5257
        %v5259 = vand.u32 %v5258, 4294901760
        %v5260 = vsub.f32 %v5258, %v5259
        %v5261 = vand.u32 %v5260, 4294901760
        %5262 = vmatpush.msra.mxu0 %v5261
        %v5263 = vand.u32 %v410, 4294901760
        %v5264 = vsub.f32 %v410, %v5263
        %v5265 = vand.u32 %v5264, 4294901760
        %v5266 = vsub.f32 %v5264, %v5265
        %v5267 = vand.u32 %v5266, 4294901760
        %5268 = vmatpush.msra.mxu0 %v5267
        %v5269 = vand.u32 %v409, 4294901760
        %v5270 = vsub.f32 %v409, %v5269
        %v5271 = vand.u32 %v5270, 4294901760
        %v5272 = vsub.f32 %v5270, %v5271
        %v5273 = vand.u32 %v5272, 4294901760
        %5274 = vmatpush.msra.mxu0 %v5273
        %v5275 = vand.u32 %v408, 4294901760
        %v5276 = vsub.f32 %v408, %v5275
        %v5277 = vand.u32 %v5276, 4294901760
        %v5278 = vsub.f32 %v5276, %v5277
        %v5279 = vand.u32 %v5278, 4294901760
        %5280 = vmatpush.msra.mxu0 %v5279
        %v5281 = vand.u32 %v407, 4294901760
        %v5282 = vsub.f32 %v407, %v5281
        %v5283 = vand.u32 %v5282, 4294901760
        %v5284 = vsub.f32 %v5282, %v5283
        %v5285 = vand.u32 %v5284, 4294901760
        %5286 = vmatpush.msra.mxu0 %v5285
        %v5287 = vand.u32 %v406, 4294901760
        %v5288 = vsub.f32 %v406, %v5287
        %v5289 = vand.u32 %v5288, 4294901760
        %v5290 = vsub.f32 %v5288, %v5289
        %v5291 = vand.u32 %v5290, 4294901760
        %5292 = vmatpush.msra.mxu0 %v5291
        %v5293 = vand.u32 %v405, 4294901760
        %v5294 = vsub.f32 %v405, %v5293
        %v5295 = vand.u32 %v5294, 4294901760
        %v5296 = vsub.f32 %v5294, %v5295
        %v5297 = vand.u32 %v5296, 4294901760
        %5298 = vmatpush.msra.mxu0 %v5297
        %v5299 = vand.u32 %v404, 4294901760
        %v5300 = vsub.f32 %v404, %v5299
        %v5301 = vand.u32 %v5300, 4294901760
        %v5302 = vsub.f32 %v5300, %v5301
        %v5303 = vand.u32 %v5302, 4294901760
        %5304 = vmatpush.msra.mxu0 %v5303
        %v5305 = vand.u32 %v403, 4294901760
        %v5306 = vsub.f32 %v403, %v5305
        %v5307 = vand.u32 %v5306, 4294901760
        %v5308 = vsub.f32 %v5306, %v5307
        %v5309 = vand.u32 %v5308, 4294901760
        %5310 = vmatpush.msra.mxu0 %v5309
        %v5311 = vand.u32 %v402, 4294901760
        %v5312 = vsub.f32 %v402, %v5311
        %v5313 = vand.u32 %v5312, 4294901760
        %v5314 = vsub.f32 %v5312, %v5313
        %v5315 = vand.u32 %v5314, 4294901760
        %5316 = vmatpush.msra.mxu0 %v5315
        %v5317 = vand.u32 %v401, 4294901760
        %v5318 = vsub.f32 %v401, %v5317
        %v5319 = vand.u32 %v5318, 4294901760
        %v5320 = vsub.f32 %v5318, %v5319
        %v5321 = vand.u32 %v5320, 4294901760
        %5322 = vmatpush.msra.mxu0 %v5321
        %v5323 = vand.u32 %v400, 4294901760
        %v5324 = vsub.f32 %v400, %v5323
        %v5325 = vand.u32 %v5324, 4294901760
        %v5326 = vsub.f32 %v5324, %v5325
        %v5327 = vand.u32 %v5326, 4294901760
        %5328 = vmatpush.msra.mxu0 %v5327
        %v5329 = vand.u32 %v399, 4294901760
        %v5330 = vsub.f32 %v399, %v5329
        %v5331 = vand.u32 %v5330, 4294901760
        %v5332 = vsub.f32 %v5330, %v5331
        %v5333 = vand.u32 %v5332, 4294901760
        %5334 = vmatpush.msra.mxu0 %v5333
        %v5335 = vand.u32 %v398, 4294901760
        %v5336 = vsub.f32 %v398, %v5335
        %v5337 = vand.u32 %v5336, 4294901760
        %v5338 = vsub.f32 %v5336, %v5337
        %v5339 = vand.u32 %v5338, 4294901760
        %5340 = vmatpush.msra.mxu0 %v5339
        %v5341 = vand.u32 %v172, 4294901760
        %5342 = vmatmul.f32.gmra.mxu0 %v5341
        %v5343 = vpop.f32.mrf.mxu0
        %v5344 = vadd.f32 %v5243, %v5343
        %5345 = vdwg.mxu0
        %v5346 = vand.u32 %v413, 4294901760
        %v5347 = vsub.f32 %v413, %v5346
        %5348 = vmatpush.msra.mxu0 %v5347
        %v5349 = vand.u32 %v412, 4294901760
        %v5350 = vsub.f32 %v412, %v5349
        %5351 = vmatpush.msra.mxu0 %v5350
        %v5352 = vand.u32 %v411, 4294901760
        %v5353 = vsub.f32 %v411, %v5352
        %5354 = vmatpush.msra.mxu0 %v5353
        %v5355 = vand.u32 %v410, 4294901760
        %v5356 = vsub.f32 %v410, %v5355
        %5357 = vmatpush.msra.mxu0 %v5356
        %v5358 = vand.u32 %v409, 4294901760
        %v5359 = vsub.f32 %v409, %v5358
        %5360 = vmatpush.msra.mxu0 %v5359
        %v5361 = vand.u32 %v408, 4294901760
        %v5362 = vsub.f32 %v408, %v5361
        %5363 = vmatpush.msra.mxu0 %v5362
        %v5364 = vand.u32 %v407, 4294901760
        %v5365 = vsub.f32 %v407, %v5364
        %5366 = vmatpush.msra.mxu0 %v5365
        %v5367 = vand.u32 %v406, 4294901760
        %v5368 = vsub.f32 %v406, %v5367
        %5369 = vmatpush.msra.mxu0 %v5368
        %v5370 = vand.u32 %v405, 4294901760
        %v5371 = vsub.f32 %v405, %v5370
        %5372 = vmatpush.msra.mxu0 %v5371
        %v5373 = vand.u32 %v404, 4294901760
        %v5374 = vsub.f32 %v404, %v5373
        %5375 = vmatpush.msra.mxu0 %v5374
        %v5376 = vand.u32 %v403, 4294901760
        %v5377 = vsub.f32 %v403, %v5376
        %5378 = vmatpush.msra.mxu0 %v5377
        %v5379 = vand.u32 %v402, 4294901760
        %v5380 = vsub.f32 %v402, %v5379
        %5381 = vmatpush.msra.mxu0 %v5380
        %v5382 = vand.u32 %v401, 4294901760
        %v5383 = vsub.f32 %v401, %v5382
        %5384 = vmatpush.msra.mxu0 %v5383
        %v5385 = vand.u32 %v400, 4294901760
        %v5386 = vsub.f32 %v400, %v5385
        %5387 = vmatpush.msra.mxu0 %v5386
        %v5388 = vand.u32 %v399, 4294901760
        %v5389 = vsub.f32 %v399, %v5388
        %5390 = vmatpush.msra.mxu0 %v5389
        %v5391 = vand.u32 %v398, 4294901760
        %v5392 = vsub.f32 %v398, %v5391
        %5393 = vmatpush.msra.mxu0 %v5392
        %v5394 = vand.u32 %v172, 4294901760
        %v5395 = vsub.f32 %v172, %v5394
        %5396 = vmatmul.f32.gmra.mxu0 %v5395
        %v5397 = vpop.f32.mrf.mxu0
        %v5398 = vadd.f32 %v5344, %v5397
        %5399 = vdwg.mxu0
        %v5400 = vand.u32 %v413, 4294901760
        %5401 = vmatpush.msra.mxu0 %v5400
        %v5402 = vand.u32 %v412, 4294901760
        %5403 = vmatpush.msra.mxu0 %v5402
        %v5404 = vand.u32 %v411, 4294901760
        %5405 = vmatpush.msra.mxu0 %v5404
        %v5406 = vand.u32 %v410, 4294901760
        %5407 = vmatpush.msra.mxu0 %v5406
        %v5408 = vand.u32 %v409, 4294901760
        %5409 = vmatpush.msra.mxu0 %v5408
        %v5410 = vand.u32 %v408, 4294901760
        %5411 = vmatpush.msra.mxu0 %v5410
        %v5412 = vand.u32 %v407, 4294901760
        %5413 = vmatpush.msra.mxu0 %v5412
        %v5414 = vand.u32 %v406, 4294901760
        %5415 = vmatpush.msra.mxu0 %v5414
        %v5416 = vand.u32 %v405, 4294901760
        %5417 = vmatpush.msra.mxu0 %v5416
        %v5418 = vand.u32 %v404, 4294901760
        %5419 = vmatpush.msra.mxu0 %v5418
        %v5420 = vand.u32 %v403, 4294901760
        %5421 = vmatpush.msra.mxu0 %v5420
        %v5422 = vand.u32 %v402, 4294901760
        %5423 = vmatpush.msra.mxu0 %v5422
        %v5424 = vand.u32 %v401, 4294901760
        %5425 = vmatpush.msra.mxu0 %v5424
        %v5426 = vand.u32 %v400, 4294901760
        %5427 = vmatpush.msra.mxu0 %v5426
        %v5428 = vand.u32 %v399, 4294901760
        %5429 = vmatpush.msra.mxu0 %v5428
        %v5430 = vand.u32 %v398, 4294901760
        %5431 = vmatpush.msra.mxu0 %v5430
        %v5432 = vand.u32 %v172, 4294901760
        %v5433 = vsub.f32 %v172, %v5432
        %v5434 = vand.u32 %v5433, 4294901760
        %5435 = vmatmul.f32.gmra.mxu0 %v5434
        %v5436 = vpop.f32.mrf.mxu0
        %v5437 = vadd.f32 %v5398, %v5436
        %5438 = vdwg.mxu0
        %v5439 = vand.u32 %v413, 4294901760
        %v5440 = vsub.f32 %v413, %v5439
        %v5441 = vand.u32 %v5440, 4294901760
        %5442 = vmatpush.msra.mxu0 %v5441
        %v5443 = vand.u32 %v412, 4294901760
        %v5444 = vsub.f32 %v412, %v5443
        %v5445 = vand.u32 %v5444, 4294901760
        %5446 = vmatpush.msra.mxu0 %v5445
        %v5447 = vand.u32 %v411, 4294901760
        %v5448 = vsub.f32 %v411, %v5447
        %v5449 = vand.u32 %v5448, 4294901760
        %5450 = vmatpush.msra.mxu0 %v5449
        %v5451 = vand.u32 %v410, 4294901760
        %v5452 = vsub.f32 %v410, %v5451
        %v5453 = vand.u32 %v5452, 4294901760
        %5454 = vmatpush.msra.mxu0 %v5453
        %v5455 = vand.u32 %v409, 4294901760
        %v5456 = vsub.f32 %v409, %v5455
        %v5457 = vand.u32 %v5456, 4294901760
        %5458 = vmatpush.msra.mxu0 %v5457
        %v5459 = vand.u32 %v408, 4294901760
        %v5460 = vsub.f32 %v408, %v5459
        %v5461 = vand.u32 %v5460, 4294901760
        %5462 = vmatpush.msra.mxu0 %v5461
        %v5463 = vand.u32 %v407, 4294901760
        %v5464 = vsub.f32 %v407, %v5463
        %v5465 = vand.u32 %v5464, 4294901760
        %5466 = vmatpush.msra.mxu0 %v5465
        %v5467 = vand.u32 %v406, 4294901760
        %v5468 = vsub.f32 %v406, %v5467
        %v5469 = vand.u32 %v5468, 4294901760
        %5470 = vmatpush.msra.mxu0 %v5469
        %v5471 = vand.u32 %v405, 4294901760
        %v5472 = vsub.f32 %v405, %v5471
        %v5473 = vand.u32 %v5472, 4294901760
        %5474 = vmatpush.msra.mxu0 %v5473
        %v5475 = vand.u32 %v404, 4294901760
        %v5476 = vsub.f32 %v404, %v5475
        %v5477 = vand.u32 %v5476, 4294901760
        %5478 = vmatpush.msra.mxu0 %v5477
        %v5479 = vand.u32 %v403, 4294901760
        %v5480 = vsub.f32 %v403, %v5479
        %v5481 = vand.u32 %v5480, 4294901760
        %5482 = vmatpush.msra.mxu0 %v5481
        %v5483 = vand.u32 %v402, 4294901760
        %v5484 = vsub.f32 %v402, %v5483
        %v5485 = vand.u32 %v5484, 4294901760
        %5486 = vmatpush.msra.mxu0 %v5485
        %v5487 = vand.u32 %v401, 4294901760
        %v5488 = vsub.f32 %v401, %v5487
        %v5489 = vand.u32 %v5488, 4294901760
        %5490 = vmatpush.msra.mxu0 %v5489
        %v5491 = vand.u32 %v400, 4294901760
        %v5492 = vsub.f32 %v400, %v5491
        %v5493 = vand.u32 %v5492, 4294901760
        %5494 = vmatpush.msra.mxu0 %v5493
        %v5495 = vand.u32 %v399, 4294901760
        %v5496 = vsub.f32 %v399, %v5495
        %v5497 = vand.u32 %v5496, 4294901760
        %5498 = vmatpush.msra.mxu0 %v5497
        %v5499 = vand.u32 %v398, 4294901760
        %v5500 = vsub.f32 %v398, %v5499
        %v5501 = vand.u32 %v5500, 4294901760
        %5502 = vmatpush.msra.mxu0 %v5501
        %v5503 = vand.u32 %v172, 4294901760
        %5504 = vmatmul.f32.gmra.mxu0 %v5503
        %v5505 = vpop.f32.mrf.mxu0
        %v5506 = vadd.f32 %v5437, %v5505
        %5507 = vdwg.mxu0
        %v5508 = vand.u32 %v413, 4294901760
        %5509 = vmatpush.msra.mxu0 %v5508
        %v5510 = vand.u32 %v412, 4294901760
        %5511 = vmatpush.msra.mxu0 %v5510
        %v5512 = vand.u32 %v411, 4294901760
        %5513 = vmatpush.msra.mxu0 %v5512
        %v5514 = vand.u32 %v410, 4294901760
        %5515 = vmatpush.msra.mxu0 %v5514
        %v5516 = vand.u32 %v409, 4294901760
        %5517 = vmatpush.msra.mxu0 %v5516
        %v5518 = vand.u32 %v408, 4294901760
        %5519 = vmatpush.msra.mxu0 %v5518
        %v5520 = vand.u32 %v407, 4294901760
        %5521 = vmatpush.msra.mxu0 %v5520
        %v5522 = vand.u32 %v406, 4294901760
        %5523 = vmatpush.msra.mxu0 %v5522
        %v5524 = vand.u32 %v405, 4294901760
        %5525 = vmatpush.msra.mxu0 %v5524
        %v5526 = vand.u32 %v404, 4294901760
        %5527 = vmatpush.msra.mxu0 %v5526
        %v5528 = vand.u32 %v403, 4294901760
        %5529 = vmatpush.msra.mxu0 %v5528
        %v5530 = vand.u32 %v402, 4294901760
        %5531 = vmatpush.msra.mxu0 %v5530
        %v5532 = vand.u32 %v401, 4294901760
        %5533 = vmatpush.msra.mxu0 %v5532
        %v5534 = vand.u32 %v400, 4294901760
        %5535 = vmatpush.msra.mxu0 %v5534
        %v5536 = vand.u32 %v399, 4294901760
        %5537 = vmatpush.msra.mxu0 %v5536
        %v5538 = vand.u32 %v398, 4294901760
        %5539 = vmatpush.msra.mxu0 %v5538
        %v5540 = vand.u32 %v172, 4294901760
        %5541 = vmatmul.f32.gmra.mxu0 %v5540
        %v5542 = vpop.f32.mrf.mxu0
        %v5543 = vadd.f32 %v5506, %v5542
        %5544 = vdwg.mxu0
        %v5545 = vand.u32 %v429, 4294901760
        %5546 = vmatpush.msra.mxu0 %v5545
        %v5547 = vand.u32 %v428, 4294901760
        %5548 = vmatpush.msra.mxu0 %v5547
        %v5549 = vand.u32 %v427, 4294901760
        %5550 = vmatpush.msra.mxu0 %v5549
        %v5551 = vand.u32 %v426, 4294901760
        %5552 = vmatpush.msra.mxu0 %v5551
        %v5553 = vand.u32 %v425, 4294901760
        %5554 = vmatpush.msra.mxu0 %v5553
        %v5555 = vand.u32 %v424, 4294901760
        %5556 = vmatpush.msra.mxu0 %v5555
        %v5557 = vand.u32 %v423, 4294901760
        %5558 = vmatpush.msra.mxu0 %v5557
        %v5559 = vand.u32 %v422, 4294901760
        %5560 = vmatpush.msra.mxu0 %v5559
        %v5561 = vand.u32 %v421, 4294901760
        %5562 = vmatpush.msra.mxu0 %v5561
        %v5563 = vand.u32 %v420, 4294901760
        %5564 = vmatpush.msra.mxu0 %v5563
        %v5565 = vand.u32 %v419, 4294901760
        %5566 = vmatpush.msra.mxu0 %v5565
        %v5567 = vand.u32 %v418, 4294901760
        %5568 = vmatpush.msra.mxu0 %v5567
        %v5569 = vand.u32 %v417, 4294901760
        %5570 = vmatpush.msra.mxu0 %v5569
        %v5571 = vand.u32 %v416, 4294901760
        %5572 = vmatpush.msra.mxu0 %v5571
        %v5573 = vand.u32 %v415, 4294901760
        %5574 = vmatpush.msra.mxu0 %v5573
        %v5575 = vand.u32 %v414, 4294901760
        %5576 = vmatpush.msra.mxu0 %v5575
        %v5577 = vand.u32 %v173, 4294901760
        %v5578 = vsub.f32 %v173, %v5577
        %v5579 = vand.u32 %v5578, 4294901760
        %v5580 = vsub.f32 %v5578, %v5579
        %v5581 = vand.u32 %v5580, 4294901760
        %5582 = vmatmul.f32.gmra.mxu0 %v5581
        %v5583 = vpop.f32.mrf.mxu0
        %v5584 = vadd.f32 %v5543, %v5583
        %5585 = vdwg.mxu0
        %v5586 = vand.u32 %v429, 4294901760
        %v5587 = vsub.f32 %v429, %v5586
        %v5588 = vand.u32 %v5587, 4294901760
        %v5589 = vsub.f32 %v5587, %v5588
        %v5590 = vand.u32 %v5589, 4294901760
        %5591 = vmatpush.msra.mxu0 %v5590
        %v5592 = vand.u32 %v428, 4294901760
        %v5593 = vsub.f32 %v428, %v5592
        %v5594 = vand.u32 %v5593, 4294901760
        %v5595 = vsub.f32 %v5593, %v5594
        %v5596 = vand.u32 %v5595, 4294901760
        %5597 = vmatpush.msra.mxu0 %v5596
        %v5598 = vand.u32 %v427, 4294901760
        %v5599 = vsub.f32 %v427, %v5598
        %v5600 = vand.u32 %v5599, 4294901760
        %v5601 = vsub.f32 %v5599, %v5600
        %v5602 = vand.u32 %v5601, 4294901760
        %5603 = vmatpush.msra.mxu0 %v5602
        %v5604 = vand.u32 %v426, 4294901760
        %v5605 = vsub.f32 %v426, %v5604
        %v5606 = vand.u32 %v5605, 4294901760
        %v5607 = vsub.f32 %v5605, %v5606
        %v5608 = vand.u32 %v5607, 4294901760
        %5609 = vmatpush.msra.mxu0 %v5608
        %v5610 = vand.u32 %v425, 4294901760
        %v5611 = vsub.f32 %v425, %v5610
        %v5612 = vand.u32 %v5611, 4294901760
        %v5613 = vsub.f32 %v5611, %v5612
        %v5614 = vand.u32 %v5613, 4294901760
        %5615 = vmatpush.msra.mxu0 %v5614
        %v5616 = vand.u32 %v424, 4294901760
        %v5617 = vsub.f32 %v424, %v5616
        %v5618 = vand.u32 %v5617, 4294901760
        %v5619 = vsub.f32 %v5617, %v5618
        %v5620 = vand.u32 %v5619, 4294901760
        %5621 = vmatpush.msra.mxu0 %v5620
        %v5622 = vand.u32 %v423, 4294901760
        %v5623 = vsub.f32 %v423, %v5622
        %v5624 = vand.u32 %v5623, 4294901760
        %v5625 = vsub.f32 %v5623, %v5624
        %v5626 = vand.u32 %v5625, 4294901760
        %5627 = vmatpush.msra.mxu0 %v5626
        %v5628 = vand.u32 %v422, 4294901760
        %v5629 = vsub.f32 %v422, %v5628
        %v5630 = vand.u32 %v5629, 4294901760
        %v5631 = vsub.f32 %v5629, %v5630
        %v5632 = vand.u32 %v5631, 4294901760
        %5633 = vmatpush.msra.mxu0 %v5632
        %v5634 = vand.u32 %v421, 4294901760
        %v5635 = vsub.f32 %v421, %v5634
        %v5636 = vand.u32 %v5635, 4294901760
        %v5637 = vsub.f32 %v5635, %v5636
        %v5638 = vand.u32 %v5637, 4294901760
        %5639 = vmatpush.msra.mxu0 %v5638
        %v5640 = vand.u32 %v420, 4294901760
        %v5641 = vsub.f32 %v420, %v5640
        %v5642 = vand.u32 %v5641, 4294901760
        %v5643 = vsub.f32 %v5641, %v5642
        %v5644 = vand.u32 %v5643, 4294901760
        %5645 = vmatpush.msra.mxu0 %v5644
        %v5646 = vand.u32 %v419, 4294901760
        %v5647 = vsub.f32 %v419, %v5646
        %v5648 = vand.u32 %v5647, 4294901760
        %v5649 = vsub.f32 %v5647, %v5648
        %v5650 = vand.u32 %v5649, 4294901760
        %5651 = vmatpush.msra.mxu0 %v5650
        %v5652 = vand.u32 %v418, 4294901760
        %v5653 = vsub.f32 %v418, %v5652
        %v5654 = vand.u32 %v5653, 4294901760
        %v5655 = vsub.f32 %v5653, %v5654
        %v5656 = vand.u32 %v5655, 4294901760
        %5657 = vmatpush.msra.mxu0 %v5656
        %v5658 = vand.u32 %v417, 4294901760
        %v5659 = vsub.f32 %v417, %v5658
        %v5660 = vand.u32 %v5659, 4294901760
        %v5661 = vsub.f32 %v5659, %v5660
        %v5662 = vand.u32 %v5661, 4294901760
        %5663 = vmatpush.msra.mxu0 %v5662
        %v5664 = vand.u32 %v416, 4294901760
        %v5665 = vsub.f32 %v416, %v5664
        %v5666 = vand.u32 %v5665, 4294901760
        %v5667 = vsub.f32 %v5665, %v5666
        %v5668 = vand.u32 %v5667, 4294901760
        %5669 = vmatpush.msra.mxu0 %v5668
        %v5670 = vand.u32 %v415, 4294901760
        %v5671 = vsub.f32 %v415, %v5670
        %v5672 = vand.u32 %v5671, 4294901760
        %v5673 = vsub.f32 %v5671, %v5672
        %v5674 = vand.u32 %v5673, 4294901760
        %5675 = vmatpush.msra.mxu0 %v5674
        %v5676 = vand.u32 %v414, 4294901760
        %v5677 = vsub.f32 %v414, %v5676
        %v5678 = vand.u32 %v5677, 4294901760
        %v5679 = vsub.f32 %v5677, %v5678
        %v5680 = vand.u32 %v5679, 4294901760
        %5681 = vmatpush.msra.mxu0 %v5680
        %v5682 = vand.u32 %v173, 4294901760
        %5683 = vmatmul.f32.gmra.mxu0 %v5682
        %v5684 = vpop.f32.mrf.mxu0
        %v5685 = vadd.f32 %v5584, %v5684
        %5686 = vdwg.mxu0
        %v5687 = vand.u32 %v429, 4294901760
        %v5688 = vsub.f32 %v429, %v5687
        %5689 = vmatpush.msra.mxu0 %v5688
        %v5690 = vand.u32 %v428, 4294901760
        %v5691 = vsub.f32 %v428, %v5690
        %5692 = vmatpush.msra.mxu0 %v5691
        %v5693 = vand.u32 %v427, 4294901760
        %v5694 = vsub.f32 %v427, %v5693
        %5695 = vmatpush.msra.mxu0 %v5694
        %v5696 = vand.u32 %v426, 4294901760
        %v5697 = vsub.f32 %v426, %v5696
        %5698 = vmatpush.msra.mxu0 %v5697
        %v5699 = vand.u32 %v425, 4294901760
        %v5700 = vsub.f32 %v425, %v5699
        %5701 = vmatpush.msra.mxu0 %v5700
        %v5702 = vand.u32 %v424, 4294901760
        %v5703 = vsub.f32 %v424, %v5702
        %5704 = vmatpush.msra.mxu0 %v5703
        %v5705 = vand.u32 %v423, 4294901760
        %v5706 = vsub.f32 %v423, %v5705
        %5707 = vmatpush.msra.mxu0 %v5706
        %v5708 = vand.u32 %v422, 4294901760
        %v5709 = vsub.f32 %v422, %v5708
        %5710 = vmatpush.msra.mxu0 %v5709
        %v5711 = vand.u32 %v421, 4294901760
        %v5712 = vsub.f32 %v421, %v5711
        %5713 = vmatpush.msra.mxu0 %v5712
        %v5714 = vand.u32 %v420, 4294901760
        %v5715 = vsub.f32 %v420, %v5714
        %5716 = vmatpush.msra.mxu0 %v5715
        %v5717 = vand.u32 %v419, 4294901760
        %v5718 = vsub.f32 %v419, %v5717
        %5719 = vmatpush.msra.mxu0 %v5718
        %v5720 = vand.u32 %v418, 4294901760
        %v5721 = vsub.f32 %v418, %v5720
        %5722 = vmatpush.msra.mxu0 %v5721
        %v5723 = vand.u32 %v417, 4294901760
        %v5724 = vsub.f32 %v417, %v5723
        %5725 = vmatpush.msra.mxu0 %v5724
        %v5726 = vand.u32 %v416, 4294901760
        %v5727 = vsub.f32 %v416, %v5726
        %5728 = vmatpush.msra.mxu0 %v5727
        %v5729 = vand.u32 %v415, 4294901760
        %v5730 = vsub.f32 %v415, %v5729
        %5731 = vmatpush.msra.mxu0 %v5730
        %v5732 = vand.u32 %v414, 4294901760
        %v5733 = vsub.f32 %v414, %v5732
        %5734 = vmatpush.msra.mxu0 %v5733
        %v5735 = vand.u32 %v173, 4294901760
        %v5736 = vsub.f32 %v173, %v5735
        %5737 = vmatmul.f32.gmra.mxu0 %v5736
        %v5738 = vpop.f32.mrf.mxu0
        %v5739 = vadd.f32 %v5685, %v5738
        %5740 = vdwg.mxu0
        %v5741 = vand.u32 %v429, 4294901760
        %5742 = vmatpush.msra.mxu0 %v5741
        %v5743 = vand.u32 %v428, 4294901760
        %5744 = vmatpush.msra.mxu0 %v5743
        %v5745 = vand.u32 %v427, 4294901760
        %5746 = vmatpush.msra.mxu0 %v5745
        %v5747 = vand.u32 %v426, 4294901760
        %5748 = vmatpush.msra.mxu0 %v5747
        %v5749 = vand.u32 %v425, 4294901760
        %5750 = vmatpush.msra.mxu0 %v5749
        %v5751 = vand.u32 %v424, 4294901760
        %5752 = vmatpush.msra.mxu0 %v5751
        %v5753 = vand.u32 %v423, 4294901760
        %5754 = vmatpush.msra.mxu0 %v5753
        %v5755 = vand.u32 %v422, 4294901760
        %5756 = vmatpush.msra.mxu0 %v5755
        %v5757 = vand.u32 %v421, 4294901760
        %5758 = vmatpush.msra.mxu0 %v5757
        %v5759 = vand.u32 %v420, 4294901760
        %5760 = vmatpush.msra.mxu0 %v5759
        %v5761 = vand.u32 %v419, 4294901760
        %5762 = vmatpush.msra.mxu0 %v5761
        %v5763 = vand.u32 %v418, 4294901760
        %5764 = vmatpush.msra.mxu0 %v5763
        %v5765 = vand.u32 %v417, 4294901760
        %5766 = vmatpush.msra.mxu0 %v5765
        %v5767 = vand.u32 %v416, 4294901760
        %5768 = vmatpush.msra.mxu0 %v5767
        %v5769 = vand.u32 %v415, 4294901760
        %5770 = vmatpush.msra.mxu0 %v5769
        %v5771 = vand.u32 %v414, 4294901760
        %5772 = vmatpush.msra.mxu0 %v5771
        %v5773 = vand.u32 %v173, 4294901760
        %v5774 = vsub.f32 %v173, %v5773
        %v5775 = vand.u32 %v5774, 4294901760
        %5776 = vmatmul.f32.gmra.mxu0 %v5775
        %v5777 = vpop.f32.mrf.mxu0
        %v5778 = vadd.f32 %v5739, %v5777
        %5779 = vdwg.mxu0
        %v5780 = vand.u32 %v429, 4294901760
        %v5781 = vsub.f32 %v429, %v5780
        %v5782 = vand.u32 %v5781, 4294901760
        %5783 = vmatpush.msra.mxu0 %v5782
        %v5784 = vand.u32 %v428, 4294901760
        %v5785 = vsub.f32 %v428, %v5784
        %v5786 = vand.u32 %v5785, 4294901760
        %5787 = vmatpush.msra.mxu0 %v5786
        %v5788 = vand.u32 %v427, 4294901760
        %v5789 = vsub.f32 %v427, %v5788
        %v5790 = vand.u32 %v5789, 4294901760
        %5791 = vmatpush.msra.mxu0 %v5790
        %v5792 = vand.u32 %v426, 4294901760
        %v5793 = vsub.f32 %v426, %v5792
        %v5794 = vand.u32 %v5793, 4294901760
        %5795 = vmatpush.msra.mxu0 %v5794
        %v5796 = vand.u32 %v425, 4294901760
        %v5797 = vsub.f32 %v425, %v5796
        %v5798 = vand.u32 %v5797, 4294901760
        %5799 = vmatpush.msra.mxu0 %v5798
        %v5800 = vand.u32 %v424, 4294901760
        %v5801 = vsub.f32 %v424, %v5800
        %v5802 = vand.u32 %v5801, 4294901760
        %5803 = vmatpush.msra.mxu0 %v5802
        %v5804 = vand.u32 %v423, 4294901760
        %v5805 = vsub.f32 %v423, %v5804
        %v5806 = vand.u32 %v5805, 4294901760
        %5807 = vmatpush.msra.mxu0 %v5806
        %v5808 = vand.u32 %v422, 4294901760
        %v5809 = vsub.f32 %v422, %v5808
        %v5810 = vand.u32 %v5809, 4294901760
        %5811 = vmatpush.msra.mxu0 %v5810
        %v5812 = vand.u32 %v421, 4294901760
        %v5813 = vsub.f32 %v421, %v5812
        %v5814 = vand.u32 %v5813, 4294901760
        %5815 = vmatpush.msra.mxu0 %v5814
        %v5816 = vand.u32 %v420, 4294901760
        %v5817 = vsub.f32 %v420, %v5816
        %v5818 = vand.u32 %v5817, 4294901760
        %5819 = vmatpush.msra.mxu0 %v5818
        %v5820 = vand.u32 %v419, 4294901760
        %v5821 = vsub.f32 %v419, %v5820
        %v5822 = vand.u32 %v5821, 4294901760
        %5823 = vmatpush.msra.mxu0 %v5822
        %v5824 = vand.u32 %v418, 4294901760
        %v5825 = vsub.f32 %v418, %v5824
        %v5826 = vand.u32 %v5825, 4294901760
        %5827 = vmatpush.msra.mxu0 %v5826
        %v5828 = vand.u32 %v417, 4294901760
        %v5829 = vsub.f32 %v417, %v5828
        %v5830 = vand.u32 %v5829, 4294901760
        %5831 = vmatpush.msra.mxu0 %v5830
        %v5832 = vand.u32 %v416, 4294901760
        %v5833 = vsub.f32 %v416, %v5832
        %v5834 = vand.u32 %v5833, 4294901760
        %5835 = vmatpush.msra.mxu0 %v5834
        %v5836 = vand.u32 %v415, 4294901760
        %v5837 = vsub.f32 %v415, %v5836
        %v5838 = vand.u32 %v5837, 4294901760
        %5839 = vmatpush.msra.mxu0 %v5838
        %v5840 = vand.u32 %v414, 4294901760
        %v5841 = vsub.f32 %v414, %v5840
        %v5842 = vand.u32 %v5841, 4294901760
        %5843 = vmatpush.msra.mxu0 %v5842
        %v5844 = vand.u32 %v173, 4294901760
        %5845 = vmatmul.f32.gmra.mxu0 %v5844
        %v5846 = vpop.f32.mrf.mxu0
        %v5847 = vadd.f32 %v5778, %v5846
        %5848 = vdwg.mxu0
        %v5849 = vand.u32 %v429, 4294901760
        %5850 = vmatpush.msra.mxu0 %v5849
        %v5851 = vand.u32 %v428, 4294901760
        %5852 = vmatpush.msra.mxu0 %v5851
        %v5853 = vand.u32 %v427, 4294901760
        %5854 = vmatpush.msra.mxu0 %v5853
        %v5855 = vand.u32 %v426, 4294901760
        %5856 = vmatpush.msra.mxu0 %v5855
        %v5857 = vand.u32 %v425, 4294901760
        %5858 = vmatpush.msra.mxu0 %v5857
        %v5859 = vand.u32 %v424, 4294901760
        %5860 = vmatpush.msra.mxu0 %v5859
        %v5861 = vand.u32 %v423, 4294901760
        %5862 = vmatpush.msra.mxu0 %v5861
        %v5863 = vand.u32 %v422, 4294901760
        %5864 = vmatpush.msra.mxu0 %v5863
        %v5865 = vand.u32 %v421, 4294901760
        %5866 = vmatpush.msra.mxu0 %v5865
        %v5867 = vand.u32 %v420, 4294901760
        %5868 = vmatpush.msra.mxu0 %v5867
        %v5869 = vand.u32 %v419, 4294901760
        %5870 = vmatpush.msra.mxu0 %v5869
        %v5871 = vand.u32 %v418, 4294901760
        %5872 = vmatpush.msra.mxu0 %v5871
        %v5873 = vand.u32 %v417, 4294901760
        %5874 = vmatpush.msra.mxu0 %v5873
        %v5875 = vand.u32 %v416, 4294901760
        %5876 = vmatpush.msra.mxu0 %v5875
        %v5877 = vand.u32 %v415, 4294901760
        %5878 = vmatpush.msra.mxu0 %v5877
        %v5879 = vand.u32 %v414, 4294901760
        %5880 = vmatpush.msra.mxu0 %v5879
        %v5881 = vand.u32 %v173, 4294901760
        %5882 = vmatmul.f32.gmra.mxu0 %v5881
        %v5883 = vpop.f32.mrf.mxu0
        %v5884 = vadd.f32 %v5847, %v5883
        %5885 = vdwg.mxu0
        %v5886 = vmax.f32 %v5884, 0.0001
        %v5887 = vmin.f32 %v5886, 1.0
        %v5888 = vlog2.pop %v5887
        %v5889 = vmul.f32 %v5888, 0.6931472
        %v5890 = vmul.f32 %v5889, -0.10857362
        %v5891 = vsub.f32 1.0, %v5890
        %vm5892 = vcmask 261120
        %5893 = vst.msk [vmem:[%s136] sm:$0xff] %vm5892, %v5891
        %s5894 = sand.u32 %s71, 1
        %s5895 = scalar_lea.sflag [#allocation3], %s5894
        %s5896 = sand.u32 %s71, 1
        %s5897 = smul.addr %s5896, 8
        %s5898 = scalar_lea.vmem [#allocation2], %s5897
        // Predicated region
        $region29: #{tpu_custom_call.1} parent=27 // pred_check
          %p5899 = pneg %p81
        $region30: #{tpu_custom_call.1} parent=27 // pred_check_branch
          %5901 = sbr.rel (%p5899) target = $region32
        $region31: #{tpu_custom_call.1} parent=27 // pred_region
          %5903 = vsyncadd %s5895, 0
          %s5904 = smul.addr %s16, 8
          %s5905 = scalar_lea.hbm %s2, %s5904
          %s5907 = sshll.u32 %s5898, 4
          %s5908 = int_to_ptr.vmem [resolvable:$true] %s5907
          %s5909 = sshll.u32 %s5905, 4
          %s5910 = int_to_ptr.hbm [resolvable:$true] %s5909
          %5912 = dma.vmem_to_hbm [thread:$0]  %s5908, 128, %s5910, %s5895
        $region32: #{tpu_custom_call.1} parent=27 // pred_fallthru
          _
      $region28: #{tpu_custom_call.1} parent=5 // pred_fallthru
        _
      %p5913 = scmp.le.s32.totalorder 2, %s11
      // Predicated region
      $region33: #{tpu_custom_call.1} parent=5 // pred_check
        %p5914 = pneg %p5913
      $region34: #{tpu_custom_call.1} parent=5 // pred_check_branch
        %5916 = sbr.rel (%p5914) target = $region36
      $region35: #{tpu_custom_call.1} parent=5 // pred_region
        %s5917 = ssub.s32 %s11, 2
        // Predicated region
        $region37: #{tpu_custom_call.1} parent=35 // pred_check
          %p5918 = pneg %p87
        $region38: #{tpu_custom_call.1} parent=35 // pred_check_branch
          %5920 = sbr.rel (%p5918) target = $region40
        $region39: #{tpu_custom_call.1} parent=35 // pred_region
          %s5921 = sand.u32 %s72, 1
          %s5922 = scalar_lea.sflag [#allocation3], %s5921
          %s5923 = sand.u32 %s72, 1
          %s5924 = smul.addr %s5923, 8
          %s5925 = scalar_lea.vmem [#allocation2], %s5924
          %5927 = dma.done %s5922, 128
        $region40: #{tpu_custom_call.1} parent=35 // pred_fallthru
          _
      $region36: #{tpu_custom_call.1} parent=5 // pred_fallthru
        _
    $region6: #{tpu_custom_call.1} parent=1 // loop_footer
      %s15 = sadd.s32 1, %s11
    $region7: #{tpu_custom_call.1} parent=1 // loop_footer_branch
      %10 = sbr.rel target = $region3
    $region8: #{tpu_custom_call.1} parent=1 // loop_exit
      _
    %5928 = vsyncpa [#allocation3], 1
    %s5929 = scalar_lea.sflag [#allocation3], 1
    %5930 = vsyncpa %s5929, 1

</llo_original>
